<compile_context>
chip_gen: v6e
topology: v6e:2x2x1
jax: 0.10.0
libtpu: 0.0.40
codegen_flags: <defaults>
</compile_context>

<pallas_src>
import jax
import jax.numpy as jnp
import numpy as np
from jax.experimental import pallas as pl
from jax.experimental.pallas import tpu as pltpu


def _model_kernel(x_add_ref, x_row_ref, o_ref):
    """One (TN, TC, 3C) output tile; grid = (i over N tiles, j over C tiles).

      x_add_ref : (TN, TC)  = x2d[i*TN:(i+1)*TN, j*TC:(j+1)*TC]  (broadcast add)
      x_row_ref : (TC, C)   = x2d[j*TC:(j+1)*TC, :]              (tanh rows)
      o_ref     : (TN, TC, 3C)
    """
    C = x_row_ref.shape[1]

    # Build the tanh table for this C-tile.  Rebuilt every step (cheap EUP
    # work hidden under the store) so there is no cross-step dependency and
    # both grid axes can be 'parallel'.
    y1 = x_row_ref[...].astype(jnp.float32) * 2.0
    t1 = jnp.tanh(y1)          # (TC, C) -- cat copies 0 and 2
    t2 = jnp.tanh(y1 + 3.0)    # (TC, C) -- cat copy 1

    # out[i, j, k] = t[j, k] + x[i, j]
    xb = x_add_ref[...].astype(jnp.float32)[:, :, None]          # (TN, TC, 1)
    a1 = (t1[None, :, :] + xb).astype(o_ref.dtype)               # reused twice
    a2 = (t2[None, :, :] + xb).astype(o_ref.dtype)
    o_ref[:, :, 0:C] = a1
    o_ref[:, :, C:2 * C] = a2
    o_ref[:, :, 2 * C:3 * C] = a1


def _pick_tc(C):
    # TC is the lane dim of the 2-D x_add block and the sublane dim of the
    # output block: multiple of 128 when possible, else the full dim.
    return 128 if (C % 128 == 0) else C


def _pick_tn(N, row_bytes, per_buffer_bytes=6 << 20):
    """Rows per output tile: largest divisor of N fitting the VMEM budget.

    row_bytes = bytes of one output row-slab (TC * 3C * itemsize).
    TN is the leading dim of the 3-D output block (not (8,128)-constrained),
    but it is the sublane dim of the 2-D x_add block, so keep it a multiple
    of 8 unless it equals N.
    """
    cap = max(1, per_buffer_bytes // max(1, row_bytes))
    if N <= cap:
        return N
    for t in range(min(cap, N), 0, -1):          # largest fitting divisor, %8
        if N % t == 0 and t % 8 == 0:
            return t
    for t in range(8, N, 8):                     # smallest legal divisor
        if N % t == 0:
            return t
    # TODO(synk): odd N larger than the budget would need masked blocks.
    return N


def model_forward(x3d):
    """x3d: (N, C, 1) with N == C (the only regime where the PyTorch forward
    is well-defined). Returns (N, C, 3*C)."""
    N, C, L = x3d.shape
    assert L == 1 and N == C, "forward is only well-defined for (N, N, 1) inputs"
    x2d = jnp.reshape(x3d, (N, C))               # free reshape (contiguous)

    itemsize = jnp.dtype(x3d.dtype).itemsize
    TC = _pick_tc(C)
    row_bytes = TC * 3 * C * itemsize            # output bytes per TN row
    TN = _pick_tn(N, row_bytes)
    grid = (N // TN, C // TC)                    # (i tiles, j tiles)

    # VMEM: 2x out tile + 2x x_row + 2x x_add + f32 temporaries, plus margin.
    out_tile = TN * TC * 3 * C * itemsize
    row_tile = TC * C * itemsize
    add_tile = TN * TC * itemsize
    needed = 2 * (out_tile + row_tile + add_tile) + 2 * TC * C * 4 + (8 << 20)
    vmem_limit = max(32 << 20, min(needed, 64 << 20))

    out = pl.pallas_call(
        _model_kernel,
        out_shape=jax.ShapeDtypeStruct((N, C, 3 * C), x3d.dtype),
        grid=grid,
        in_specs=[
            pl.BlockSpec((TN, TC), lambda i, j: (i, j)),   # x slab for the add
            pl.BlockSpec((TC, C), lambda i, j: (j, 0)),    # x rows for the tanh table
        ],
        out_specs=pl.BlockSpec((TN, TC, 3 * C), lambda i, j: (i, j, 0)),
        compiler_params=pltpu.CompilerParams(
            dimension_semantics=("parallel", "parallel"),
            vmem_limit_bytes=vmem_limit,
        ),
    )(x2d, x2d)
    return out


def _reference(x3d):
    x2d = jnp.reshape(x3d, x3d.shape[:2])
    y1 = x2d * 2.0
    y2 = y1 + 3.0
    y3 = jnp.concatenate([y1, y2, y1], axis=1)   # (N, 3C)
    return jnp.tanh(y3) + x3d                    # broadcast -> (N, C, 3C)


if __name__ == "__main__":
    key = jax.random.PRNGKey(0)

    # Lane-dense, tiled case: (128, 128, 1) -> output (128, 128, 384),
    # grid (4, 1), 6 MiB output tiles, both axes parallel.
    x = jax.random.normal(key, (128, 128, 1), dtype=jnp.float32)
    out = jax.block_until_ready(model_forward(x))
    ref = _reference(x)
    assert out.shape == ref.shape == (128, 128, 384)
    np.testing.assert_allclose(np.asarray(out), np.asarray(ref),
                               rtol=1e-5, atol=1e-5)

    # Tiny full-block case: (8, 8, 1) -> (8, 8, 24), single grid step.
    x_small = jax.random.normal(jax.random.PRNGKey(0), (8, 8, 1),
                                dtype=jnp.float32)
    out_s = jax.block_until_ready(model_forward(x_small))
    np.testing.assert_allclose(np.asarray(out_s),
                               np.asarray(_reference(x_small)),
                               rtol=1e-5, atol=1e-5)

    print("KERNEL_OK")
</pallas_src>

<mosaic_0001>
module attributes {stable_mosaic.version = 11 : i64} {
  func.func @_model_kernel(%arg0: i32, %arg1: i32, %arg2: memref<32x128xf32, #tpu.memory_space<vmem>>, %arg3: memref<128x128xf32, #tpu.memory_space<vmem>>, %arg4: memref<32x128x384xf32, #tpu.memory_space<vmem>>) attributes {dimension_semantics = [#tpu.dimension_semantics<parallel>, #tpu.dimension_semantics<parallel>], iteration_bounds = array<i64: 4, 1>, scalar_prefetch = 0 : i64, scratch_operands = 0 : i64, tpu.core_type = #tpu.core_type<tc>, window_params = [{transform_indices = @transform_0, window_bounds = array<i64: 32, 128>}, {transform_indices = @transform_1, window_bounds = array<i64: 128, 128>}, {transform_indices = @transform_2, window_bounds = array<i64: 32, 128, 384>}]} {
    %c0 = arith.constant 0 : index
    %c0_0 = arith.constant 0 : index
    %0 = vector.load %arg3[%c0, %c0_0] : memref<128x128xf32, #tpu.memory_space<vmem>>, vector<128x128xf32>
    %cst = arith.constant 2.000000e+00 : f32
    %1 = vector.broadcast %cst : f32 to vector<128x128xf32>
    %2 = arith.mulf %0, %1 : vector<128x128xf32>
    %3 = math.tanh %2 : vector<128x128xf32>
    %cst_1 = arith.constant 3.000000e+00 : f32
    %4 = vector.broadcast %cst_1 : f32 to vector<128x128xf32>
    %5 = arith.addf %2, %4 : vector<128x128xf32>
    %6 = math.tanh %5 : vector<128x128xf32>
    %c0_2 = arith.constant 0 : index
    %c0_3 = arith.constant 0 : index
    %7 = vector.load %arg2[%c0_2, %c0_3] : memref<32x128xf32, #tpu.memory_space<vmem>>, vector<32x128xf32>
    %8 = vector.shape_cast %7 : vector<32x128xf32> to vector<32x128x1xf32>
    %9 = vector.shape_cast %3 : vector<128x128xf32> to vector<1x128x128xf32>
    %10 = vector.broadcast %9 : vector<1x128x128xf32> to vector<32x128x128xf32>
    %11 = vector.broadcast %8 : vector<32x128x1xf32> to vector<32x128x128xf32>
    %12 = arith.addf %10, %11 : vector<32x128x128xf32>
    %13 = vector.shape_cast %6 : vector<128x128xf32> to vector<1x128x128xf32>
    %14 = vector.broadcast %13 : vector<1x128x128xf32> to vector<32x128x128xf32>
    %15 = vector.broadcast %8 : vector<32x128x1xf32> to vector<32x128x128xf32>
    %16 = arith.addf %14, %15 : vector<32x128x128xf32>
    %c0_4 = arith.constant 0 : index
    %c0_5 = arith.constant 0 : index
    %c0_6 = arith.constant 0 : index
    %17 = vector.load %arg4[%c0_4, %c0_5, %c0_6] : memref<32x128x384xf32, #tpu.memory_space<vmem>>, vector<32x128x128xf32>
    tpu.vector_store %arg4[%c0_4, %c0_5, %c0_6], %12 {strides = array<i32>} : memref<32x128x384xf32, #tpu.memory_space<vmem>>, vector<32x128x128xf32>,
    %c0_7 = arith.constant 0 : index
    %c0_8 = arith.constant 0 : index
    %c128 = arith.constant 128 : index
    %18 = vector.load %arg4[%c0_7, %c0_8, %c128] : memref<32x128x384xf32, #tpu.memory_space<vmem>>, vector<32x128x128xf32>
    tpu.vector_store %arg4[%c0_7, %c0_8, %c128], %16 {strides = array<i32>} : memref<32x128x384xf32, #tpu.memory_space<vmem>>, vector<32x128x128xf32>,
    %c0_9 = arith.constant 0 : index
    %c0_10 = arith.constant 0 : index
    %c256 = arith.constant 256 : index
    %19 = vector.load %arg4[%c0_9, %c0_10, %c256] : memref<32x128x384xf32, #tpu.memory_space<vmem>>, vector<32x128x128xf32>
    tpu.vector_store %arg4[%c0_9, %c0_10, %c256], %12 {strides = array<i32>} : memref<32x128x384xf32, #tpu.memory_space<vmem>>, vector<32x128x128xf32>,
    return
  }
  func.func @transform_0(%arg0: i32, %arg1: i32) -> (i32, i32) {
    %c0_i32 = arith.constant 0 : i32
    return %arg0, %arg1 : i32, i32
  }
  func.func @transform_1(%arg0: i32, %arg1: i32) -> (i32, i32) {
    %c0_i32 = arith.constant 0 : i32
    %c0_i32_0 = arith.constant 0 : i32
    return %arg1, %c0_i32 : i32, i32
  }
  func.func @transform_2(%arg0: i32, %arg1: i32) -> (i32, i32, i32) {
    %c0_i32 = arith.constant 0 : i32
    %c0_i32_0 = arith.constant 0 : i32
    return %arg0, %arg1, %c0_i32 : i32, i32, i32
  }
}

</mosaic_0001>

<llo_original>
// kernel: tpu_custom_call.1
$region0: #{tpu_custom_call.1}
  #allocation0 [shape = 'u32[]', space=smem, size = 0x4, offset = 0x4, fixed_abs, tag = 'smem constant byte address 0x4 - core index']
  #allocation1 [shape = 'u32[144,128]{1,0:T(1,128)}', space=vmem, size = 0x12000, scoped, tag = 'internal scratch']
  %s0 = inlined_call_operand.hbm [shape: f32[128,128], index: 0, kind: input, shape index: {}]
  %s1 = inlined_call_operand.hbm [shape: f32[128,128], index: 1, kind: input, shape index: {}]
  %s2 = inlined_call_operand.hbm [shape: f32[128,128,384], index: 2, kind: output, shape index: {}]
  %s3 = sld [smem:[#allocation0]]
  $region49: #{tpu_custom_call.1} parent=0
    _
  %s5 = ssub.s32 1, %s3
  %s6 = scalar_select 0, %s5, %s3
  $region1: #{tpu_custom_call.1} parent=0
    #allocation2 [shape = 'u8[32768]{0}', space=vmem, size = 0x8000, scoped, tag = 'input window, operand 0']
    #allocation3 [shape = 's32[2]{0}', space=sflag, size = 0x8, scoped, tag = 'scoped memory for tpu_custom_call.1']
    #allocation4 [shape = 's32[2]{0}', space=sflag, size = 0x8, scoped, tag = 'scoped memory for tpu_custom_call.1']
    #allocation5 [shape = 'u8[65536]{0}', space=vmem, size = 0x10000, scoped, tag = 'input window, operand 1, single buffered']
    #allocation6 [shape = 's32[1]{0}', space=sflag, size = 0x4, scoped, tag = 'scoped memory for tpu_custom_call.1']
    #allocation7 [shape = 'u8[12582912]{0}', space=vmem, size = 0xc00000, scoped, tag = 'output window, operand 0']
    %7 = vsyncpa [#allocation3], 0
    %s8 = scalar_lea.sflag [#allocation3], 1
    %9 = vsyncpa %s8, 0
    %10 = vsyncpa [#allocation6], 0
    %11 = vsyncpa [#allocation4], 0
    %s12 = scalar_lea.sflag [#allocation4], 1
    %13 = vsyncpa %s12, 0
    loop: start=0, step=1, limit=6
    $region2: #{tpu_custom_call.1} parent=1 // loop_pre_header
      _
    $region3: #{tpu_custom_call.1} parent=1 // loop_header
      %s15 = sphi 0, %s19
      %p16 = scmp.ge.s32.totalorder %s15, 6
      %s22 = sphi 0, %s34
      %s23 = sphi 0, %s30
      %s24 = sphi 0, %s22
      %s25 = sphi 0, %s23
      %s26 = sphi 0, %s24
      %s27 = sphi 0, %s25
      %s39 = sphi 0, %s41
      %s42 = sphi 0, %s39
      %s43 = sphi 0, %s42
      %s59 = sphi 0, %s43
      %s65 = sphi 0, %s67
      %s68 = sphi 0, %s65
      %s69 = sphi 0, %s68
      %s85 = sphi 0, %s69
      %s93 = sphi 0, %s95
      %s96 = sphi 0, %s93
      %s97 = sphi 0, %s96
      %s113 = sphi 0, %s97
    $region4: #{tpu_custom_call.1} parent=1 // loop_header_branch
      %18 = sbr.rel (%p16) target = $region8
    $region5: #{tpu_custom_call.1} parent=1 // loop_body
      %s20 = ssub.s32 %s15, 1
      %s21 = ssub.s32 %s15, 2
      %s28 = sadd.s32 1, %s23
      %p29 = scmp.ge.s32.totalorder %s28, 1
      %s30 = scalar_select %p29, 0, %s28
      %s31 = sadd.s32 1, %s22
      %s32 = scalar_select %p29, %s31, %s22
      %p33 = scmp.ge.s32.totalorder %s32, 4
      %s34 = scalar_select %p33, 0, %s32
      %s35 = ssub.s32 %s22, %s34
      %s36 = ssub.s32 %s23, %s30
      %s37 = sor.u32 %s35, %s36
      %p38 = scmp.eq.s32.totalorder %s37, 0
      %s40 = sadd.s32 %s39, 1
      %s41 = scalar_select %p38, %s39, %s40
      %p44 = pneg %p38
      %p45 = scmp.eq.s32.totalorder %s15, 3
      %p46 = por %p44, %p45
      %p47 = scmp.ne.s32.totalorder %s39, %s42
      %p48 = scmp.eq.s32.totalorder %s15, 0
      %p49 = por %p47, %p48
      %p50 = scmp.ne.s32.totalorder %s39, %s42
      %p51 = scmp.eq.s32.totalorder %s20, 3
      %p52 = por %p50, %p51
      %p53 = scmp.ne.s32.totalorder %s42, %s43
      %p54 = scmp.eq.s32.totalorder %s20, 0
      %p55 = por %p53, %p54
      %p56 = scmp.ne.s32.totalorder %s42, %s43
      %p57 = scmp.eq.s32.totalorder %s21, 3
      %p58 = por %p56, %p57
      %p60 = scmp.ne.s32.totalorder %s43, %s59
      %p61 = scmp.eq.s32.totalorder %s21, 0
      %p62 = por %p60, %p61
      %s63 = ssub.s32 %s23, %s30
      %p64 = scmp.eq.s32.totalorder %s63, 0
      %s66 = sadd.s32 %s65, 1
      %s67 = scalar_select %p64, %s65, %s66
      %p70 = pneg %p64
      %p71 = scmp.eq.s32.totalorder %s15, 3
      %p72 = por %p70, %p71
      %p73 = scmp.ne.s32.totalorder %s65, %s68
      %p74 = scmp.eq.s32.totalorder %s15, 0
      %p75 = por %p73, %p74
      %p76 = scmp.ne.s32.totalorder %s65, %s68
      %p77 = scmp.eq.s32.totalorder %s20, 3
      %p78 = por %p76, %p77
      %p79 = scmp.ne.s32.totalorder %s68, %s69
      %p80 = scmp.eq.s32.totalorder %s20, 0
      %p81 = por %p79, %p80
      %p82 = scmp.ne.s32.totalorder %s68, %s69
      %p83 = scmp.eq.s32.totalorder %s21, 3
      %p84 = por %p82, %p83
      %p86 = scmp.ne.s32.totalorder %s69, %s85
      %p87 = scmp.eq.s32.totalorder %s21, 0
      %p88 = por %p86, %p87
      %s89 = ssub.s32 %s22, %s34
      %s90 = ssub.s32 %s23, %s30
      %s91 = sor.u32 %s89, %s90
      %p92 = scmp.eq.s32.totalorder %s91, 0
      %s94 = sadd.s32 %s93, 1
      %s95 = scalar_select %p92, %s93, %s94
      %p98 = pneg %p92
      %p99 = scmp.eq.s32.totalorder %s15, 3
      %p100 = por %p98, %p99
      %p101 = scmp.ne.s32.totalorder %s93, %s96
      %p102 = scmp.eq.s32.totalorder %s15, 0
      %p103 = por %p101, %p102
      %p104 = scmp.ne.s32.totalorder %s93, %s96
      %p105 = scmp.eq.s32.totalorder %s20, 3
      %p106 = por %p104, %p105
      %p107 = scmp.ne.s32.totalorder %s96, %s97
      %p108 = scmp.eq.s32.totalorder %s20, 0
      %p109 = por %p107, %p108
      %p110 = scmp.ne.s32.totalorder %s96, %s97
      %p111 = scmp.eq.s32.totalorder %s21, 3
      %p112 = por %p110, %p111
      %p114 = scmp.ne.s32.totalorder %s97, %s113
      %p115 = scmp.eq.s32.totalorder %s21, 0
      %p116 = por %p114, %p115
      %p117 = scmp.le.s32.totalorder 1, %s15
      %p118 = scmp.lt.s32.totalorder %s15, 5
      %p119 = pnand %p117, %p118
      %p120 = pneg %p119
      // Predicated region
      $region9: #{tpu_custom_call.1} parent=5 // pred_check
        _
      $region10: #{tpu_custom_call.1} parent=5 // pred_check_branch
        %122 = sbr.rel (%p119) target = $region12
      $region11: #{tpu_custom_call.1} parent=5 // pred_region
        %s123 = ssub.s32 %s15, 1
        // Predicated region
        $region13: #{tpu_custom_call.1} parent=11 // pred_check
          %p124 = pneg %p81
        $region14: #{tpu_custom_call.1} parent=11 // pred_check_branch
          %126 = sbr.rel (%p124) target = $region16
        $region15: #{tpu_custom_call.1} parent=11 // pred_region
          %s127 = smul.u32 16, %s25
          %s129 = ssub.s32 2048, 2048
          %130 = vsyncadd [#allocation6], %s129
          %s131 = smul.addr %s127, 128
          %s132 = scalar_lea.hbm %s1, %s131
          %s133 = sshll.u32 [#allocation5], 4
          %s134 = int_to_ptr.vmem [resolvable:$true] %s133
          %139 = dma.hbm_to_vmem [thread:$0]  %s132, 2048, %s134, [#allocation6], 128, 128, 8
        $region16: #{tpu_custom_call.1} parent=11 // pred_fallthru
          _
      $region12: #{tpu_custom_call.1} parent=5 // pred_fallthru
        _
      %p140 = scmp.lt.s32.totalorder %s15, 4
      // Predicated region
      $region17: #{tpu_custom_call.1} parent=5 // pred_check
        %p141 = pneg %p140
      $region18: #{tpu_custom_call.1} parent=5 // pred_check_branch
        %143 = sbr.rel (%p141) target = $region20
      $region19: #{tpu_custom_call.1} parent=5 // pred_region
        // Predicated region
        $region21: #{tpu_custom_call.1} parent=19 // pred_check
          %p144 = pneg %p49
        $region22: #{tpu_custom_call.1} parent=19 // pred_check_branch
          %146 = sbr.rel (%p144) target = $region24
        $region23: #{tpu_custom_call.1} parent=19 // pred_region
          %s147 = sand.u32 %s39, 1
          %s148 = scalar_lea.sflag [#allocation3], %s147
          %s149 = sand.u32 %s39, 1
          %s150 = smul.addr %s149, 32
          %s151 = scalar_lea.vmem [#allocation2], %s150
          %s152 = smul.u32 4, %s22
          %s154 = ssub.s32 512, 512
          %155 = vsyncadd %s148, %s154
          %s156 = sadd.s32 %s23, %s152
          %s157 = smul.addr %s156, 128
          %s158 = scalar_lea.hbm %s0, %s157
          %s159 = sshll.u32 %s151, 4
          %s160 = int_to_ptr.vmem [resolvable:$true] %s159
          %165 = dma.hbm_to_vmem [thread:$0]  %s158, 512, %s160, %s148, 128, 128, 8
        $region24: #{tpu_custom_call.1} parent=19 // pred_fallthru
          _
      $region20: #{tpu_custom_call.1} parent=5 // pred_fallthru
        _
      %p166 = scmp.le.s32.totalorder 1, %s15
      %p167 = scmp.lt.s32.totalorder %s15, 5
      %p168 = pnand %p166, %p167
      %p169 = pneg %p168
      // Predicated region
      $region25: #{tpu_custom_call.1} parent=5 // pred_check
        _
      $region26: #{tpu_custom_call.1} parent=5 // pred_check_branch
        %171 = sbr.rel (%p168) target = $region28
      $region27: #{tpu_custom_call.1} parent=5 // pred_region
        %s172 = ssub.s32 %s15, 1
        %s173 = sand.u32 %s42, 1
        %s174 = scalar_lea.sflag [#allocation3], %s173
        %s175 = sand.u32 %s42, 1
        %s176 = smul.addr %s175, 32
        %s177 = scalar_lea.vmem [#allocation2], %s176
        // Predicated region
        $region29: #{tpu_custom_call.1} parent=27 // pred_check
          %p178 = pneg %p55
        $region30: #{tpu_custom_call.1} parent=27 // pred_check_branch
          %180 = sbr.rel (%p178) target = $region32
        $region31: #{tpu_custom_call.1} parent=27 // pred_region
          %181 = dma.done %s174, 512
        $region32: #{tpu_custom_call.1} parent=27 // pred_fallthru
          _
        // Predicated region
        $region33: #{tpu_custom_call.1} parent=27 // pred_check
          %p182 = pneg %p81
        $region34: #{tpu_custom_call.1} parent=27 // pred_check_branch
          %184 = sbr.rel (%p182) target = $region36
        $region35: #{tpu_custom_call.1} parent=27 // pred_region
          %185 = dma.done [#allocation6], 2048
        $region36: #{tpu_custom_call.1} parent=27 // pred_fallthru
          _
        %s186 = sand.u32 %s42, 1
        %s187 = scalar_lea.sflag [#allocation3], %s186
        %s188 = sand.u32 %s42, 1
        %s189 = smul.addr %s188, 32
        %s190 = scalar_lea.vmem [#allocation2], %s189
        %p191 = pneg %p55
        %p192 = pneg %p52
        %p193 = pneg %p81
        %p194 = pneg %p78
        %p195 = pneg %p109
        %p196 = pneg %p106
        %s197 = sand.u32 %s96, 1
        %s198 = scalar_lea.sflag [#allocation4], %s197
        %s199 = sand.u32 %s96, 1
        %s200 = smul.addr %s199, 12288
        %s201 = scalar_lea.vmem [#allocation7], %s200
        %s202 = smul.u32 4, %s24
        %s203 = smul.u32 16, %s25
        %s204 = smul.u32 32, %s24
        %s205 = smul.u32 16, %s25
        %v206 = vld [vmem:[#allocation5] sm:$0xff]
        %v207 = vld [vmem:[#allocation5 + $0x8] sm:$0xff]
        %v208 = vld [vmem:[#allocation5 + $0x10] sm:$0xff]
        %v209 = vld [vmem:[#allocation5 + $0x18] sm:$0xff]
        %v210 = vld [vmem:[#allocation5 + $0x20] sm:$0xff]
        %v211 = vld [vmem:[#allocation5 + $0x28] sm:$0xff]
        %v212 = vld [vmem:[#allocation5 + $0x30] sm:$0xff]
        %v213 = vld [vmem:[#allocation5 + $0x38] sm:$0xff]
        %v214 = vld [vmem:[#allocation5 + $0x40] sm:$0xff]
        %v215 = vld [vmem:[#allocation5 + $0x48] sm:$0xff]
        %v216 = vld [vmem:[#allocation5 + $0x50] sm:$0xff]
        %v217 = vld [vmem:[#allocation5 + $0x58] sm:$0xff]
        %v218 = vld [vmem:[#allocation5 + $0x60] sm:$0xff]
        %v219 = vld [vmem:[#allocation5 + $0x68] sm:$0xff]
        %v220 = vld [vmem:[#allocation5 + $0x70] sm:$0xff]
        %v221 = vld [vmem:[#allocation5 + $0x78] sm:$0xff]
        %v222 = vmul.f32 %v206, 2.0
        %v223 = vmul.f32 %v207, 2.0
        %v224 = vmul.f32 %v208, 2.0
        %v225 = vmul.f32 %v209, 2.0
        %v226 = vmul.f32 %v210, 2.0
        %v227 = vmul.f32 %v211, 2.0
        %v228 = vmul.f32 %v212, 2.0
        %v229 = vmul.f32 %v213, 2.0
        %v230 = vmul.f32 %v214, 2.0
        %v231 = vmul.f32 %v215, 2.0
        %v232 = vmul.f32 %v216, 2.0
        %v233 = vmul.f32 %v217, 2.0
        %v234 = vmul.f32 %v218, 2.0
        %v235 = vmul.f32 %v219, 2.0
        %v236 = vmul.f32 %v220, 2.0
        %v237 = vmul.f32 %v221, 2.0
        %v238 = vtanh.pop %v222
        %v239 = vtanh.pop %v223
        %v240 = vtanh.pop %v224
        %v241 = vtanh.pop %v225
        %v242 = vtanh.pop %v226
        %v243 = vtanh.pop %v227
        %v244 = vtanh.pop %v228
        %v245 = vtanh.pop %v229
        %v246 = vtanh.pop %v230
        %v247 = vtanh.pop %v231
        %v248 = vtanh.pop %v232
        %v249 = vtanh.pop %v233
        %v250 = vtanh.pop %v234
        %v251 = vtanh.pop %v235
        %v252 = vtanh.pop %v236
        %v253 = vtanh.pop %v237
        %v254 = vadd.f32 %v222, 3.0
        %v255 = vadd.f32 %v223, 3.0
        %v256 = vadd.f32 %v224, 3.0
        %v257 = vadd.f32 %v225, 3.0
        %v258 = vadd.f32 %v226, 3.0
        %v259 = vadd.f32 %v227, 3.0
        %v260 = vadd.f32 %v228, 3.0
        %v261 = vadd.f32 %v229, 3.0
        %v262 = vadd.f32 %v230, 3.0
        %v263 = vadd.f32 %v231, 3.0
        %v264 = vadd.f32 %v232, 3.0
        %v265 = vadd.f32 %v233, 3.0
        %v266 = vadd.f32 %v234, 3.0
        %v267 = vadd.f32 %v235, 3.0
        %v268 = vadd.f32 %v236, 3.0
        %v269 = vadd.f32 %v237, 3.0
        %v270 = vtanh.pop %v254
        %v271 = vtanh.pop %v255
        %v272 = vtanh.pop %v256
        %v273 = vtanh.pop %v257
        %v274 = vtanh.pop %v258
        %v275 = vtanh.pop %v259
        %v276 = vtanh.pop %v260
        %v277 = vtanh.pop %v261
        %v278 = vtanh.pop %v262
        %v279 = vtanh.pop %v263
        %v280 = vtanh.pop %v264
        %v281 = vtanh.pop %v265
        %v282 = vtanh.pop %v266
        %v283 = vtanh.pop %v267
        %v284 = vtanh.pop %v268
        %v285 = vtanh.pop %v269
        %v286 = vld [vmem:[%s177] sm:$0xff]
        %v287 = vld [vmem:[%s177 + $0x8] sm:$0xff]
        %v288 = vld [vmem:[%s177 + $0x10] sm:$0xff]
        %v289 = vld [vmem:[%s177 + $0x18] sm:$0xff]
        %v290 = vlaneseq
        %v291 = vshrl.u32 %v290, 7
        %v292 = vsub.s32 0, %v291
        %v293 = vrot.slane %v286, %v292
        %295 = vbcast.lane.b32.xlu0 %v293, 256
        %v296 = vpop.permute.xlu0 %295
        %s298 = sor.u32 256, 8
        %299 = vbcast.lane.b32.xlu0 %v293, %s298
        %v300 = vpop.permute.xlu0 %299
        %s302 = sor.u32 256, 16
        %303 = vbcast.lane.b32.xlu0 %v293, %s302
        %v304 = vpop.permute.xlu0 %303
        %s306 = sor.u32 256, 24
        %307 = vbcast.lane.b32.xlu0 %v293, %s306
        %v308 = vpop.permute.xlu0 %307
        %s310 = sor.u32 256, 32
        %311 = vbcast.lane.b32.xlu0 %v293, %s310
        %v312 = vpop.permute.xlu0 %311
        %s314 = sor.u32 256, 40
        %315 = vbcast.lane.b32.xlu0 %v293, %s314
        %v316 = vpop.permute.xlu0 %315
        %s318 = sor.u32 256, 48
        %319 = vbcast.lane.b32.xlu0 %v293, %s318
        %v320 = vpop.permute.xlu0 %319
        %s322 = sor.u32 256, 56
        %323 = vbcast.lane.b32.xlu0 %v293, %s322
        %v324 = vpop.permute.xlu0 %323
        %s326 = sor.u32 256, 64
        %327 = vbcast.lane.b32.xlu0 %v293, %s326
        %v328 = vpop.permute.xlu0 %327
        %s330 = sor.u32 256, 72
        %331 = vbcast.lane.b32.xlu0 %v293, %s330
        %v332 = vpop.permute.xlu0 %331
        %s334 = sor.u32 256, 80
        %335 = vbcast.lane.b32.xlu0 %v293, %s334
        %v336 = vpop.permute.xlu0 %335
        %s338 = sor.u32 256, 88
        %339 = vbcast.lane.b32.xlu0 %v293, %s338
        %v340 = vpop.permute.xlu0 %339
        %s342 = sor.u32 256, 96
        %343 = vbcast.lane.b32.xlu0 %v293, %s342
        %v344 = vpop.permute.xlu0 %343
        %s346 = sor.u32 256, 104
        %347 = vbcast.lane.b32.xlu0 %v293, %s346
        %v348 = vpop.permute.xlu0 %347
        %s350 = sor.u32 256, 112
        %351 = vbcast.lane.b32.xlu0 %v293, %s350
        %v352 = vpop.permute.xlu0 %351
        %s354 = sor.u32 256, 120
        %355 = vbcast.lane.b32.xlu0 %v293, %s354
        %v356 = vpop.permute.xlu0 %355
        %v357 = vlaneseq
        %v358 = vshrl.u32 %v357, 7
        %v359 = vsub.s32 1, %v358
        %v360 = vrot.slane %v286, %v359
        %362 = vbcast.lane.b32.xlu0 %v360, 256
        %v363 = vpop.permute.xlu0 %362
        %s365 = sor.u32 256, 8
        %366 = vbcast.lane.b32.xlu0 %v360, %s365
        %v367 = vpop.permute.xlu0 %366
        %s369 = sor.u32 256, 16
        %370 = vbcast.lane.b32.xlu0 %v360, %s369
        %v371 = vpop.permute.xlu0 %370
        %s373 = sor.u32 256, 24
        %374 = vbcast.lane.b32.xlu0 %v360, %s373
        %v375 = vpop.permute.xlu0 %374
        %s377 = sor.u32 256, 32
        %378 = vbcast.lane.b32.xlu0 %v360, %s377
        %v379 = vpop.permute.xlu0 %378
        %s381 = sor.u32 256, 40
        %382 = vbcast.lane.b32.xlu0 %v360, %s381
        %v383 = vpop.permute.xlu0 %382
        %s385 = sor.u32 256, 48
        %386 = vbcast.lane.b32.xlu0 %v360, %s385
        %v387 = vpop.permute.xlu0 %386
        %s389 = sor.u32 256, 56
        %390 = vbcast.lane.b32.xlu0 %v360, %s389
        %v391 = vpop.permute.xlu0 %390
        %s393 = sor.u32 256, 64
        %394 = vbcast.lane.b32.xlu0 %v360, %s393
        %v395 = vpop.permute.xlu0 %394
        %s397 = sor.u32 256, 72
        %398 = vbcast.lane.b32.xlu0 %v360, %s397
        %v399 = vpop.permute.xlu0 %398
        %s401 = sor.u32 256, 80
        %402 = vbcast.lane.b32.xlu0 %v360, %s401
        %v403 = vpop.permute.xlu0 %402
        %s405 = sor.u32 256, 88
        %406 = vbcast.lane.b32.xlu0 %v360, %s405
        %v407 = vpop.permute.xlu0 %406
        %s409 = sor.u32 256, 96
        %410 = vbcast.lane.b32.xlu0 %v360, %s409
        %v411 = vpop.permute.xlu0 %410
        %s413 = sor.u32 256, 104
        %414 = vbcast.lane.b32.xlu0 %v360, %s413
        %v415 = vpop.permute.xlu0 %414
        %s417 = sor.u32 256, 112
        %418 = vbcast.lane.b32.xlu0 %v360, %s417
        %v419 = vpop.permute.xlu0 %418
        %s421 = sor.u32 256, 120
        %422 = vbcast.lane.b32.xlu0 %v360, %s421
        %v423 = vpop.permute.xlu0 %422
        %v424 = vlaneseq
        %v425 = vshrl.u32 %v424, 7
        %v426 = vsub.s32 2, %v425
        %v427 = vrot.slane %v286, %v426
        %429 = vbcast.lane.b32.xlu0 %v427, 256
        %v430 = vpop.permute.xlu0 %429
        %s432 = sor.u32 256, 8
        %433 = vbcast.lane.b32.xlu0 %v427, %s432
        %v434 = vpop.permute.xlu0 %433
        %s436 = sor.u32 256, 16
        %437 = vbcast.lane.b32.xlu0 %v427, %s436
        %v438 = vpop.permute.xlu0 %437
        %s440 = sor.u32 256, 24
        %441 = vbcast.lane.b32.xlu0 %v427, %s440
        %v442 = vpop.permute.xlu0 %441
        %s444 = sor.u32 256, 32
        %445 = vbcast.lane.b32.xlu0 %v427, %s444
        %v446 = vpop.permute.xlu0 %445
        %s448 = sor.u32 256, 40
        %449 = vbcast.lane.b32.xlu0 %v427, %s448
        %v450 = vpop.permute.xlu0 %449
        %s452 = sor.u32 256, 48
        %453 = vbcast.lane.b32.xlu0 %v427, %s452
        %v454 = vpop.permute.xlu0 %453
        %s456 = sor.u32 256, 56
        %457 = vbcast.lane.b32.xlu0 %v427, %s456
        %v458 = vpop.permute.xlu0 %457
        %s460 = sor.u32 256, 64
        %461 = vbcast.lane.b32.xlu0 %v427, %s460
        %v462 = vpop.permute.xlu0 %461
        %s464 = sor.u32 256, 72
        %465 = vbcast.lane.b32.xlu0 %v427, %s464
        %v466 = vpop.permute.xlu0 %465
        %s468 = sor.u32 256, 80
        %469 = vbcast.lane.b32.xlu0 %v427, %s468
        %v470 = vpop.permute.xlu0 %469
        %s472 = sor.u32 256, 88
        %473 = vbcast.lane.b32.xlu0 %v427, %s472
        %v474 = vpop.permute.xlu0 %473
        %s476 = sor.u32 256, 96
        %477 = vbcast.lane.b32.xlu0 %v427, %s476
        %v478 = vpop.permute.xlu0 %477
        %s480 = sor.u32 256, 104
        %481 = vbcast.lane.b32.xlu0 %v427, %s480
        %v482 = vpop.permute.xlu0 %481
        %s484 = sor.u32 256, 112
        %485 = vbcast.lane.b32.xlu0 %v427, %s484
        %v486 = vpop.permute.xlu0 %485
        %s488 = sor.u32 256, 120
        %489 = vbcast.lane.b32.xlu0 %v427, %s488
        %v490 = vpop.permute.xlu0 %489
        %v491 = vlaneseq
        %v492 = vshrl.u32 %v491, 7
        %v493 = vsub.s32 3, %v492
        %v494 = vrot.slane %v286, %v493
        %496 = vbcast.lane.b32.xlu0 %v494, 256
        %v497 = vpop.permute.xlu0 %496
        %s499 = sor.u32 256, 8
        %500 = vbcast.lane.b32.xlu0 %v494, %s499
        %v501 = vpop.permute.xlu0 %500
        %s503 = sor.u32 256, 16
        %504 = vbcast.lane.b32.xlu0 %v494, %s503
        %v505 = vpop.permute.xlu0 %504
        %s507 = sor.u32 256, 24
        %508 = vbcast.lane.b32.xlu0 %v494, %s507
        %v509 = vpop.permute.xlu0 %508
        %s511 = sor.u32 256, 32
        %512 = vbcast.lane.b32.xlu0 %v494, %s511
        %v513 = vpop.permute.xlu0 %512
        %s515 = sor.u32 256, 40
        %516 = vbcast.lane.b32.xlu0 %v494, %s515
        %v517 = vpop.permute.xlu0 %516
        %s519 = sor.u32 256, 48
        %520 = vbcast.lane.b32.xlu0 %v494, %s519
        %v521 = vpop.permute.xlu0 %520
        %s523 = sor.u32 256, 56
        %524 = vbcast.lane.b32.xlu0 %v494, %s523
        %v525 = vpop.permute.xlu0 %524
        %s527 = sor.u32 256, 64
        %528 = vbcast.lane.b32.xlu0 %v494, %s527
        %v529 = vpop.permute.xlu0 %528
        %s531 = sor.u32 256, 72
        %532 = vbcast.lane.b32.xlu0 %v494, %s531
        %v533 = vpop.permute.xlu0 %532
        %s535 = sor.u32 256, 80
        %536 = vbcast.lane.b32.xlu0 %v494, %s535
        %v537 = vpop.permute.xlu0 %536
        %s539 = sor.u32 256, 88
        %540 = vbcast.lane.b32.xlu0 %v494, %s539
        %v541 = vpop.permute.xlu0 %540
        %s543 = sor.u32 256, 96
        %544 = vbcast.lane.b32.xlu0 %v494, %s543
        %v545 = vpop.permute.xlu0 %544
        %s547 = sor.u32 256, 104
        %548 = vbcast.lane.b32.xlu0 %v494, %s547
        %v549 = vpop.permute.xlu0 %548
        %s551 = sor.u32 256, 112
        %552 = vbcast.lane.b32.xlu0 %v494, %s551
        %v553 = vpop.permute.xlu0 %552
        %s555 = sor.u32 256, 120
        %556 = vbcast.lane.b32.xlu0 %v494, %s555
        %v557 = vpop.permute.xlu0 %556
        %v558 = vlaneseq
        %v559 = vshrl.u32 %v558, 7
        %v560 = vsub.s32 4, %v559
        %v561 = vrot.slane %v286, %v560
        %563 = vbcast.lane.b32.xlu0 %v561, 256
        %v564 = vpop.permute.xlu0 %563
        %s566 = sor.u32 256, 8
        %567 = vbcast.lane.b32.xlu0 %v561, %s566
        %v568 = vpop.permute.xlu0 %567
        %s570 = sor.u32 256, 16
        %571 = vbcast.lane.b32.xlu0 %v561, %s570
        %v572 = vpop.permute.xlu0 %571
        %s574 = sor.u32 256, 24
        %575 = vbcast.lane.b32.xlu0 %v561, %s574
        %v576 = vpop.permute.xlu0 %575
        %s578 = sor.u32 256, 32
        %579 = vbcast.lane.b32.xlu0 %v561, %s578
        %v580 = vpop.permute.xlu0 %579
        %s582 = sor.u32 256, 40
        %583 = vbcast.lane.b32.xlu0 %v561, %s582
        %v584 = vpop.permute.xlu0 %583
        %s586 = sor.u32 256, 48
        %587 = vbcast.lane.b32.xlu0 %v561, %s586
        %v588 = vpop.permute.xlu0 %587
        %s590 = sor.u32 256, 56
        %591 = vbcast.lane.b32.xlu0 %v561, %s590
        %v592 = vpop.permute.xlu0 %591
        %s594 = sor.u32 256, 64
        %595 = vbcast.lane.b32.xlu0 %v561, %s594
        %v596 = vpop.permute.xlu0 %595
        %s598 = sor.u32 256, 72
        %599 = vbcast.lane.b32.xlu0 %v561, %s598
        %v600 = vpop.permute.xlu0 %599
        %s602 = sor.u32 256, 80
        %603 = vbcast.lane.b32.xlu0 %v561, %s602
        %v604 = vpop.permute.xlu0 %603
        %s606 = sor.u32 256, 88
        %607 = vbcast.lane.b32.xlu0 %v561, %s606
        %v608 = vpop.permute.xlu0 %607
        %s610 = sor.u32 256, 96
        %611 = vbcast.lane.b32.xlu0 %v561, %s610
        %v612 = vpop.permute.xlu0 %611
        %s614 = sor.u32 256, 104
        %615 = vbcast.lane.b32.xlu0 %v561, %s614
        %v616 = vpop.permute.xlu0 %615
        %s618 = sor.u32 256, 112
        %619 = vbcast.lane.b32.xlu0 %v561, %s618
        %v620 = vpop.permute.xlu0 %619
        %s622 = sor.u32 256, 120
        %623 = vbcast.lane.b32.xlu0 %v561, %s622
        %v624 = vpop.permute.xlu0 %623
        %v625 = vlaneseq
        %v626 = vshrl.u32 %v625, 7
        %v627 = vsub.s32 5, %v626
        %v628 = vrot.slane %v286, %v627
        %630 = vbcast.lane.b32.xlu0 %v628, 256
        %v631 = vpop.permute.xlu0 %630
        %s633 = sor.u32 256, 8
        %634 = vbcast.lane.b32.xlu0 %v628, %s633
        %v635 = vpop.permute.xlu0 %634
        %s637 = sor.u32 256, 16
        %638 = vbcast.lane.b32.xlu0 %v628, %s637
        %v639 = vpop.permute.xlu0 %638
        %s641 = sor.u32 256, 24
        %642 = vbcast.lane.b32.xlu0 %v628, %s641
        %v643 = vpop.permute.xlu0 %642
        %s645 = sor.u32 256, 32
        %646 = vbcast.lane.b32.xlu0 %v628, %s645
        %v647 = vpop.permute.xlu0 %646
        %s649 = sor.u32 256, 40
        %650 = vbcast.lane.b32.xlu0 %v628, %s649
        %v651 = vpop.permute.xlu0 %650
        %s653 = sor.u32 256, 48
        %654 = vbcast.lane.b32.xlu0 %v628, %s653
        %v655 = vpop.permute.xlu0 %654
        %s657 = sor.u32 256, 56
        %658 = vbcast.lane.b32.xlu0 %v628, %s657
        %v659 = vpop.permute.xlu0 %658
        %s661 = sor.u32 256, 64
        %662 = vbcast.lane.b32.xlu0 %v628, %s661
        %v663 = vpop.permute.xlu0 %662
        %s665 = sor.u32 256, 72
        %666 = vbcast.lane.b32.xlu0 %v628, %s665
        %v667 = vpop.permute.xlu0 %666
        %s669 = sor.u32 256, 80
        %670 = vbcast.lane.b32.xlu0 %v628, %s669
        %v671 = vpop.permute.xlu0 %670
        %s673 = sor.u32 256, 88
        %674 = vbcast.lane.b32.xlu0 %v628, %s673
        %v675 = vpop.permute.xlu0 %674
        %s677 = sor.u32 256, 96
        %678 = vbcast.lane.b32.xlu0 %v628, %s677
        %v679 = vpop.permute.xlu0 %678
        %s681 = sor.u32 256, 104
        %682 = vbcast.lane.b32.xlu0 %v628, %s681
        %v683 = vpop.permute.xlu0 %682
        %s685 = sor.u32 256, 112
        %686 = vbcast.lane.b32.xlu0 %v628, %s685
        %v687 = vpop.permute.xlu0 %686
        %s689 = sor.u32 256, 120
        %690 = vbcast.lane.b32.xlu0 %v628, %s689
        %v691 = vpop.permute.xlu0 %690
        %v692 = vlaneseq
        %v693 = vshrl.u32 %v692, 7
        %v694 = vsub.s32 6, %v693
        %v695 = vrot.slane %v286, %v694
        %697 = vbcast.lane.b32.xlu0 %v695, 256
        %v698 = vpop.permute.xlu0 %697
        %s700 = sor.u32 256, 8
        %701 = vbcast.lane.b32.xlu0 %v695, %s700
        %v702 = vpop.permute.xlu0 %701
        %s704 = sor.u32 256, 16
        %705 = vbcast.lane.b32.xlu0 %v695, %s704
        %v706 = vpop.permute.xlu0 %705
        %s708 = sor.u32 256, 24
        %709 = vbcast.lane.b32.xlu0 %v695, %s708
        %v710 = vpop.permute.xlu0 %709
        %s712 = sor.u32 256, 32
        %713 = vbcast.lane.b32.xlu0 %v695, %s712
        %v714 = vpop.permute.xlu0 %713
        %s716 = sor.u32 256, 40
        %717 = vbcast.lane.b32.xlu0 %v695, %s716
        %v718 = vpop.permute.xlu0 %717
        %s720 = sor.u32 256, 48
        %721 = vbcast.lane.b32.xlu0 %v695, %s720
        %v722 = vpop.permute.xlu0 %721
        %s724 = sor.u32 256, 56
        %725 = vbcast.lane.b32.xlu0 %v695, %s724
        %v726 = vpop.permute.xlu0 %725
        %s728 = sor.u32 256, 64
        %729 = vbcast.lane.b32.xlu0 %v695, %s728
        %v730 = vpop.permute.xlu0 %729
        %s732 = sor.u32 256, 72
        %733 = vbcast.lane.b32.xlu0 %v695, %s732
        %v734 = vpop.permute.xlu0 %733
        %s736 = sor.u32 256, 80
        %737 = vbcast.lane.b32.xlu0 %v695, %s736
        %v738 = vpop.permute.xlu0 %737
        %s740 = sor.u32 256, 88
        %741 = vbcast.lane.b32.xlu0 %v695, %s740
        %v742 = vpop.permute.xlu0 %741
        %s744 = sor.u32 256, 96
        %745 = vbcast.lane.b32.xlu0 %v695, %s744
        %v746 = vpop.permute.xlu0 %745
        %s748 = sor.u32 256, 104
        %749 = vbcast.lane.b32.xlu0 %v695, %s748
        %v750 = vpop.permute.xlu0 %749
        %s752 = sor.u32 256, 112
        %753 = vbcast.lane.b32.xlu0 %v695, %s752
        %v754 = vpop.permute.xlu0 %753
        %s756 = sor.u32 256, 120
        %757 = vbcast.lane.b32.xlu0 %v695, %s756
        %v758 = vpop.permute.xlu0 %757
        %v759 = vlaneseq
        %v760 = vshrl.u32 %v759, 7
        %v761 = vsub.s32 7, %v760
        %v762 = vrot.slane %v286, %v761
        %764 = vbcast.lane.b32.xlu0 %v762, 256
        %v765 = vpop.permute.xlu0 %764
        %s767 = sor.u32 256, 8
        %768 = vbcast.lane.b32.xlu0 %v762, %s767
        %v769 = vpop.permute.xlu0 %768
        %s771 = sor.u32 256, 16
        %772 = vbcast.lane.b32.xlu0 %v762, %s771
        %v773 = vpop.permute.xlu0 %772
        %s775 = sor.u32 256, 24
        %776 = vbcast.lane.b32.xlu0 %v762, %s775
        %v777 = vpop.permute.xlu0 %776
        %s779 = sor.u32 256, 32
        %780 = vbcast.lane.b32.xlu0 %v762, %s779
        %v781 = vpop.permute.xlu0 %780
        %s783 = sor.u32 256, 40
        %784 = vbcast.lane.b32.xlu0 %v762, %s783
        %v785 = vpop.permute.xlu0 %784
        %s787 = sor.u32 256, 48
        %788 = vbcast.lane.b32.xlu0 %v762, %s787
        %v789 = vpop.permute.xlu0 %788
        %s791 = sor.u32 256, 56
        %792 = vbcast.lane.b32.xlu0 %v762, %s791
        %v793 = vpop.permute.xlu0 %792
        %s795 = sor.u32 256, 64
        %796 = vbcast.lane.b32.xlu0 %v762, %s795
        %v797 = vpop.permute.xlu0 %796
        %s799 = sor.u32 256, 72
        %800 = vbcast.lane.b32.xlu0 %v762, %s799
        %v801 = vpop.permute.xlu0 %800
        %s803 = sor.u32 256, 80
        %804 = vbcast.lane.b32.xlu0 %v762, %s803
        %v805 = vpop.permute.xlu0 %804
        %s807 = sor.u32 256, 88
        %808 = vbcast.lane.b32.xlu0 %v762, %s807
        %v809 = vpop.permute.xlu0 %808
        %s811 = sor.u32 256, 96
        %812 = vbcast.lane.b32.xlu0 %v762, %s811
        %v813 = vpop.permute.xlu0 %812
        %s815 = sor.u32 256, 104
        %816 = vbcast.lane.b32.xlu0 %v762, %s815
        %v817 = vpop.permute.xlu0 %816
        %s819 = sor.u32 256, 112
        %820 = vbcast.lane.b32.xlu0 %v762, %s819
        %v821 = vpop.permute.xlu0 %820
        %s823 = sor.u32 256, 120
        %824 = vbcast.lane.b32.xlu0 %v762, %s823
        %v825 = vpop.permute.xlu0 %824
        %v826 = vlaneseq
        %v827 = vshrl.u32 %v826, 7
        %v828 = vsub.s32 0, %v827
        %v829 = vrot.slane %v287, %v828
        %831 = vbcast.lane.b32.xlu0 %v829, 256
        %v832 = vpop.permute.xlu0 %831
        %s834 = sor.u32 256, 8
        %835 = vbcast.lane.b32.xlu0 %v829, %s834
        %v836 = vpop.permute.xlu0 %835
        %s838 = sor.u32 256, 16
        %839 = vbcast.lane.b32.xlu0 %v829, %s838
        %v840 = vpop.permute.xlu0 %839
        %s842 = sor.u32 256, 24
        %843 = vbcast.lane.b32.xlu0 %v829, %s842
        %v844 = vpop.permute.xlu0 %843
        %s846 = sor.u32 256, 32
        %847 = vbcast.lane.b32.xlu0 %v829, %s846
        %v848 = vpop.permute.xlu0 %847
        %s850 = sor.u32 256, 40
        %851 = vbcast.lane.b32.xlu0 %v829, %s850
        %v852 = vpop.permute.xlu0 %851
        %s854 = sor.u32 256, 48
        %855 = vbcast.lane.b32.xlu0 %v829, %s854
        %v856 = vpop.permute.xlu0 %855
        %s858 = sor.u32 256, 56
        %859 = vbcast.lane.b32.xlu0 %v829, %s858
        %v860 = vpop.permute.xlu0 %859
        %s862 = sor.u32 256, 64
        %863 = vbcast.lane.b32.xlu0 %v829, %s862
        %v864 = vpop.permute.xlu0 %863
        %s866 = sor.u32 256, 72
        %867 = vbcast.lane.b32.xlu0 %v829, %s866
        %v868 = vpop.permute.xlu0 %867
        %s870 = sor.u32 256, 80
        %871 = vbcast.lane.b32.xlu0 %v829, %s870
        %v872 = vpop.permute.xlu0 %871
        %s874 = sor.u32 256, 88
        %875 = vbcast.lane.b32.xlu0 %v829, %s874
        %v876 = vpop.permute.xlu0 %875
        %s878 = sor.u32 256, 96
        %879 = vbcast.lane.b32.xlu0 %v829, %s878
        %v880 = vpop.permute.xlu0 %879
        %s882 = sor.u32 256, 104
        %883 = vbcast.lane.b32.xlu0 %v829, %s882
        %v884 = vpop.permute.xlu0 %883
        %s886 = sor.u32 256, 112
        %887 = vbcast.lane.b32.xlu0 %v829, %s886
        %v888 = vpop.permute.xlu0 %887
        %s890 = sor.u32 256, 120
        %891 = vbcast.lane.b32.xlu0 %v829, %s890
        %v892 = vpop.permute.xlu0 %891
        %v893 = vlaneseq
        %v894 = vshrl.u32 %v893, 7
        %v895 = vsub.s32 1, %v894
        %v896 = vrot.slane %v287, %v895
        %898 = vbcast.lane.b32.xlu0 %v896, 256
        %v899 = vpop.permute.xlu0 %898
        %s901 = sor.u32 256, 8
        %902 = vbcast.lane.b32.xlu0 %v896, %s901
        %v903 = vpop.permute.xlu0 %902
        %s905 = sor.u32 256, 16
        %906 = vbcast.lane.b32.xlu0 %v896, %s905
        %v907 = vpop.permute.xlu0 %906
        %s909 = sor.u32 256, 24
        %910 = vbcast.lane.b32.xlu0 %v896, %s909
        %v911 = vpop.permute.xlu0 %910
        %s913 = sor.u32 256, 32
        %914 = vbcast.lane.b32.xlu0 %v896, %s913
        %v915 = vpop.permute.xlu0 %914
        %s917 = sor.u32 256, 40
        %918 = vbcast.lane.b32.xlu0 %v896, %s917
        %v919 = vpop.permute.xlu0 %918
        %s921 = sor.u32 256, 48
        %922 = vbcast.lane.b32.xlu0 %v896, %s921
        %v923 = vpop.permute.xlu0 %922
        %s925 = sor.u32 256, 56
        %926 = vbcast.lane.b32.xlu0 %v896, %s925
        %v927 = vpop.permute.xlu0 %926
        %s929 = sor.u32 256, 64
        %930 = vbcast.lane.b32.xlu0 %v896, %s929
        %v931 = vpop.permute.xlu0 %930
        %s933 = sor.u32 256, 72
        %934 = vbcast.lane.b32.xlu0 %v896, %s933
        %v935 = vpop.permute.xlu0 %934
        %s937 = sor.u32 256, 80
        %938 = vbcast.lane.b32.xlu0 %v896, %s937
        %v939 = vpop.permute.xlu0 %938
        %s941 = sor.u32 256, 88
        %942 = vbcast.lane.b32.xlu0 %v896, %s941
        %v943 = vpop.permute.xlu0 %942
        %s945 = sor.u32 256, 96
        %946 = vbcast.lane.b32.xlu0 %v896, %s945
        %v947 = vpop.permute.xlu0 %946
        %s949 = sor.u32 256, 104
        %950 = vbcast.lane.b32.xlu0 %v896, %s949
        %v951 = vpop.permute.xlu0 %950
        %s953 = sor.u32 256, 112
        %954 = vbcast.lane.b32.xlu0 %v896, %s953
        %v955 = vpop.permute.xlu0 %954
        %s957 = sor.u32 256, 120
        %958 = vbcast.lane.b32.xlu0 %v896, %s957
        %v959 = vpop.permute.xlu0 %958
        %v960 = vlaneseq
        %v961 = vshrl.u32 %v960, 7
        %v962 = vsub.s32 2, %v961
        %v963 = vrot.slane %v287, %v962
        %965 = vbcast.lane.b32.xlu0 %v963, 256
        %v966 = vpop.permute.xlu0 %965
        %s968 = sor.u32 256, 8
        %969 = vbcast.lane.b32.xlu0 %v963, %s968
        %v970 = vpop.permute.xlu0 %969
        %s972 = sor.u32 256, 16
        %973 = vbcast.lane.b32.xlu0 %v963, %s972
        %v974 = vpop.permute.xlu0 %973
        %s976 = sor.u32 256, 24
        %977 = vbcast.lane.b32.xlu0 %v963, %s976
        %v978 = vpop.permute.xlu0 %977
        %s980 = sor.u32 256, 32
        %981 = vbcast.lane.b32.xlu0 %v963, %s980
        %v982 = vpop.permute.xlu0 %981
        %s984 = sor.u32 256, 40
        %985 = vbcast.lane.b32.xlu0 %v963, %s984
        %v986 = vpop.permute.xlu0 %985
        %s988 = sor.u32 256, 48
        %989 = vbcast.lane.b32.xlu0 %v963, %s988
        %v990 = vpop.permute.xlu0 %989
        %s992 = sor.u32 256, 56
        %993 = vbcast.lane.b32.xlu0 %v963, %s992
        %v994 = vpop.permute.xlu0 %993
        %s996 = sor.u32 256, 64
        %997 = vbcast.lane.b32.xlu0 %v963, %s996
        %v998 = vpop.permute.xlu0 %997
        %s1000 = sor.u32 256, 72
        %1001 = vbcast.lane.b32.xlu0 %v963, %s1000
        %v1002 = vpop.permute.xlu0 %1001
        %s1004 = sor.u32 256, 80
        %1005 = vbcast.lane.b32.xlu0 %v963, %s1004
        %v1006 = vpop.permute.xlu0 %1005
        %s1008 = sor.u32 256, 88
        %1009 = vbcast.lane.b32.xlu0 %v963, %s1008
        %v1010 = vpop.permute.xlu0 %1009
        %s1012 = sor.u32 256, 96
        %1013 = vbcast.lane.b32.xlu0 %v963, %s1012
        %v1014 = vpop.permute.xlu0 %1013
        %s1016 = sor.u32 256, 104
        %1017 = vbcast.lane.b32.xlu0 %v963, %s1016
        %v1018 = vpop.permute.xlu0 %1017
        %s1020 = sor.u32 256, 112
        %1021 = vbcast.lane.b32.xlu0 %v963, %s1020
        %v1022 = vpop.permute.xlu0 %1021
        %s1024 = sor.u32 256, 120
        %1025 = vbcast.lane.b32.xlu0 %v963, %s1024
        %v1026 = vpop.permute.xlu0 %1025
        %v1027 = vlaneseq
        %v1028 = vshrl.u32 %v1027, 7
        %v1029 = vsub.s32 3, %v1028
        %v1030 = vrot.slane %v287, %v1029
        %1032 = vbcast.lane.b32.xlu0 %v1030, 256
        %v1033 = vpop.permute.xlu0 %1032
        %s1035 = sor.u32 256, 8
        %1036 = vbcast.lane.b32.xlu0 %v1030, %s1035
        %v1037 = vpop.permute.xlu0 %1036
        %s1039 = sor.u32 256, 16
        %1040 = vbcast.lane.b32.xlu0 %v1030, %s1039
        %v1041 = vpop.permute.xlu0 %1040
        %s1043 = sor.u32 256, 24
        %1044 = vbcast.lane.b32.xlu0 %v1030, %s1043
        %v1045 = vpop.permute.xlu0 %1044
        %s1047 = sor.u32 256, 32
        %1048 = vbcast.lane.b32.xlu0 %v1030, %s1047
        %v1049 = vpop.permute.xlu0 %1048
        %s1051 = sor.u32 256, 40
        %1052 = vbcast.lane.b32.xlu0 %v1030, %s1051
        %v1053 = vpop.permute.xlu0 %1052
        %s1055 = sor.u32 256, 48
        %1056 = vbcast.lane.b32.xlu0 %v1030, %s1055
        %v1057 = vpop.permute.xlu0 %1056
        %s1059 = sor.u32 256, 56
        %1060 = vbcast.lane.b32.xlu0 %v1030, %s1059
        %v1061 = vpop.permute.xlu0 %1060
        %s1063 = sor.u32 256, 64
        %1064 = vbcast.lane.b32.xlu0 %v1030, %s1063
        %v1065 = vpop.permute.xlu0 %1064
        %s1067 = sor.u32 256, 72
        %1068 = vbcast.lane.b32.xlu0 %v1030, %s1067
        %v1069 = vpop.permute.xlu0 %1068
        %s1071 = sor.u32 256, 80
        %1072 = vbcast.lane.b32.xlu0 %v1030, %s1071
        %v1073 = vpop.permute.xlu0 %1072
        %s1075 = sor.u32 256, 88
        %1076 = vbcast.lane.b32.xlu0 %v1030, %s1075
        %v1077 = vpop.permute.xlu0 %1076
        %s1079 = sor.u32 256, 96
        %1080 = vbcast.lane.b32.xlu0 %v1030, %s1079
        %v1081 = vpop.permute.xlu0 %1080
        %s1083 = sor.u32 256, 104
        %1084 = vbcast.lane.b32.xlu0 %v1030, %s1083
        %v1085 = vpop.permute.xlu0 %1084
        %s1087 = sor.u32 256, 112
        %1088 = vbcast.lane.b32.xlu0 %v1030, %s1087
        %v1089 = vpop.permute.xlu0 %1088
        %s1091 = sor.u32 256, 120
        %1092 = vbcast.lane.b32.xlu0 %v1030, %s1091
        %v1093 = vpop.permute.xlu0 %1092
        %v1094 = vlaneseq
        %v1095 = vshrl.u32 %v1094, 7
        %v1096 = vsub.s32 4, %v1095
        %v1097 = vrot.slane %v287, %v1096
        %1099 = vbcast.lane.b32.xlu0 %v1097, 256
        %v1100 = vpop.permute.xlu0 %1099
        %s1102 = sor.u32 256, 8
        %1103 = vbcast.lane.b32.xlu0 %v1097, %s1102
        %v1104 = vpop.permute.xlu0 %1103
        %s1106 = sor.u32 256, 16
        %1107 = vbcast.lane.b32.xlu0 %v1097, %s1106
        %v1108 = vpop.permute.xlu0 %1107
        %s1110 = sor.u32 256, 24
        %1111 = vbcast.lane.b32.xlu0 %v1097, %s1110
        %v1112 = vpop.permute.xlu0 %1111
        %s1114 = sor.u32 256, 32
        %1115 = vbcast.lane.b32.xlu0 %v1097, %s1114
        %v1116 = vpop.permute.xlu0 %1115
        %s1118 = sor.u32 256, 40
        %1119 = vbcast.lane.b32.xlu0 %v1097, %s1118
        %v1120 = vpop.permute.xlu0 %1119
        %s1122 = sor.u32 256, 48
        %1123 = vbcast.lane.b32.xlu0 %v1097, %s1122
        %v1124 = vpop.permute.xlu0 %1123
        %s1126 = sor.u32 256, 56
        %1127 = vbcast.lane.b32.xlu0 %v1097, %s1126
        %v1128 = vpop.permute.xlu0 %1127
        %s1130 = sor.u32 256, 64
        %1131 = vbcast.lane.b32.xlu0 %v1097, %s1130
        %v1132 = vpop.permute.xlu0 %1131
        %s1134 = sor.u32 256, 72
        %1135 = vbcast.lane.b32.xlu0 %v1097, %s1134
        %v1136 = vpop.permute.xlu0 %1135
        %s1138 = sor.u32 256, 80
        %1139 = vbcast.lane.b32.xlu0 %v1097, %s1138
        %v1140 = vpop.permute.xlu0 %1139
        %s1142 = sor.u32 256, 88
        %1143 = vbcast.lane.b32.xlu0 %v1097, %s1142
        %v1144 = vpop.permute.xlu0 %1143
        %s1146 = sor.u32 256, 96
        %1147 = vbcast.lane.b32.xlu0 %v1097, %s1146
        %v1148 = vpop.permute.xlu0 %1147
        %s1150 = sor.u32 256, 104
        %1151 = vbcast.lane.b32.xlu0 %v1097, %s1150
        %v1152 = vpop.permute.xlu0 %1151
        %s1154 = sor.u32 256, 112
        %1155 = vbcast.lane.b32.xlu0 %v1097, %s1154
        %v1156 = vpop.permute.xlu0 %1155
        %s1158 = sor.u32 256, 120
        %1159 = vbcast.lane.b32.xlu0 %v1097, %s1158
        %v1160 = vpop.permute.xlu0 %1159
        %v1161 = vlaneseq
        %v1162 = vshrl.u32 %v1161, 7
        %v1163 = vsub.s32 5, %v1162
        %v1164 = vrot.slane %v287, %v1163
        %1166 = vbcast.lane.b32.xlu0 %v1164, 256
        %v1167 = vpop.permute.xlu0 %1166
        %s1169 = sor.u32 256, 8
        %1170 = vbcast.lane.b32.xlu0 %v1164, %s1169
        %v1171 = vpop.permute.xlu0 %1170
        %s1173 = sor.u32 256, 16
        %1174 = vbcast.lane.b32.xlu0 %v1164, %s1173
        %v1175 = vpop.permute.xlu0 %1174
        %s1177 = sor.u32 256, 24
        %1178 = vbcast.lane.b32.xlu0 %v1164, %s1177
        %v1179 = vpop.permute.xlu0 %1178
        %s1181 = sor.u32 256, 32
        %1182 = vbcast.lane.b32.xlu0 %v1164, %s1181
        %v1183 = vpop.permute.xlu0 %1182
        %s1185 = sor.u32 256, 40
        %1186 = vbcast.lane.b32.xlu0 %v1164, %s1185
        %v1187 = vpop.permute.xlu0 %1186
        %s1189 = sor.u32 256, 48
        %1190 = vbcast.lane.b32.xlu0 %v1164, %s1189
        %v1191 = vpop.permute.xlu0 %1190
        %s1193 = sor.u32 256, 56
        %1194 = vbcast.lane.b32.xlu0 %v1164, %s1193
        %v1195 = vpop.permute.xlu0 %1194
        %s1197 = sor.u32 256, 64
        %1198 = vbcast.lane.b32.xlu0 %v1164, %s1197
        %v1199 = vpop.permute.xlu0 %1198
        %s1201 = sor.u32 256, 72
        %1202 = vbcast.lane.b32.xlu0 %v1164, %s1201
        %v1203 = vpop.permute.xlu0 %1202
        %s1205 = sor.u32 256, 80
        %1206 = vbcast.lane.b32.xlu0 %v1164, %s1205
        %v1207 = vpop.permute.xlu0 %1206
        %s1209 = sor.u32 256, 88
        %1210 = vbcast.lane.b32.xlu0 %v1164, %s1209
        %v1211 = vpop.permute.xlu0 %1210
        %s1213 = sor.u32 256, 96
        %1214 = vbcast.lane.b32.xlu0 %v1164, %s1213
        %v1215 = vpop.permute.xlu0 %1214
        %s1217 = sor.u32 256, 104
        %1218 = vbcast.lane.b32.xlu0 %v1164, %s1217
        %v1219 = vpop.permute.xlu0 %1218
        %s1221 = sor.u32 256, 112
        %1222 = vbcast.lane.b32.xlu0 %v1164, %s1221
        %v1223 = vpop.permute.xlu0 %1222
        %s1225 = sor.u32 256, 120
        %1226 = vbcast.lane.b32.xlu0 %v1164, %s1225
        %v1227 = vpop.permute.xlu0 %1226
        %v1228 = vlaneseq
        %v1229 = vshrl.u32 %v1228, 7
        %v1230 = vsub.s32 6, %v1229
        %v1231 = vrot.slane %v287, %v1230
        %1233 = vbcast.lane.b32.xlu0 %v1231, 256
        %v1234 = vpop.permute.xlu0 %1233
        %s1236 = sor.u32 256, 8
        %1237 = vbcast.lane.b32.xlu0 %v1231, %s1236
        %v1238 = vpop.permute.xlu0 %1237
        %s1240 = sor.u32 256, 16
        %1241 = vbcast.lane.b32.xlu0 %v1231, %s1240
        %v1242 = vpop.permute.xlu0 %1241
        %s1244 = sor.u32 256, 24
        %1245 = vbcast.lane.b32.xlu0 %v1231, %s1244
        %v1246 = vpop.permute.xlu0 %1245
        %s1248 = sor.u32 256, 32
        %1249 = vbcast.lane.b32.xlu0 %v1231, %s1248
        %v1250 = vpop.permute.xlu0 %1249
        %s1252 = sor.u32 256, 40
        %1253 = vbcast.lane.b32.xlu0 %v1231, %s1252
        %v1254 = vpop.permute.xlu0 %1253
        %s1256 = sor.u32 256, 48
        %1257 = vbcast.lane.b32.xlu0 %v1231, %s1256
        %v1258 = vpop.permute.xlu0 %1257
        %s1260 = sor.u32 256, 56
        %1261 = vbcast.lane.b32.xlu0 %v1231, %s1260
        %v1262 = vpop.permute.xlu0 %1261
        %s1264 = sor.u32 256, 64
        %1265 = vbcast.lane.b32.xlu0 %v1231, %s1264
        %v1266 = vpop.permute.xlu0 %1265
        %s1268 = sor.u32 256, 72
        %1269 = vbcast.lane.b32.xlu0 %v1231, %s1268
        %v1270 = vpop.permute.xlu0 %1269
        %s1272 = sor.u32 256, 80
        %1273 = vbcast.lane.b32.xlu0 %v1231, %s1272
        %v1274 = vpop.permute.xlu0 %1273
        %s1276 = sor.u32 256, 88
        %1277 = vbcast.lane.b32.xlu0 %v1231, %s1276
        %v1278 = vpop.permute.xlu0 %1277
        %s1280 = sor.u32 256, 96
        %1281 = vbcast.lane.b32.xlu0 %v1231, %s1280
        %v1282 = vpop.permute.xlu0 %1281
        %s1284 = sor.u32 256, 104
        %1285 = vbcast.lane.b32.xlu0 %v1231, %s1284
        %v1286 = vpop.permute.xlu0 %1285
        %s1288 = sor.u32 256, 112
        %1289 = vbcast.lane.b32.xlu0 %v1231, %s1288
        %v1290 = vpop.permute.xlu0 %1289
        %s1292 = sor.u32 256, 120
        %1293 = vbcast.lane.b32.xlu0 %v1231, %s1292
        %v1294 = vpop.permute.xlu0 %1293
        %v1295 = vlaneseq
        %v1296 = vshrl.u32 %v1295, 7
        %v1297 = vsub.s32 7, %v1296
        %v1298 = vrot.slane %v287, %v1297
        %1300 = vbcast.lane.b32.xlu0 %v1298, 256
        %v1301 = vpop.permute.xlu0 %1300
        %s1303 = sor.u32 256, 8
        %1304 = vbcast.lane.b32.xlu0 %v1298, %s1303
        %v1305 = vpop.permute.xlu0 %1304
        %s1307 = sor.u32 256, 16
        %1308 = vbcast.lane.b32.xlu0 %v1298, %s1307
        %v1309 = vpop.permute.xlu0 %1308
        %s1311 = sor.u32 256, 24
        %1312 = vbcast.lane.b32.xlu0 %v1298, %s1311
        %v1313 = vpop.permute.xlu0 %1312
        %s1315 = sor.u32 256, 32
        %1316 = vbcast.lane.b32.xlu0 %v1298, %s1315
        %v1317 = vpop.permute.xlu0 %1316
        %s1319 = sor.u32 256, 40
        %1320 = vbcast.lane.b32.xlu0 %v1298, %s1319
        %v1321 = vpop.permute.xlu0 %1320
        %s1323 = sor.u32 256, 48
        %1324 = vbcast.lane.b32.xlu0 %v1298, %s1323
        %v1325 = vpop.permute.xlu0 %1324
        %s1327 = sor.u32 256, 56
        %1328 = vbcast.lane.b32.xlu0 %v1298, %s1327
        %v1329 = vpop.permute.xlu0 %1328
        %s1331 = sor.u32 256, 64
        %1332 = vbcast.lane.b32.xlu0 %v1298, %s1331
        %v1333 = vpop.permute.xlu0 %1332
        %s1335 = sor.u32 256, 72
        %1336 = vbcast.lane.b32.xlu0 %v1298, %s1335
        %v1337 = vpop.permute.xlu0 %1336
        %s1339 = sor.u32 256, 80
        %1340 = vbcast.lane.b32.xlu0 %v1298, %s1339
        %v1341 = vpop.permute.xlu0 %1340
        %s1343 = sor.u32 256, 88
        %1344 = vbcast.lane.b32.xlu0 %v1298, %s1343
        %v1345 = vpop.permute.xlu0 %1344
        %s1347 = sor.u32 256, 96
        %1348 = vbcast.lane.b32.xlu0 %v1298, %s1347
        %v1349 = vpop.permute.xlu0 %1348
        %s1351 = sor.u32 256, 104
        %1352 = vbcast.lane.b32.xlu0 %v1298, %s1351
        %v1353 = vpop.permute.xlu0 %1352
        %s1355 = sor.u32 256, 112
        %1356 = vbcast.lane.b32.xlu0 %v1298, %s1355
        %v1357 = vpop.permute.xlu0 %1356
        %s1359 = sor.u32 256, 120
        %1360 = vbcast.lane.b32.xlu0 %v1298, %s1359
        %v1361 = vpop.permute.xlu0 %1360
        %v1362 = vlaneseq
        %v1363 = vshrl.u32 %v1362, 7
        %v1364 = vsub.s32 0, %v1363
        %v1365 = vrot.slane %v288, %v1364
        %1367 = vbcast.lane.b32.xlu0 %v1365, 256
        %v1368 = vpop.permute.xlu0 %1367
        %s1370 = sor.u32 256, 8
        %1371 = vbcast.lane.b32.xlu0 %v1365, %s1370
        %v1372 = vpop.permute.xlu0 %1371
        %s1374 = sor.u32 256, 16
        %1375 = vbcast.lane.b32.xlu0 %v1365, %s1374
        %v1376 = vpop.permute.xlu0 %1375
        %s1378 = sor.u32 256, 24
        %1379 = vbcast.lane.b32.xlu0 %v1365, %s1378
        %v1380 = vpop.permute.xlu0 %1379
        %s1382 = sor.u32 256, 32
        %1383 = vbcast.lane.b32.xlu0 %v1365, %s1382
        %v1384 = vpop.permute.xlu0 %1383
        %s1386 = sor.u32 256, 40
        %1387 = vbcast.lane.b32.xlu0 %v1365, %s1386
        %v1388 = vpop.permute.xlu0 %1387
        %s1390 = sor.u32 256, 48
        %1391 = vbcast.lane.b32.xlu0 %v1365, %s1390
        %v1392 = vpop.permute.xlu0 %1391
        %s1394 = sor.u32 256, 56
        %1395 = vbcast.lane.b32.xlu0 %v1365, %s1394
        %v1396 = vpop.permute.xlu0 %1395
        %s1398 = sor.u32 256, 64
        %1399 = vbcast.lane.b32.xlu0 %v1365, %s1398
        %v1400 = vpop.permute.xlu0 %1399
        %s1402 = sor.u32 256, 72
        %1403 = vbcast.lane.b32.xlu0 %v1365, %s1402
        %v1404 = vpop.permute.xlu0 %1403
        %s1406 = sor.u32 256, 80
        %1407 = vbcast.lane.b32.xlu0 %v1365, %s1406
        %v1408 = vpop.permute.xlu0 %1407
        %s1410 = sor.u32 256, 88
        %1411 = vbcast.lane.b32.xlu0 %v1365, %s1410
        %v1412 = vpop.permute.xlu0 %1411
        %s1414 = sor.u32 256, 96
        %1415 = vbcast.lane.b32.xlu0 %v1365, %s1414
        %v1416 = vpop.permute.xlu0 %1415
        %s1418 = sor.u32 256, 104
        %1419 = vbcast.lane.b32.xlu0 %v1365, %s1418
        %v1420 = vpop.permute.xlu0 %1419
        %s1422 = sor.u32 256, 112
        %1423 = vbcast.lane.b32.xlu0 %v1365, %s1422
        %v1424 = vpop.permute.xlu0 %1423
        %s1426 = sor.u32 256, 120
        %1427 = vbcast.lane.b32.xlu0 %v1365, %s1426
        %v1428 = vpop.permute.xlu0 %1427
        %v1429 = vlaneseq
        %v1430 = vshrl.u32 %v1429, 7
        %v1431 = vsub.s32 1, %v1430
        %v1432 = vrot.slane %v288, %v1431
        %1434 = vbcast.lane.b32.xlu0 %v1432, 256
        %v1435 = vpop.permute.xlu0 %1434
        %s1437 = sor.u32 256, 8
        %1438 = vbcast.lane.b32.xlu0 %v1432, %s1437
        %v1439 = vpop.permute.xlu0 %1438
        %s1441 = sor.u32 256, 16
        %1442 = vbcast.lane.b32.xlu0 %v1432, %s1441
        %v1443 = vpop.permute.xlu0 %1442
        %s1445 = sor.u32 256, 24
        %1446 = vbcast.lane.b32.xlu0 %v1432, %s1445
        %v1447 = vpop.permute.xlu0 %1446
        %s1449 = sor.u32 256, 32
        %1450 = vbcast.lane.b32.xlu0 %v1432, %s1449
        %v1451 = vpop.permute.xlu0 %1450
        %s1453 = sor.u32 256, 40
        %1454 = vbcast.lane.b32.xlu0 %v1432, %s1453
        %v1455 = vpop.permute.xlu0 %1454
        %s1457 = sor.u32 256, 48
        %1458 = vbcast.lane.b32.xlu0 %v1432, %s1457
        %v1459 = vpop.permute.xlu0 %1458
        %s1461 = sor.u32 256, 56
        %1462 = vbcast.lane.b32.xlu0 %v1432, %s1461
        %v1463 = vpop.permute.xlu0 %1462
        %s1465 = sor.u32 256, 64
        %1466 = vbcast.lane.b32.xlu0 %v1432, %s1465
        %v1467 = vpop.permute.xlu0 %1466
        %s1469 = sor.u32 256, 72
        %1470 = vbcast.lane.b32.xlu0 %v1432, %s1469
        %v1471 = vpop.permute.xlu0 %1470
        %s1473 = sor.u32 256, 80
        %1474 = vbcast.lane.b32.xlu0 %v1432, %s1473
        %v1475 = vpop.permute.xlu0 %1474
        %s1477 = sor.u32 256, 88
        %1478 = vbcast.lane.b32.xlu0 %v1432, %s1477
        %v1479 = vpop.permute.xlu0 %1478
        %s1481 = sor.u32 256, 96
        %1482 = vbcast.lane.b32.xlu0 %v1432, %s1481
        %v1483 = vpop.permute.xlu0 %1482
        %s1485 = sor.u32 256, 104
        %1486 = vbcast.lane.b32.xlu0 %v1432, %s1485
        %v1487 = vpop.permute.xlu0 %1486
        %s1489 = sor.u32 256, 112
        %1490 = vbcast.lane.b32.xlu0 %v1432, %s1489
        %v1491 = vpop.permute.xlu0 %1490
        %s1493 = sor.u32 256, 120
        %1494 = vbcast.lane.b32.xlu0 %v1432, %s1493
        %v1495 = vpop.permute.xlu0 %1494
        %v1496 = vlaneseq
        %v1497 = vshrl.u32 %v1496, 7
        %v1498 = vsub.s32 2, %v1497
        %v1499 = vrot.slane %v288, %v1498
        %1501 = vbcast.lane.b32.xlu0 %v1499, 256
        %v1502 = vpop.permute.xlu0 %1501
        %s1504 = sor.u32 256, 8
        %1505 = vbcast.lane.b32.xlu0 %v1499, %s1504
        %v1506 = vpop.permute.xlu0 %1505
        %s1508 = sor.u32 256, 16
        %1509 = vbcast.lane.b32.xlu0 %v1499, %s1508
        %v1510 = vpop.permute.xlu0 %1509
        %s1512 = sor.u32 256, 24
        %1513 = vbcast.lane.b32.xlu0 %v1499, %s1512
        %v1514 = vpop.permute.xlu0 %1513
        %s1516 = sor.u32 256, 32
        %1517 = vbcast.lane.b32.xlu0 %v1499, %s1516
        %v1518 = vpop.permute.xlu0 %1517
        %s1520 = sor.u32 256, 40
        %1521 = vbcast.lane.b32.xlu0 %v1499, %s1520
        %v1522 = vpop.permute.xlu0 %1521
        %s1524 = sor.u32 256, 48
        %1525 = vbcast.lane.b32.xlu0 %v1499, %s1524
        %v1526 = vpop.permute.xlu0 %1525
        %s1528 = sor.u32 256, 56
        %1529 = vbcast.lane.b32.xlu0 %v1499, %s1528
        %v1530 = vpop.permute.xlu0 %1529
        %s1532 = sor.u32 256, 64
        %1533 = vbcast.lane.b32.xlu0 %v1499, %s1532
        %v1534 = vpop.permute.xlu0 %1533
        %s1536 = sor.u32 256, 72
        %1537 = vbcast.lane.b32.xlu0 %v1499, %s1536
        %v1538 = vpop.permute.xlu0 %1537
        %s1540 = sor.u32 256, 80
        %1541 = vbcast.lane.b32.xlu0 %v1499, %s1540
        %v1542 = vpop.permute.xlu0 %1541
        %s1544 = sor.u32 256, 88
        %1545 = vbcast.lane.b32.xlu0 %v1499, %s1544
        %v1546 = vpop.permute.xlu0 %1545
        %s1548 = sor.u32 256, 96
        %1549 = vbcast.lane.b32.xlu0 %v1499, %s1548
        %v1550 = vpop.permute.xlu0 %1549
        %s1552 = sor.u32 256, 104
        %1553 = vbcast.lane.b32.xlu0 %v1499, %s1552
        %v1554 = vpop.permute.xlu0 %1553
        %s1556 = sor.u32 256, 112
        %1557 = vbcast.lane.b32.xlu0 %v1499, %s1556
        %v1558 = vpop.permute.xlu0 %1557
        %s1560 = sor.u32 256, 120
        %1561 = vbcast.lane.b32.xlu0 %v1499, %s1560
        %v1562 = vpop.permute.xlu0 %1561
        %v1563 = vlaneseq
        %v1564 = vshrl.u32 %v1563, 7
        %v1565 = vsub.s32 3, %v1564
        %v1566 = vrot.slane %v288, %v1565
        %1568 = vbcast.lane.b32.xlu0 %v1566, 256
        %v1569 = vpop.permute.xlu0 %1568
        %s1571 = sor.u32 256, 8
        %1572 = vbcast.lane.b32.xlu0 %v1566, %s1571
        %v1573 = vpop.permute.xlu0 %1572
        %s1575 = sor.u32 256, 16
        %1576 = vbcast.lane.b32.xlu0 %v1566, %s1575
        %v1577 = vpop.permute.xlu0 %1576
        %s1579 = sor.u32 256, 24
        %1580 = vbcast.lane.b32.xlu0 %v1566, %s1579
        %v1581 = vpop.permute.xlu0 %1580
        %s1583 = sor.u32 256, 32
        %1584 = vbcast.lane.b32.xlu0 %v1566, %s1583
        %v1585 = vpop.permute.xlu0 %1584
        %s1587 = sor.u32 256, 40
        %1588 = vbcast.lane.b32.xlu0 %v1566, %s1587
        %v1589 = vpop.permute.xlu0 %1588
        %s1591 = sor.u32 256, 48
        %1592 = vbcast.lane.b32.xlu0 %v1566, %s1591
        %v1593 = vpop.permute.xlu0 %1592
        %s1595 = sor.u32 256, 56
        %1596 = vbcast.lane.b32.xlu0 %v1566, %s1595
        %v1597 = vpop.permute.xlu0 %1596
        %s1599 = sor.u32 256, 64
        %1600 = vbcast.lane.b32.xlu0 %v1566, %s1599
        %v1601 = vpop.permute.xlu0 %1600
        %s1603 = sor.u32 256, 72
        %1604 = vbcast.lane.b32.xlu0 %v1566, %s1603
        %v1605 = vpop.permute.xlu0 %1604
        %s1607 = sor.u32 256, 80
        %1608 = vbcast.lane.b32.xlu0 %v1566, %s1607
        %v1609 = vpop.permute.xlu0 %1608
        %s1611 = sor.u32 256, 88
        %1612 = vbcast.lane.b32.xlu0 %v1566, %s1611
        %v1613 = vpop.permute.xlu0 %1612
        %s1615 = sor.u32 256, 96
        %1616 = vbcast.lane.b32.xlu0 %v1566, %s1615
        %v1617 = vpop.permute.xlu0 %1616
        %s1619 = sor.u32 256, 104
        %1620 = vbcast.lane.b32.xlu0 %v1566, %s1619
        %v1621 = vpop.permute.xlu0 %1620
        %s1623 = sor.u32 256, 112
        %1624 = vbcast.lane.b32.xlu0 %v1566, %s1623
        %v1625 = vpop.permute.xlu0 %1624
        %s1627 = sor.u32 256, 120
        %1628 = vbcast.lane.b32.xlu0 %v1566, %s1627
        %v1629 = vpop.permute.xlu0 %1628
        %v1630 = vlaneseq
        %v1631 = vshrl.u32 %v1630, 7
        %v1632 = vsub.s32 4, %v1631
        %v1633 = vrot.slane %v288, %v1632
        %1635 = vbcast.lane.b32.xlu0 %v1633, 256
        %v1636 = vpop.permute.xlu0 %1635
        %s1638 = sor.u32 256, 8
        %1639 = vbcast.lane.b32.xlu0 %v1633, %s1638
        %v1640 = vpop.permute.xlu0 %1639
        %s1642 = sor.u32 256, 16
        %1643 = vbcast.lane.b32.xlu0 %v1633, %s1642
        %v1644 = vpop.permute.xlu0 %1643
        %s1646 = sor.u32 256, 24
        %1647 = vbcast.lane.b32.xlu0 %v1633, %s1646
        %v1648 = vpop.permute.xlu0 %1647
        %s1650 = sor.u32 256, 32
        %1651 = vbcast.lane.b32.xlu0 %v1633, %s1650
        %v1652 = vpop.permute.xlu0 %1651
        %s1654 = sor.u32 256, 40
        %1655 = vbcast.lane.b32.xlu0 %v1633, %s1654
        %v1656 = vpop.permute.xlu0 %1655
        %s1658 = sor.u32 256, 48
        %1659 = vbcast.lane.b32.xlu0 %v1633, %s1658
        %v1660 = vpop.permute.xlu0 %1659
        %s1662 = sor.u32 256, 56
        %1663 = vbcast.lane.b32.xlu0 %v1633, %s1662
        %v1664 = vpop.permute.xlu0 %1663
        %s1666 = sor.u32 256, 64
        %1667 = vbcast.lane.b32.xlu0 %v1633, %s1666
        %v1668 = vpop.permute.xlu0 %1667
        %s1670 = sor.u32 256, 72
        %1671 = vbcast.lane.b32.xlu0 %v1633, %s1670
        %v1672 = vpop.permute.xlu0 %1671
        %s1674 = sor.u32 256, 80
        %1675 = vbcast.lane.b32.xlu0 %v1633, %s1674
        %v1676 = vpop.permute.xlu0 %1675
        %s1678 = sor.u32 256, 88
        %1679 = vbcast.lane.b32.xlu0 %v1633, %s1678
        %v1680 = vpop.permute.xlu0 %1679
        %s1682 = sor.u32 256, 96
        %1683 = vbcast.lane.b32.xlu0 %v1633, %s1682
        %v1684 = vpop.permute.xlu0 %1683
        %s1686 = sor.u32 256, 104
        %1687 = vbcast.lane.b32.xlu0 %v1633, %s1686
        %v1688 = vpop.permute.xlu0 %1687
        %s1690 = sor.u32 256, 112
        %1691 = vbcast.lane.b32.xlu0 %v1633, %s1690
        %v1692 = vpop.permute.xlu0 %1691
        %s1694 = sor.u32 256, 120
        %1695 = vbcast.lane.b32.xlu0 %v1633, %s1694
        %v1696 = vpop.permute.xlu0 %1695
        %v1697 = vlaneseq
        %v1698 = vshrl.u32 %v1697, 7
        %v1699 = vsub.s32 5, %v1698
        %v1700 = vrot.slane %v288, %v1699
        %1702 = vbcast.lane.b32.xlu0 %v1700, 256
        %v1703 = vpop.permute.xlu0 %1702
        %s1705 = sor.u32 256, 8
        %1706 = vbcast.lane.b32.xlu0 %v1700, %s1705
        %v1707 = vpop.permute.xlu0 %1706
        %s1709 = sor.u32 256, 16
        %1710 = vbcast.lane.b32.xlu0 %v1700, %s1709
        %v1711 = vpop.permute.xlu0 %1710
        %s1713 = sor.u32 256, 24
        %1714 = vbcast.lane.b32.xlu0 %v1700, %s1713
        %v1715 = vpop.permute.xlu0 %1714
        %s1717 = sor.u32 256, 32
        %1718 = vbcast.lane.b32.xlu0 %v1700, %s1717
        %v1719 = vpop.permute.xlu0 %1718
        %s1721 = sor.u32 256, 40
        %1722 = vbcast.lane.b32.xlu0 %v1700, %s1721
        %v1723 = vpop.permute.xlu0 %1722
        %s1725 = sor.u32 256, 48
        %1726 = vbcast.lane.b32.xlu0 %v1700, %s1725
        %v1727 = vpop.permute.xlu0 %1726
        %s1729 = sor.u32 256, 56
        %1730 = vbcast.lane.b32.xlu0 %v1700, %s1729
        %v1731 = vpop.permute.xlu0 %1730
        %s1733 = sor.u32 256, 64
        %1734 = vbcast.lane.b32.xlu0 %v1700, %s1733
        %v1735 = vpop.permute.xlu0 %1734
        %s1737 = sor.u32 256, 72
        %1738 = vbcast.lane.b32.xlu0 %v1700, %s1737
        %v1739 = vpop.permute.xlu0 %1738
        %s1741 = sor.u32 256, 80
        %1742 = vbcast.lane.b32.xlu0 %v1700, %s1741
        %v1743 = vpop.permute.xlu0 %1742
        %s1745 = sor.u32 256, 88
        %1746 = vbcast.lane.b32.xlu0 %v1700, %s1745
        %v1747 = vpop.permute.xlu0 %1746
        %s1749 = sor.u32 256, 96
        %1750 = vbcast.lane.b32.xlu0 %v1700, %s1749
        %v1751 = vpop.permute.xlu0 %1750
        %s1753 = sor.u32 256, 104
        %1754 = vbcast.lane.b32.xlu0 %v1700, %s1753
        %v1755 = vpop.permute.xlu0 %1754
        %s1757 = sor.u32 256, 112
        %1758 = vbcast.lane.b32.xlu0 %v1700, %s1757
        %v1759 = vpop.permute.xlu0 %1758
        %s1761 = sor.u32 256, 120
        %1762 = vbcast.lane.b32.xlu0 %v1700, %s1761
        %v1763 = vpop.permute.xlu0 %1762
        %v1764 = vlaneseq
        %v1765 = vshrl.u32 %v1764, 7
        %v1766 = vsub.s32 6, %v1765
        %v1767 = vrot.slane %v288, %v1766
        %1769 = vbcast.lane.b32.xlu0 %v1767, 256
        %v1770 = vpop.permute.xlu0 %1769
        %s1772 = sor.u32 256, 8
        %1773 = vbcast.lane.b32.xlu0 %v1767, %s1772
        %v1774 = vpop.permute.xlu0 %1773
        %s1776 = sor.u32 256, 16
        %1777 = vbcast.lane.b32.xlu0 %v1767, %s1776
        %v1778 = vpop.permute.xlu0 %1777
        %s1780 = sor.u32 256, 24
        %1781 = vbcast.lane.b32.xlu0 %v1767, %s1780
        %v1782 = vpop.permute.xlu0 %1781
        %s1784 = sor.u32 256, 32
        %1785 = vbcast.lane.b32.xlu0 %v1767, %s1784
        %v1786 = vpop.permute.xlu0 %1785
        %s1788 = sor.u32 256, 40
        %1789 = vbcast.lane.b32.xlu0 %v1767, %s1788
        %v1790 = vpop.permute.xlu0 %1789
        %s1792 = sor.u32 256, 48
        %1793 = vbcast.lane.b32.xlu0 %v1767, %s1792
        %v1794 = vpop.permute.xlu0 %1793
        %s1796 = sor.u32 256, 56
        %1797 = vbcast.lane.b32.xlu0 %v1767, %s1796
        %v1798 = vpop.permute.xlu0 %1797
        %s1800 = sor.u32 256, 64
        %1801 = vbcast.lane.b32.xlu0 %v1767, %s1800
        %v1802 = vpop.permute.xlu0 %1801
        %s1804 = sor.u32 256, 72
        %1805 = vbcast.lane.b32.xlu0 %v1767, %s1804
        %v1806 = vpop.permute.xlu0 %1805
        %s1808 = sor.u32 256, 80
        %1809 = vbcast.lane.b32.xlu0 %v1767, %s1808
        %v1810 = vpop.permute.xlu0 %1809
        %s1812 = sor.u32 256, 88
        %1813 = vbcast.lane.b32.xlu0 %v1767, %s1812
        %v1814 = vpop.permute.xlu0 %1813
        %s1816 = sor.u32 256, 96
        %1817 = vbcast.lane.b32.xlu0 %v1767, %s1816
        %v1818 = vpop.permute.xlu0 %1817
        %s1820 = sor.u32 256, 104
        %1821 = vbcast.lane.b32.xlu0 %v1767, %s1820
        %v1822 = vpop.permute.xlu0 %1821
        %s1824 = sor.u32 256, 112
        %1825 = vbcast.lane.b32.xlu0 %v1767, %s1824
        %v1826 = vpop.permute.xlu0 %1825
        %s1828 = sor.u32 256, 120
        %1829 = vbcast.lane.b32.xlu0 %v1767, %s1828
        %v1830 = vpop.permute.xlu0 %1829
        %v1831 = vlaneseq
        %v1832 = vshrl.u32 %v1831, 7
        %v1833 = vsub.s32 7, %v1832
        %v1834 = vrot.slane %v288, %v1833
        %1836 = vbcast.lane.b32.xlu0 %v1834, 256
        %v1837 = vpop.permute.xlu0 %1836
        %s1839 = sor.u32 256, 8
        %1840 = vbcast.lane.b32.xlu0 %v1834, %s1839
        %v1841 = vpop.permute.xlu0 %1840
        %s1843 = sor.u32 256, 16
        %1844 = vbcast.lane.b32.xlu0 %v1834, %s1843
        %v1845 = vpop.permute.xlu0 %1844
        %s1847 = sor.u32 256, 24
        %1848 = vbcast.lane.b32.xlu0 %v1834, %s1847
        %v1849 = vpop.permute.xlu0 %1848
        %s1851 = sor.u32 256, 32
        %1852 = vbcast.lane.b32.xlu0 %v1834, %s1851
        %v1853 = vpop.permute.xlu0 %1852
        %s1855 = sor.u32 256, 40
        %1856 = vbcast.lane.b32.xlu0 %v1834, %s1855
        %v1857 = vpop.permute.xlu0 %1856
        %s1859 = sor.u32 256, 48
        %1860 = vbcast.lane.b32.xlu0 %v1834, %s1859
        %v1861 = vpop.permute.xlu0 %1860
        %s1863 = sor.u32 256, 56
        %1864 = vbcast.lane.b32.xlu0 %v1834, %s1863
        %v1865 = vpop.permute.xlu0 %1864
        %s1867 = sor.u32 256, 64
        %1868 = vbcast.lane.b32.xlu0 %v1834, %s1867
        %v1869 = vpop.permute.xlu0 %1868
        %s1871 = sor.u32 256, 72
        %1872 = vbcast.lane.b32.xlu0 %v1834, %s1871
        %v1873 = vpop.permute.xlu0 %1872
        %s1875 = sor.u32 256, 80
        %1876 = vbcast.lane.b32.xlu0 %v1834, %s1875
        %v1877 = vpop.permute.xlu0 %1876
        %s1879 = sor.u32 256, 88
        %1880 = vbcast.lane.b32.xlu0 %v1834, %s1879
        %v1881 = vpop.permute.xlu0 %1880
        %s1883 = sor.u32 256, 96
        %1884 = vbcast.lane.b32.xlu0 %v1834, %s1883
        %v1885 = vpop.permute.xlu0 %1884
        %s1887 = sor.u32 256, 104
        %1888 = vbcast.lane.b32.xlu0 %v1834, %s1887
        %v1889 = vpop.permute.xlu0 %1888
        %s1891 = sor.u32 256, 112
        %1892 = vbcast.lane.b32.xlu0 %v1834, %s1891
        %v1893 = vpop.permute.xlu0 %1892
        %s1895 = sor.u32 256, 120
        %1896 = vbcast.lane.b32.xlu0 %v1834, %s1895
        %v1897 = vpop.permute.xlu0 %1896
        %v1898 = vlaneseq
        %v1899 = vshrl.u32 %v1898, 7
        %v1900 = vsub.s32 0, %v1899
        %v1901 = vrot.slane %v289, %v1900
        %1903 = vbcast.lane.b32.xlu0 %v1901, 256
        %v1904 = vpop.permute.xlu0 %1903
        %s1906 = sor.u32 256, 8
        %1907 = vbcast.lane.b32.xlu0 %v1901, %s1906
        %v1908 = vpop.permute.xlu0 %1907
        %s1910 = sor.u32 256, 16
        %1911 = vbcast.lane.b32.xlu0 %v1901, %s1910
        %v1912 = vpop.permute.xlu0 %1911
        %s1914 = sor.u32 256, 24
        %1915 = vbcast.lane.b32.xlu0 %v1901, %s1914
        %v1916 = vpop.permute.xlu0 %1915
        %s1918 = sor.u32 256, 32
        %1919 = vbcast.lane.b32.xlu0 %v1901, %s1918
        %v1920 = vpop.permute.xlu0 %1919
        %s1922 = sor.u32 256, 40
        %1923 = vbcast.lane.b32.xlu0 %v1901, %s1922
        %v1924 = vpop.permute.xlu0 %1923
        %s1926 = sor.u32 256, 48
        %1927 = vbcast.lane.b32.xlu0 %v1901, %s1926
        %v1928 = vpop.permute.xlu0 %1927
        %s1930 = sor.u32 256, 56
        %1931 = vbcast.lane.b32.xlu0 %v1901, %s1930
        %v1932 = vpop.permute.xlu0 %1931
        %s1934 = sor.u32 256, 64
        %1935 = vbcast.lane.b32.xlu0 %v1901, %s1934
        %v1936 = vpop.permute.xlu0 %1935
        %s1938 = sor.u32 256, 72
        %1939 = vbcast.lane.b32.xlu0 %v1901, %s1938
        %v1940 = vpop.permute.xlu0 %1939
        %s1942 = sor.u32 256, 80
        %1943 = vbcast.lane.b32.xlu0 %v1901, %s1942
        %v1944 = vpop.permute.xlu0 %1943
        %s1946 = sor.u32 256, 88
        %1947 = vbcast.lane.b32.xlu0 %v1901, %s1946
        %v1948 = vpop.permute.xlu0 %1947
        %s1950 = sor.u32 256, 96
        %1951 = vbcast.lane.b32.xlu0 %v1901, %s1950
        %v1952 = vpop.permute.xlu0 %1951
        %s1954 = sor.u32 256, 104
        %1955 = vbcast.lane.b32.xlu0 %v1901, %s1954
        %v1956 = vpop.permute.xlu0 %1955
        %s1958 = sor.u32 256, 112
        %1959 = vbcast.lane.b32.xlu0 %v1901, %s1958
        %v1960 = vpop.permute.xlu0 %1959
        %s1962 = sor.u32 256, 120
        %1963 = vbcast.lane.b32.xlu0 %v1901, %s1962
        %v1964 = vpop.permute.xlu0 %1963
        %v1965 = vlaneseq
        %v1966 = vshrl.u32 %v1965, 7
        %v1967 = vsub.s32 1, %v1966
        %v1968 = vrot.slane %v289, %v1967
        %1970 = vbcast.lane.b32.xlu0 %v1968, 256
        %v1971 = vpop.permute.xlu0 %1970
        %s1973 = sor.u32 256, 8
        %1974 = vbcast.lane.b32.xlu0 %v1968, %s1973
        %v1975 = vpop.permute.xlu0 %1974
        %s1977 = sor.u32 256, 16
        %1978 = vbcast.lane.b32.xlu0 %v1968, %s1977
        %v1979 = vpop.permute.xlu0 %1978
        %s1981 = sor.u32 256, 24
        %1982 = vbcast.lane.b32.xlu0 %v1968, %s1981
        %v1983 = vpop.permute.xlu0 %1982
        %s1985 = sor.u32 256, 32
        %1986 = vbcast.lane.b32.xlu0 %v1968, %s1985
        %v1987 = vpop.permute.xlu0 %1986
        %s1989 = sor.u32 256, 40
        %1990 = vbcast.lane.b32.xlu0 %v1968, %s1989
        %v1991 = vpop.permute.xlu0 %1990
        %s1993 = sor.u32 256, 48
        %1994 = vbcast.lane.b32.xlu0 %v1968, %s1993
        %v1995 = vpop.permute.xlu0 %1994
        %s1997 = sor.u32 256, 56
        %1998 = vbcast.lane.b32.xlu0 %v1968, %s1997
        %v1999 = vpop.permute.xlu0 %1998
        %s2001 = sor.u32 256, 64
        %2002 = vbcast.lane.b32.xlu0 %v1968, %s2001
        %v2003 = vpop.permute.xlu0 %2002
        %s2005 = sor.u32 256, 72
        %2006 = vbcast.lane.b32.xlu0 %v1968, %s2005
        %v2007 = vpop.permute.xlu0 %2006
        %s2009 = sor.u32 256, 80
        %2010 = vbcast.lane.b32.xlu0 %v1968, %s2009
        %v2011 = vpop.permute.xlu0 %2010
        %s2013 = sor.u32 256, 88
        %2014 = vbcast.lane.b32.xlu0 %v1968, %s2013
        %v2015 = vpop.permute.xlu0 %2014
        %s2017 = sor.u32 256, 96
        %2018 = vbcast.lane.b32.xlu0 %v1968, %s2017
        %v2019 = vpop.permute.xlu0 %2018
        %s2021 = sor.u32 256, 104
        %2022 = vbcast.lane.b32.xlu0 %v1968, %s2021
        %v2023 = vpop.permute.xlu0 %2022
        %s2025 = sor.u32 256, 112
        %2026 = vbcast.lane.b32.xlu0 %v1968, %s2025
        %v2027 = vpop.permute.xlu0 %2026
        %s2029 = sor.u32 256, 120
        %2030 = vbcast.lane.b32.xlu0 %v1968, %s2029
        %v2031 = vpop.permute.xlu0 %2030
        %v2032 = vlaneseq
        %v2033 = vshrl.u32 %v2032, 7
        %v2034 = vsub.s32 2, %v2033
        %v2035 = vrot.slane %v289, %v2034
        %2037 = vbcast.lane.b32.xlu0 %v2035, 256
        %v2038 = vpop.permute.xlu0 %2037
        %s2040 = sor.u32 256, 8
        %2041 = vbcast.lane.b32.xlu0 %v2035, %s2040
        %v2042 = vpop.permute.xlu0 %2041
        %s2044 = sor.u32 256, 16
        %2045 = vbcast.lane.b32.xlu0 %v2035, %s2044
        %v2046 = vpop.permute.xlu0 %2045
        %s2048 = sor.u32 256, 24
        %2049 = vbcast.lane.b32.xlu0 %v2035, %s2048
        %v2050 = vpop.permute.xlu0 %2049
        %s2052 = sor.u32 256, 32
        %2053 = vbcast.lane.b32.xlu0 %v2035, %s2052
        %v2054 = vpop.permute.xlu0 %2053
        %s2056 = sor.u32 256, 40
        %2057 = vbcast.lane.b32.xlu0 %v2035, %s2056
        %v2058 = vpop.permute.xlu0 %2057
        %s2060 = sor.u32 256, 48
        %2061 = vbcast.lane.b32.xlu0 %v2035, %s2060
        %v2062 = vpop.permute.xlu0 %2061
        %s2064 = sor.u32 256, 56
        %2065 = vbcast.lane.b32.xlu0 %v2035, %s2064
        %v2066 = vpop.permute.xlu0 %2065
        %s2068 = sor.u32 256, 64
        %2069 = vbcast.lane.b32.xlu0 %v2035, %s2068
        %v2070 = vpop.permute.xlu0 %2069
        %s2072 = sor.u32 256, 72
        %2073 = vbcast.lane.b32.xlu0 %v2035, %s2072
        %v2074 = vpop.permute.xlu0 %2073
        %s2076 = sor.u32 256, 80
        %2077 = vbcast.lane.b32.xlu0 %v2035, %s2076
        %v2078 = vpop.permute.xlu0 %2077
        %s2080 = sor.u32 256, 88
        %2081 = vbcast.lane.b32.xlu0 %v2035, %s2080
        %v2082 = vpop.permute.xlu0 %2081
        %s2084 = sor.u32 256, 96
        %2085 = vbcast.lane.b32.xlu0 %v2035, %s2084
        %v2086 = vpop.permute.xlu0 %2085
        %s2088 = sor.u32 256, 104
        %2089 = vbcast.lane.b32.xlu0 %v2035, %s2088
        %v2090 = vpop.permute.xlu0 %2089
        %s2092 = sor.u32 256, 112
        %2093 = vbcast.lane.b32.xlu0 %v2035, %s2092
        %v2094 = vpop.permute.xlu0 %2093
        %s2096 = sor.u32 256, 120
        %2097 = vbcast.lane.b32.xlu0 %v2035, %s2096
        %v2098 = vpop.permute.xlu0 %2097
        %v2099 = vlaneseq
        %v2100 = vshrl.u32 %v2099, 7
        %v2101 = vsub.s32 3, %v2100
        %v2102 = vrot.slane %v289, %v2101
        %2104 = vbcast.lane.b32.xlu0 %v2102, 256
        %v2105 = vpop.permute.xlu0 %2104
        %s2107 = sor.u32 256, 8
        %2108 = vbcast.lane.b32.xlu0 %v2102, %s2107
        %v2109 = vpop.permute.xlu0 %2108
        %s2111 = sor.u32 256, 16
        %2112 = vbcast.lane.b32.xlu0 %v2102, %s2111
        %v2113 = vpop.permute.xlu0 %2112
        %s2115 = sor.u32 256, 24
        %2116 = vbcast.lane.b32.xlu0 %v2102, %s2115
        %v2117 = vpop.permute.xlu0 %2116
        %s2119 = sor.u32 256, 32
        %2120 = vbcast.lane.b32.xlu0 %v2102, %s2119
        %v2121 = vpop.permute.xlu0 %2120
        %s2123 = sor.u32 256, 40
        %2124 = vbcast.lane.b32.xlu0 %v2102, %s2123
        %v2125 = vpop.permute.xlu0 %2124
        %s2127 = sor.u32 256, 48
        %2128 = vbcast.lane.b32.xlu0 %v2102, %s2127
        %v2129 = vpop.permute.xlu0 %2128
        %s2131 = sor.u32 256, 56
        %2132 = vbcast.lane.b32.xlu0 %v2102, %s2131
        %v2133 = vpop.permute.xlu0 %2132
        %s2135 = sor.u32 256, 64
        %2136 = vbcast.lane.b32.xlu0 %v2102, %s2135
        %v2137 = vpop.permute.xlu0 %2136
        %s2139 = sor.u32 256, 72
        %2140 = vbcast.lane.b32.xlu0 %v2102, %s2139
        %v2141 = vpop.permute.xlu0 %2140
        %s2143 = sor.u32 256, 80
        %2144 = vbcast.lane.b32.xlu0 %v2102, %s2143
        %v2145 = vpop.permute.xlu0 %2144
        %s2147 = sor.u32 256, 88
        %2148 = vbcast.lane.b32.xlu0 %v2102, %s2147
        %v2149 = vpop.permute.xlu0 %2148
        %s2151 = sor.u32 256, 96
        %2152 = vbcast.lane.b32.xlu0 %v2102, %s2151
        %v2153 = vpop.permute.xlu0 %2152
        %s2155 = sor.u32 256, 104
        %2156 = vbcast.lane.b32.xlu0 %v2102, %s2155
        %v2157 = vpop.permute.xlu0 %2156
        %s2159 = sor.u32 256, 112
        %2160 = vbcast.lane.b32.xlu0 %v2102, %s2159
        %v2161 = vpop.permute.xlu0 %2160
        %s2163 = sor.u32 256, 120
        %2164 = vbcast.lane.b32.xlu0 %v2102, %s2163
        %v2165 = vpop.permute.xlu0 %2164
        %v2166 = vlaneseq
        %v2167 = vshrl.u32 %v2166, 7
        %v2168 = vsub.s32 4, %v2167
        %v2169 = vrot.slane %v289, %v2168
        %2171 = vbcast.lane.b32.xlu0 %v2169, 256
        %v2172 = vpop.permute.xlu0 %2171
        %s2174 = sor.u32 256, 8
        %2175 = vbcast.lane.b32.xlu0 %v2169, %s2174
        %v2176 = vpop.permute.xlu0 %2175
        %s2178 = sor.u32 256, 16
        %2179 = vbcast.lane.b32.xlu0 %v2169, %s2178
        %v2180 = vpop.permute.xlu0 %2179
        %s2182 = sor.u32 256, 24
        %2183 = vbcast.lane.b32.xlu0 %v2169, %s2182
        %v2184 = vpop.permute.xlu0 %2183
        %s2186 = sor.u32 256, 32
        %2187 = vbcast.lane.b32.xlu0 %v2169, %s2186
        %v2188 = vpop.permute.xlu0 %2187
        %s2190 = sor.u32 256, 40
        %2191 = vbcast.lane.b32.xlu0 %v2169, %s2190
        %v2192 = vpop.permute.xlu0 %2191
        %s2194 = sor.u32 256, 48
        %2195 = vbcast.lane.b32.xlu0 %v2169, %s2194
        %v2196 = vpop.permute.xlu0 %2195
        %s2198 = sor.u32 256, 56
        %2199 = vbcast.lane.b32.xlu0 %v2169, %s2198
        %v2200 = vpop.permute.xlu0 %2199
        %s2202 = sor.u32 256, 64
        %2203 = vbcast.lane.b32.xlu0 %v2169, %s2202
        %v2204 = vpop.permute.xlu0 %2203
        %s2206 = sor.u32 256, 72
        %2207 = vbcast.lane.b32.xlu0 %v2169, %s2206
        %v2208 = vpop.permute.xlu0 %2207
        %s2210 = sor.u32 256, 80
        %2211 = vbcast.lane.b32.xlu0 %v2169, %s2210
        %v2212 = vpop.permute.xlu0 %2211
        %s2214 = sor.u32 256, 88
        %2215 = vbcast.lane.b32.xlu0 %v2169, %s2214
        %v2216 = vpop.permute.xlu0 %2215
        %s2218 = sor.u32 256, 96
        %2219 = vbcast.lane.b32.xlu0 %v2169, %s2218
        %v2220 = vpop.permute.xlu0 %2219
        %s2222 = sor.u32 256, 104
        %2223 = vbcast.lane.b32.xlu0 %v2169, %s2222
        %v2224 = vpop.permute.xlu0 %2223
        %s2226 = sor.u32 256, 112
        %2227 = vbcast.lane.b32.xlu0 %v2169, %s2226
        %v2228 = vpop.permute.xlu0 %2227
        %s2230 = sor.u32 256, 120
        %2231 = vbcast.lane.b32.xlu0 %v2169, %s2230
        %v2232 = vpop.permute.xlu0 %2231
        %v2233 = vlaneseq
        %v2234 = vshrl.u32 %v2233, 7
        %v2235 = vsub.s32 5, %v2234
        %v2236 = vrot.slane %v289, %v2235
        %2238 = vbcast.lane.b32.xlu0 %v2236, 256
        %v2239 = vpop.permute.xlu0 %2238
        %s2241 = sor.u32 256, 8
        %2242 = vbcast.lane.b32.xlu0 %v2236, %s2241
        %v2243 = vpop.permute.xlu0 %2242
        %s2245 = sor.u32 256, 16
        %2246 = vbcast.lane.b32.xlu0 %v2236, %s2245
        %v2247 = vpop.permute.xlu0 %2246
        %s2249 = sor.u32 256, 24
        %2250 = vbcast.lane.b32.xlu0 %v2236, %s2249
        %v2251 = vpop.permute.xlu0 %2250
        %s2253 = sor.u32 256, 32
        %2254 = vbcast.lane.b32.xlu0 %v2236, %s2253
        %v2255 = vpop.permute.xlu0 %2254
        %s2257 = sor.u32 256, 40
        %2258 = vbcast.lane.b32.xlu0 %v2236, %s2257
        %v2259 = vpop.permute.xlu0 %2258
        %s2261 = sor.u32 256, 48
        %2262 = vbcast.lane.b32.xlu0 %v2236, %s2261
        %v2263 = vpop.permute.xlu0 %2262
        %s2265 = sor.u32 256, 56
        %2266 = vbcast.lane.b32.xlu0 %v2236, %s2265
        %v2267 = vpop.permute.xlu0 %2266
        %s2269 = sor.u32 256, 64
        %2270 = vbcast.lane.b32.xlu0 %v2236, %s2269
        %v2271 = vpop.permute.xlu0 %2270
        %s2273 = sor.u32 256, 72
        %2274 = vbcast.lane.b32.xlu0 %v2236, %s2273
        %v2275 = vpop.permute.xlu0 %2274
        %s2277 = sor.u32 256, 80
        %2278 = vbcast.lane.b32.xlu0 %v2236, %s2277
        %v2279 = vpop.permute.xlu0 %2278
        %s2281 = sor.u32 256, 88
        %2282 = vbcast.lane.b32.xlu0 %v2236, %s2281
        %v2283 = vpop.permute.xlu0 %2282
        %s2285 = sor.u32 256, 96
        %2286 = vbcast.lane.b32.xlu0 %v2236, %s2285
        %v2287 = vpop.permute.xlu0 %2286
        %s2289 = sor.u32 256, 104
        %2290 = vbcast.lane.b32.xlu0 %v2236, %s2289
        %v2291 = vpop.permute.xlu0 %2290
        %s2293 = sor.u32 256, 112
        %2294 = vbcast.lane.b32.xlu0 %v2236, %s2293
        %v2295 = vpop.permute.xlu0 %2294
        %s2297 = sor.u32 256, 120
        %2298 = vbcast.lane.b32.xlu0 %v2236, %s2297
        %v2299 = vpop.permute.xlu0 %2298
        %v2300 = vlaneseq
        %v2301 = vshrl.u32 %v2300, 7
        %v2302 = vsub.s32 6, %v2301
        %v2303 = vrot.slane %v289, %v2302
        %2305 = vbcast.lane.b32.xlu0 %v2303, 256
        %v2306 = vpop.permute.xlu0 %2305
        %s2308 = sor.u32 256, 8
        %2309 = vbcast.lane.b32.xlu0 %v2303, %s2308
        %v2310 = vpop.permute.xlu0 %2309
        %s2312 = sor.u32 256, 16
        %2313 = vbcast.lane.b32.xlu0 %v2303, %s2312
        %v2314 = vpop.permute.xlu0 %2313
        %s2316 = sor.u32 256, 24
        %2317 = vbcast.lane.b32.xlu0 %v2303, %s2316
        %v2318 = vpop.permute.xlu0 %2317
        %s2320 = sor.u32 256, 32
        %2321 = vbcast.lane.b32.xlu0 %v2303, %s2320
        %v2322 = vpop.permute.xlu0 %2321
        %s2324 = sor.u32 256, 40
        %2325 = vbcast.lane.b32.xlu0 %v2303, %s2324
        %v2326 = vpop.permute.xlu0 %2325
        %s2328 = sor.u32 256, 48
        %2329 = vbcast.lane.b32.xlu0 %v2303, %s2328
        %v2330 = vpop.permute.xlu0 %2329
        %s2332 = sor.u32 256, 56
        %2333 = vbcast.lane.b32.xlu0 %v2303, %s2332
        %v2334 = vpop.permute.xlu0 %2333
        %s2336 = sor.u32 256, 64
        %2337 = vbcast.lane.b32.xlu0 %v2303, %s2336
        %v2338 = vpop.permute.xlu0 %2337
        %s2340 = sor.u32 256, 72
        %2341 = vbcast.lane.b32.xlu0 %v2303, %s2340
        %v2342 = vpop.permute.xlu0 %2341
        %s2344 = sor.u32 256, 80
        %2345 = vbcast.lane.b32.xlu0 %v2303, %s2344
        %v2346 = vpop.permute.xlu0 %2345
        %s2348 = sor.u32 256, 88
        %2349 = vbcast.lane.b32.xlu0 %v2303, %s2348
        %v2350 = vpop.permute.xlu0 %2349
        %s2352 = sor.u32 256, 96
        %2353 = vbcast.lane.b32.xlu0 %v2303, %s2352
        %v2354 = vpop.permute.xlu0 %2353
        %s2356 = sor.u32 256, 104
        %2357 = vbcast.lane.b32.xlu0 %v2303, %s2356
        %v2358 = vpop.permute.xlu0 %2357
        %s2360 = sor.u32 256, 112
        %2361 = vbcast.lane.b32.xlu0 %v2303, %s2360
        %v2362 = vpop.permute.xlu0 %2361
        %s2364 = sor.u32 256, 120
        %2365 = vbcast.lane.b32.xlu0 %v2303, %s2364
        %v2366 = vpop.permute.xlu0 %2365
        %v2367 = vlaneseq
        %v2368 = vshrl.u32 %v2367, 7
        %v2369 = vsub.s32 7, %v2368
        %v2370 = vrot.slane %v289, %v2369
        %2372 = vbcast.lane.b32.xlu0 %v2370, 256
        %v2373 = vpop.permute.xlu0 %2372
        %s2375 = sor.u32 256, 8
        %2376 = vbcast.lane.b32.xlu0 %v2370, %s2375
        %v2377 = vpop.permute.xlu0 %2376
        %s2379 = sor.u32 256, 16
        %2380 = vbcast.lane.b32.xlu0 %v2370, %s2379
        %v2381 = vpop.permute.xlu0 %2380
        %s2383 = sor.u32 256, 24
        %2384 = vbcast.lane.b32.xlu0 %v2370, %s2383
        %v2385 = vpop.permute.xlu0 %2384
        %s2387 = sor.u32 256, 32
        %2388 = vbcast.lane.b32.xlu0 %v2370, %s2387
        %v2389 = vpop.permute.xlu0 %2388
        %s2391 = sor.u32 256, 40
        %2392 = vbcast.lane.b32.xlu0 %v2370, %s2391
        %v2393 = vpop.permute.xlu0 %2392
        %s2395 = sor.u32 256, 48
        %2396 = vbcast.lane.b32.xlu0 %v2370, %s2395
        %v2397 = vpop.permute.xlu0 %2396
        %s2399 = sor.u32 256, 56
        %2400 = vbcast.lane.b32.xlu0 %v2370, %s2399
        %v2401 = vpop.permute.xlu0 %2400
        %s2403 = sor.u32 256, 64
        %2404 = vbcast.lane.b32.xlu0 %v2370, %s2403
        %v2405 = vpop.permute.xlu0 %2404
        %s2407 = sor.u32 256, 72
        %2408 = vbcast.lane.b32.xlu0 %v2370, %s2407
        %v2409 = vpop.permute.xlu0 %2408
        %s2411 = sor.u32 256, 80
        %2412 = vbcast.lane.b32.xlu0 %v2370, %s2411
        %v2413 = vpop.permute.xlu0 %2412
        %s2415 = sor.u32 256, 88
        %2416 = vbcast.lane.b32.xlu0 %v2370, %s2415
        %v2417 = vpop.permute.xlu0 %2416
        %s2419 = sor.u32 256, 96
        %2420 = vbcast.lane.b32.xlu0 %v2370, %s2419
        %v2421 = vpop.permute.xlu0 %2420
        %s2423 = sor.u32 256, 104
        %2424 = vbcast.lane.b32.xlu0 %v2370, %s2423
        %v2425 = vpop.permute.xlu0 %2424
        %s2427 = sor.u32 256, 112
        %2428 = vbcast.lane.b32.xlu0 %v2370, %s2427
        %v2429 = vpop.permute.xlu0 %2428
        %s2431 = sor.u32 256, 120
        %2432 = vbcast.lane.b32.xlu0 %v2370, %s2431
        %v2433 = vpop.permute.xlu0 %2432
        %v2434 = vadd.f32 %v238, %v296
        %v2435 = vadd.f32 %v239, %v300
        %v2436 = vadd.f32 %v240, %v304
        %v2437 = vadd.f32 %v241, %v308
        %v2438 = vadd.f32 %v242, %v312
        %v2439 = vadd.f32 %v243, %v316
        %v2440 = vadd.f32 %v244, %v320
        %v2441 = vadd.f32 %v245, %v324
        %v2442 = vadd.f32 %v246, %v328
        %v2443 = vadd.f32 %v247, %v332
        %v2444 = vadd.f32 %v248, %v336
        %v2445 = vadd.f32 %v249, %v340
        %v2446 = vadd.f32 %v250, %v344
        %v2447 = vadd.f32 %v251, %v348
        %v2448 = vadd.f32 %v252, %v352
        %v2449 = vadd.f32 %v253, %v356
        %v2450 = vadd.f32 %v238, %v363
        %v2451 = vadd.f32 %v239, %v367
        %v2452 = vadd.f32 %v240, %v371
        %v2453 = vadd.f32 %v241, %v375
        %v2454 = vadd.f32 %v242, %v379
        %v2455 = vadd.f32 %v243, %v383
        %v2456 = vadd.f32 %v244, %v387
        %v2457 = vadd.f32 %v245, %v391
        %v2458 = vadd.f32 %v246, %v395
        %v2459 = vadd.f32 %v247, %v399
        %v2460 = vadd.f32 %v248, %v403
        %v2461 = vadd.f32 %v249, %v407
        %v2462 = vadd.f32 %v250, %v411
        %v2463 = vadd.f32 %v251, %v415
        %v2464 = vadd.f32 %v252, %v419
        %v2465 = vadd.f32 %v253, %v423
        %v2466 = vadd.f32 %v238, %v430
        %v2467 = vadd.f32 %v239, %v434
        %v2468 = vadd.f32 %v240, %v438
        %v2469 = vadd.f32 %v241, %v442
        %v2470 = vadd.f32 %v242, %v446
        %v2471 = vadd.f32 %v243, %v450
        %v2472 = vadd.f32 %v244, %v454
        %v2473 = vadd.f32 %v245, %v458
        %v2474 = vadd.f32 %v246, %v462
        %v2475 = vadd.f32 %v247, %v466
        %v2476 = vadd.f32 %v248, %v470
        %v2477 = vadd.f32 %v249, %v474
        %v2478 = vadd.f32 %v250, %v478
        %v2479 = vadd.f32 %v251, %v482
        %v2480 = vadd.f32 %v252, %v486
        %v2481 = vadd.f32 %v253, %v490
        %v2482 = vadd.f32 %v238, %v497
        %v2483 = vadd.f32 %v239, %v501
        %v2484 = vadd.f32 %v240, %v505
        %v2485 = vadd.f32 %v241, %v509
        %v2486 = vadd.f32 %v242, %v513
        %v2487 = vadd.f32 %v243, %v517
        %v2488 = vadd.f32 %v244, %v521
        %v2489 = vadd.f32 %v245, %v525
        %v2490 = vadd.f32 %v246, %v529
        %v2491 = vadd.f32 %v247, %v533
        %v2492 = vadd.f32 %v248, %v537
        %v2493 = vadd.f32 %v249, %v541
        %v2494 = vadd.f32 %v250, %v545
        %v2495 = vadd.f32 %v251, %v549
        %v2496 = vadd.f32 %v252, %v553
        %v2497 = vadd.f32 %v253, %v557
        %v2498 = vadd.f32 %v238, %v564
        %v2499 = vadd.f32 %v239, %v568
        %v2500 = vadd.f32 %v240, %v572
        %v2501 = vadd.f32 %v241, %v576
        %v2502 = vadd.f32 %v242, %v580
        %v2503 = vadd.f32 %v243, %v584
        %v2504 = vadd.f32 %v244, %v588
        %v2505 = vadd.f32 %v245, %v592
        %v2506 = vadd.f32 %v246, %v596
        %v2507 = vadd.f32 %v247, %v600
        %v2508 = vadd.f32 %v248, %v604
        %v2509 = vadd.f32 %v249, %v608
        %v2510 = vadd.f32 %v250, %v612
        %v2511 = vadd.f32 %v251, %v616
        %v2512 = vadd.f32 %v252, %v620
        %v2513 = vadd.f32 %v253, %v624
        %v2514 = vadd.f32 %v238, %v631
        %v2515 = vadd.f32 %v239, %v635
        %v2516 = vadd.f32 %v240, %v639
        %v2517 = vadd.f32 %v241, %v643
        %v2518 = vadd.f32 %v242, %v647
        %v2519 = vadd.f32 %v243, %v651
        %v2520 = vadd.f32 %v244, %v655
        %v2521 = vadd.f32 %v245, %v659
        %v2522 = vadd.f32 %v246, %v663
        %v2523 = vadd.f32 %v247, %v667
        %v2524 = vadd.f32 %v248, %v671
        %v2525 = vadd.f32 %v249, %v675
        %v2526 = vadd.f32 %v250, %v679
        %v2527 = vadd.f32 %v251, %v683
        %v2528 = vadd.f32 %v252, %v687
        %v2529 = vadd.f32 %v253, %v691
        %v2530 = vadd.f32 %v238, %v698
        %v2531 = vadd.f32 %v239, %v702
        %v2532 = vadd.f32 %v240, %v706
        %v2533 = vadd.f32 %v241, %v710
        %v2534 = vadd.f32 %v242, %v714
        %v2535 = vadd.f32 %v243, %v718
        %v2536 = vadd.f32 %v244, %v722
        %v2537 = vadd.f32 %v245, %v726
        %v2538 = vadd.f32 %v246, %v730
        %v2539 = vadd.f32 %v247, %v734
        %v2540 = vadd.f32 %v248, %v738
        %v2541 = vadd.f32 %v249, %v742
        %v2542 = vadd.f32 %v250, %v746
        %v2543 = vadd.f32 %v251, %v750
        %v2544 = vadd.f32 %v252, %v754
        %v2545 = vadd.f32 %v253, %v758
        %v2546 = vadd.f32 %v238, %v765
        %v2547 = vadd.f32 %v239, %v769
        %v2548 = vadd.f32 %v240, %v773
        %v2549 = vadd.f32 %v241, %v777
        %v2550 = vadd.f32 %v242, %v781
        %v2551 = vadd.f32 %v243, %v785
        %v2552 = vadd.f32 %v244, %v789
        %v2553 = vadd.f32 %v245, %v793
        %v2554 = vadd.f32 %v246, %v797
        %v2555 = vadd.f32 %v247, %v801
        %v2556 = vadd.f32 %v248, %v805
        %v2557 = vadd.f32 %v249, %v809
        %v2558 = vadd.f32 %v250, %v813
        %v2559 = vadd.f32 %v251, %v817
        %v2560 = vadd.f32 %v252, %v821
        %v2561 = vadd.f32 %v253, %v825
        %v2562 = vadd.f32 %v238, %v832
        %v2563 = vadd.f32 %v239, %v836
        %v2564 = vadd.f32 %v240, %v840
        %v2565 = vadd.f32 %v241, %v844
        %v2566 = vadd.f32 %v242, %v848
        %v2567 = vadd.f32 %v243, %v852
        %v2568 = vadd.f32 %v244, %v856
        %v2569 = vadd.f32 %v245, %v860
        %v2570 = vadd.f32 %v246, %v864
        %v2571 = vadd.f32 %v247, %v868
        %v2572 = vadd.f32 %v248, %v872
        %v2573 = vadd.f32 %v249, %v876
        %v2574 = vadd.f32 %v250, %v880
        %v2575 = vadd.f32 %v251, %v884
        %v2576 = vadd.f32 %v252, %v888
        %v2577 = vadd.f32 %v253, %v892
        %v2578 = vadd.f32 %v238, %v899
        %v2579 = vadd.f32 %v239, %v903
        %v2580 = vadd.f32 %v240, %v907
        %v2581 = vadd.f32 %v241, %v911
        %v2582 = vadd.f32 %v242, %v915
        %v2583 = vadd.f32 %v243, %v919
        %v2584 = vadd.f32 %v244, %v923
        %v2585 = vadd.f32 %v245, %v927
        %v2586 = vadd.f32 %v246, %v931
        %v2587 = vadd.f32 %v247, %v935
        %v2588 = vadd.f32 %v248, %v939
        %v2589 = vadd.f32 %v249, %v943
        %v2590 = vadd.f32 %v250, %v947
        %v2591 = vadd.f32 %v251, %v951
        %v2592 = vadd.f32 %v252, %v955
        %v2593 = vadd.f32 %v253, %v959
        %v2594 = vadd.f32 %v238, %v966
        %v2595 = vadd.f32 %v239, %v970
        %v2596 = vadd.f32 %v240, %v974
        %v2597 = vadd.f32 %v241, %v978
        %v2598 = vadd.f32 %v242, %v982
        %v2599 = vadd.f32 %v243, %v986
        %v2600 = vadd.f32 %v244, %v990
        %v2601 = vadd.f32 %v245, %v994
        %v2602 = vadd.f32 %v246, %v998
        %v2603 = vadd.f32 %v247, %v1002
        %v2604 = vadd.f32 %v248, %v1006
        %v2605 = vadd.f32 %v249, %v1010
        %v2606 = vadd.f32 %v250, %v1014
        %v2607 = vadd.f32 %v251, %v1018
        %v2608 = vadd.f32 %v252, %v1022
        %v2609 = vadd.f32 %v253, %v1026
        %v2610 = vadd.f32 %v238, %v1033
        %v2611 = vadd.f32 %v239, %v1037
        %v2612 = vadd.f32 %v240, %v1041
        %v2613 = vadd.f32 %v241, %v1045
        %v2614 = vadd.f32 %v242, %v1049
        %v2615 = vadd.f32 %v243, %v1053
        %v2616 = vadd.f32 %v244, %v1057
        %v2617 = vadd.f32 %v245, %v1061
        %v2618 = vadd.f32 %v246, %v1065
        %v2619 = vadd.f32 %v247, %v1069
        %v2620 = vadd.f32 %v248, %v1073
        %v2621 = vadd.f32 %v249, %v1077
        %v2622 = vadd.f32 %v250, %v1081
        %v2623 = vadd.f32 %v251, %v1085
        %v2624 = vadd.f32 %v252, %v1089
        %v2625 = vadd.f32 %v253, %v1093
        %v2626 = vadd.f32 %v238, %v1100
        %v2627 = vadd.f32 %v239, %v1104
        %v2628 = vadd.f32 %v240, %v1108
        %v2629 = vadd.f32 %v241, %v1112
        %v2630 = vadd.f32 %v242, %v1116
        %v2631 = vadd.f32 %v243, %v1120
        %v2632 = vadd.f32 %v244, %v1124
        %v2633 = vadd.f32 %v245, %v1128
        %v2634 = vadd.f32 %v246, %v1132
        %v2635 = vadd.f32 %v247, %v1136
        %v2636 = vadd.f32 %v248, %v1140
        %v2637 = vadd.f32 %v249, %v1144
        %v2638 = vadd.f32 %v250, %v1148
        %v2639 = vadd.f32 %v251, %v1152
        %v2640 = vadd.f32 %v252, %v1156
        %v2641 = vadd.f32 %v253, %v1160
        %v2642 = vadd.f32 %v238, %v1167
        %v2643 = vadd.f32 %v239, %v1171
        %v2644 = vadd.f32 %v240, %v1175
        %v2645 = vadd.f32 %v241, %v1179
        %v2646 = vadd.f32 %v242, %v1183
        %v2647 = vadd.f32 %v243, %v1187
        %v2648 = vadd.f32 %v244, %v1191
        %v2649 = vadd.f32 %v245, %v1195
        %v2650 = vadd.f32 %v246, %v1199
        %v2651 = vadd.f32 %v247, %v1203
        %v2652 = vadd.f32 %v248, %v1207
        %v2653 = vadd.f32 %v249, %v1211
        %v2654 = vadd.f32 %v250, %v1215
        %v2655 = vadd.f32 %v251, %v1219
        %v2656 = vadd.f32 %v252, %v1223
        %v2657 = vadd.f32 %v253, %v1227
        %v2658 = vadd.f32 %v238, %v1234
        %v2659 = vadd.f32 %v239, %v1238
        %v2660 = vadd.f32 %v240, %v1242
        %v2661 = vadd.f32 %v241, %v1246
        %v2662 = vadd.f32 %v242, %v1250
        %v2663 = vadd.f32 %v243, %v1254
        %v2664 = vadd.f32 %v244, %v1258
        %v2665 = vadd.f32 %v245, %v1262
        %v2666 = vadd.f32 %v246, %v1266
        %v2667 = vadd.f32 %v247, %v1270
        %v2668 = vadd.f32 %v248, %v1274
        %v2669 = vadd.f32 %v249, %v1278
        %v2670 = vadd.f32 %v250, %v1282
        %v2671 = vadd.f32 %v251, %v1286
        %v2672 = vadd.f32 %v252, %v1290
        %v2673 = vadd.f32 %v253, %v1294
        %v2674 = vadd.f32 %v238, %v1301
        %v2675 = vadd.f32 %v239, %v1305
        %v2676 = vadd.f32 %v240, %v1309
        %v2677 = vadd.f32 %v241, %v1313
        %v2678 = vadd.f32 %v242, %v1317
        %v2679 = vadd.f32 %v243, %v1321
        %v2680 = vadd.f32 %v244, %v1325
        %v2681 = vadd.f32 %v245, %v1329
        %v2682 = vadd.f32 %v246, %v1333
        %v2683 = vadd.f32 %v247, %v1337
        %v2684 = vadd.f32 %v248, %v1341
        %v2685 = vadd.f32 %v249, %v1345
        %v2686 = vadd.f32 %v250, %v1349
        %v2687 = vadd.f32 %v251, %v1353
        %v2688 = vadd.f32 %v252, %v1357
        %v2689 = vadd.f32 %v253, %v1361
        %v2690 = vadd.f32 %v238, %v1368
        %v2691 = vadd.f32 %v239, %v1372
        %v2692 = vadd.f32 %v240, %v1376
        %v2693 = vadd.f32 %v241, %v1380
        %v2694 = vadd.f32 %v242, %v1384
        %v2695 = vadd.f32 %v243, %v1388
        %v2696 = vadd.f32 %v244, %v1392
        %v2697 = vadd.f32 %v245, %v1396
        %v2698 = vadd.f32 %v246, %v1400
        %v2699 = vadd.f32 %v247, %v1404
        %v2700 = vadd.f32 %v248, %v1408
        %v2701 = vadd.f32 %v249, %v1412
        %v2702 = vadd.f32 %v250, %v1416
        %v2703 = vadd.f32 %v251, %v1420
        %v2704 = vadd.f32 %v252, %v1424
        %v2705 = vadd.f32 %v253, %v1428
        %v2706 = vadd.f32 %v238, %v1435
        %v2707 = vadd.f32 %v239, %v1439
        %v2708 = vadd.f32 %v240, %v1443
        %v2709 = vadd.f32 %v241, %v1447
        %v2710 = vadd.f32 %v242, %v1451
        %v2711 = vadd.f32 %v243, %v1455
        %v2712 = vadd.f32 %v244, %v1459
        %v2713 = vadd.f32 %v245, %v1463
        %v2714 = vadd.f32 %v246, %v1467
        %v2715 = vadd.f32 %v247, %v1471
        %v2716 = vadd.f32 %v248, %v1475
        %v2717 = vadd.f32 %v249, %v1479
        %v2718 = vadd.f32 %v250, %v1483
        %v2719 = vadd.f32 %v251, %v1487
        %v2720 = vadd.f32 %v252, %v1491
        %v2721 = vadd.f32 %v253, %v1495
        %v2722 = vadd.f32 %v238, %v1502
        %v2723 = vadd.f32 %v239, %v1506
        %v2724 = vadd.f32 %v240, %v1510
        %v2725 = vadd.f32 %v241, %v1514
        %v2726 = vadd.f32 %v242, %v1518
        %v2727 = vadd.f32 %v243, %v1522
        %v2728 = vadd.f32 %v244, %v1526
        %v2729 = vadd.f32 %v245, %v1530
        %v2730 = vadd.f32 %v246, %v1534
        %v2731 = vadd.f32 %v247, %v1538
        %v2732 = vadd.f32 %v248, %v1542
        %v2733 = vadd.f32 %v249, %v1546
        %v2734 = vadd.f32 %v250, %v1550
        %v2735 = vadd.f32 %v251, %v1554
        %v2736 = vadd.f32 %v252, %v1558
        %v2737 = vadd.f32 %v253, %v1562
        %v2738 = vadd.f32 %v238, %v1569
        %v2739 = vadd.f32 %v239, %v1573
        %v2740 = vadd.f32 %v240, %v1577
        %v2741 = vadd.f32 %v241, %v1581
        %v2742 = vadd.f32 %v242, %v1585
        %v2743 = vadd.f32 %v243, %v1589
        %v2744 = vadd.f32 %v244, %v1593
        %v2745 = vadd.f32 %v245, %v1597
        %v2746 = vadd.f32 %v246, %v1601
        %v2747 = vadd.f32 %v247, %v1605
        %v2748 = vadd.f32 %v248, %v1609
        %v2749 = vadd.f32 %v249, %v1613
        %v2750 = vadd.f32 %v250, %v1617
        %v2751 = vadd.f32 %v251, %v1621
        %v2752 = vadd.f32 %v252, %v1625
        %v2753 = vadd.f32 %v253, %v1629
        %v2754 = vadd.f32 %v238, %v1636
        %v2755 = vadd.f32 %v239, %v1640
        %v2756 = vadd.f32 %v240, %v1644
        %v2757 = vadd.f32 %v241, %v1648
        %v2758 = vadd.f32 %v242, %v1652
        %v2759 = vadd.f32 %v243, %v1656
        %v2760 = vadd.f32 %v244, %v1660
        %v2761 = vadd.f32 %v245, %v1664
        %v2762 = vadd.f32 %v246, %v1668
        %v2763 = vadd.f32 %v247, %v1672
        %v2764 = vadd.f32 %v248, %v1676
        %v2765 = vadd.f32 %v249, %v1680
        %v2766 = vadd.f32 %v250, %v1684
        %v2767 = vadd.f32 %v251, %v1688
        %v2768 = vadd.f32 %v252, %v1692
        %v2769 = vadd.f32 %v253, %v1696
        %v2770 = vadd.f32 %v238, %v1703
        %v2771 = vadd.f32 %v239, %v1707
        %v2772 = vadd.f32 %v240, %v1711
        %v2773 = vadd.f32 %v241, %v1715
        %v2774 = vadd.f32 %v242, %v1719
        %v2775 = vadd.f32 %v243, %v1723
        %v2776 = vadd.f32 %v244, %v1727
        %v2777 = vadd.f32 %v245, %v1731
        %v2778 = vadd.f32 %v246, %v1735
        %v2779 = vadd.f32 %v247, %v1739
        %v2780 = vadd.f32 %v248, %v1743
        %v2781 = vadd.f32 %v249, %v1747
        %v2782 = vadd.f32 %v250, %v1751
        %v2783 = vadd.f32 %v251, %v1755
        %v2784 = vadd.f32 %v252, %v1759
        %v2785 = vadd.f32 %v253, %v1763
        %v2786 = vadd.f32 %v238, %v1770
        %v2787 = vadd.f32 %v239, %v1774
        %v2788 = vadd.f32 %v240, %v1778
        %v2789 = vadd.f32 %v241, %v1782
        %v2790 = vadd.f32 %v242, %v1786
        %v2791 = vadd.f32 %v243, %v1790
        %v2792 = vadd.f32 %v244, %v1794
        %v2793 = vadd.f32 %v245, %v1798
        %v2794 = vadd.f32 %v246, %v1802
        %v2795 = vadd.f32 %v247, %v1806
        %v2796 = vadd.f32 %v248, %v1810
        %v2797 = vadd.f32 %v249, %v1814
        %v2798 = vadd.f32 %v250, %v1818
        %v2799 = vadd.f32 %v251, %v1822
        %v2800 = vadd.f32 %v252, %v1826
        %v2801 = vadd.f32 %v253, %v1830
        %v2802 = vadd.f32 %v238, %v1837
        %v2803 = vadd.f32 %v239, %v1841
        %v2804 = vadd.f32 %v240, %v1845
        %v2805 = vadd.f32 %v241, %v1849
        %v2806 = vadd.f32 %v242, %v1853
        %v2807 = vadd.f32 %v243, %v1857
        %v2808 = vadd.f32 %v244, %v1861
        %v2809 = vadd.f32 %v245, %v1865
        %v2810 = vadd.f32 %v246, %v1869
        %v2811 = vadd.f32 %v247, %v1873
        %v2812 = vadd.f32 %v248, %v1877
        %v2813 = vadd.f32 %v249, %v1881
        %v2814 = vadd.f32 %v250, %v1885
        %v2815 = vadd.f32 %v251, %v1889
        %v2816 = vadd.f32 %v252, %v1893
        %v2817 = vadd.f32 %v253, %v1897
        %v2818 = vadd.f32 %v238, %v1904
        %v2819 = vadd.f32 %v239, %v1908
        %v2820 = vadd.f32 %v240, %v1912
        %v2821 = vadd.f32 %v241, %v1916
        %v2822 = vadd.f32 %v242, %v1920
        %v2823 = vadd.f32 %v243, %v1924
        %v2824 = vadd.f32 %v244, %v1928
        %v2825 = vadd.f32 %v245, %v1932
        %v2826 = vadd.f32 %v246, %v1936
        %v2827 = vadd.f32 %v247, %v1940
        %v2828 = vadd.f32 %v248, %v1944
        %v2829 = vadd.f32 %v249, %v1948
        %v2830 = vadd.f32 %v250, %v1952
        %v2831 = vadd.f32 %v251, %v1956
        %v2832 = vadd.f32 %v252, %v1960
        %v2833 = vadd.f32 %v253, %v1964
        %v2834 = vadd.f32 %v238, %v1971
        %v2835 = vadd.f32 %v239, %v1975
        %v2836 = vadd.f32 %v240, %v1979
        %v2837 = vadd.f32 %v241, %v1983
        %v2838 = vadd.f32 %v242, %v1987
        %v2839 = vadd.f32 %v243, %v1991
        %v2840 = vadd.f32 %v244, %v1995
        %v2841 = vadd.f32 %v245, %v1999
        %v2842 = vadd.f32 %v246, %v2003
        %v2843 = vadd.f32 %v247, %v2007
        %v2844 = vadd.f32 %v248, %v2011
        %v2845 = vadd.f32 %v249, %v2015
        %v2846 = vadd.f32 %v250, %v2019
        %v2847 = vadd.f32 %v251, %v2023
        %v2848 = vadd.f32 %v252, %v2027
        %v2849 = vadd.f32 %v253, %v2031
        %v2850 = vadd.f32 %v238, %v2038
        %v2851 = vadd.f32 %v239, %v2042
        %v2852 = vadd.f32 %v240, %v2046
        %v2853 = vadd.f32 %v241, %v2050
        %v2854 = vadd.f32 %v242, %v2054
        %v2855 = vadd.f32 %v243, %v2058
        %v2856 = vadd.f32 %v244, %v2062
        %v2857 = vadd.f32 %v245, %v2066
        %v2858 = vadd.f32 %v246, %v2070
        %v2859 = vadd.f32 %v247, %v2074
        %v2860 = vadd.f32 %v248, %v2078
        %v2861 = vadd.f32 %v249, %v2082
        %v2862 = vadd.f32 %v250, %v2086
        %v2863 = vadd.f32 %v251, %v2090
        %v2864 = vadd.f32 %v252, %v2094
        %v2865 = vadd.f32 %v253, %v2098
        %v2866 = vadd.f32 %v238, %v2105
        %v2867 = vadd.f32 %v239, %v2109
        %v2868 = vadd.f32 %v240, %v2113
        %v2869 = vadd.f32 %v241, %v2117
        %v2870 = vadd.f32 %v242, %v2121
        %v2871 = vadd.f32 %v243, %v2125
        %v2872 = vadd.f32 %v244, %v2129
        %v2873 = vadd.f32 %v245, %v2133
        %v2874 = vadd.f32 %v246, %v2137
        %v2875 = vadd.f32 %v247, %v2141
        %v2876 = vadd.f32 %v248, %v2145
        %v2877 = vadd.f32 %v249, %v2149
        %v2878 = vadd.f32 %v250, %v2153
        %v2879 = vadd.f32 %v251, %v2157
        %v2880 = vadd.f32 %v252, %v2161
        %v2881 = vadd.f32 %v253, %v2165
        %v2882 = vadd.f32 %v238, %v2172
        %v2883 = vadd.f32 %v239, %v2176
        %v2884 = vadd.f32 %v240, %v2180
        %v2885 = vadd.f32 %v241, %v2184
        %v2886 = vadd.f32 %v242, %v2188
        %v2887 = vadd.f32 %v243, %v2192
        %v2888 = vadd.f32 %v244, %v2196
        %v2889 = vadd.f32 %v245, %v2200
        %v2890 = vadd.f32 %v246, %v2204
        %v2891 = vadd.f32 %v247, %v2208
        %v2892 = vadd.f32 %v248, %v2212
        %v2893 = vadd.f32 %v249, %v2216
        %v2894 = vadd.f32 %v250, %v2220
        %v2895 = vadd.f32 %v251, %v2224
        %v2896 = vadd.f32 %v252, %v2228
        %v2897 = vadd.f32 %v253, %v2232
        %v2898 = vadd.f32 %v238, %v2239
        %v2899 = vadd.f32 %v239, %v2243
        %v2900 = vadd.f32 %v240, %v2247
        %v2901 = vadd.f32 %v241, %v2251
        %v2902 = vadd.f32 %v242, %v2255
        %v2903 = vadd.f32 %v243, %v2259
        %v2904 = vadd.f32 %v244, %v2263
        %v2905 = vadd.f32 %v245, %v2267
        %v2906 = vadd.f32 %v246, %v2271
        %v2907 = vadd.f32 %v247, %v2275
        %v2908 = vadd.f32 %v248, %v2279
        %v2909 = vadd.f32 %v249, %v2283
        %v2910 = vadd.f32 %v250, %v2287
        %v2911 = vadd.f32 %v251, %v2291
        %v2912 = vadd.f32 %v252, %v2295
        %v2913 = vadd.f32 %v253, %v2299
        %v2914 = vadd.f32 %v238, %v2306
        %v2915 = vadd.f32 %v239, %v2310
        %v2916 = vadd.f32 %v240, %v2314
        %v2917 = vadd.f32 %v241, %v2318
        %v2918 = vadd.f32 %v242, %v2322
        %v2919 = vadd.f32 %v243, %v2326
        %v2920 = vadd.f32 %v244, %v2330
        %v2921 = vadd.f32 %v245, %v2334
        %v2922 = vadd.f32 %v246, %v2338
        %v2923 = vadd.f32 %v247, %v2342
        %v2924 = vadd.f32 %v248, %v2346
        %v2925 = vadd.f32 %v249, %v2350
        %v2926 = vadd.f32 %v250, %v2354
        %v2927 = vadd.f32 %v251, %v2358
        %v2928 = vadd.f32 %v252, %v2362
        %v2929 = vadd.f32 %v253, %v2366
        %v2930 = vadd.f32 %v238, %v2373
        %v2931 = vadd.f32 %v239, %v2377
        %v2932 = vadd.f32 %v240, %v2381
        %v2933 = vadd.f32 %v241, %v2385
        %v2934 = vadd.f32 %v242, %v2389
        %v2935 = vadd.f32 %v243, %v2393
        %v2936 = vadd.f32 %v244, %v2397
        %v2937 = vadd.f32 %v245, %v2401
        %v2938 = vadd.f32 %v246, %v2405
        %v2939 = vadd.f32 %v247, %v2409
        %v2940 = vadd.f32 %v248, %v2413
        %v2941 = vadd.f32 %v249, %v2417
        %v2942 = vadd.f32 %v250, %v2421
        %v2943 = vadd.f32 %v251, %v2425
        %v2944 = vadd.f32 %v252, %v2429
        %v2945 = vadd.f32 %v253, %v2433
        %v2946 = vadd.f32 %v270, %v296
        %v2947 = vadd.f32 %v271, %v300
        %v2948 = vadd.f32 %v272, %v304
        %v2949 = vadd.f32 %v273, %v308
        %v2950 = vadd.f32 %v274, %v312
        %v2951 = vadd.f32 %v275, %v316
        %v2952 = vadd.f32 %v276, %v320
        %v2953 = vadd.f32 %v277, %v324
        %v2954 = vadd.f32 %v278, %v328
        %v2955 = vadd.f32 %v279, %v332
        %v2956 = vadd.f32 %v280, %v336
        %v2957 = vadd.f32 %v281, %v340
        %v2958 = vadd.f32 %v282, %v344
        %v2959 = vadd.f32 %v283, %v348
        %v2960 = vadd.f32 %v284, %v352
        %v2961 = vadd.f32 %v285, %v356
        %v2962 = vadd.f32 %v270, %v363
        %v2963 = vadd.f32 %v271, %v367
        %v2964 = vadd.f32 %v272, %v371
        %v2965 = vadd.f32 %v273, %v375
        %v2966 = vadd.f32 %v274, %v379
        %v2967 = vadd.f32 %v275, %v383
        %v2968 = vadd.f32 %v276, %v387
        %v2969 = vadd.f32 %v277, %v391
        %v2970 = vadd.f32 %v278, %v395
        %v2971 = vadd.f32 %v279, %v399
        %v2972 = vadd.f32 %v280, %v403
        %v2973 = vadd.f32 %v281, %v407
        %v2974 = vadd.f32 %v282, %v411
        %v2975 = vadd.f32 %v283, %v415
        %v2976 = vadd.f32 %v284, %v419
        %v2977 = vadd.f32 %v285, %v423
        %v2978 = vadd.f32 %v270, %v430
        %v2979 = vadd.f32 %v271, %v434
        %v2980 = vadd.f32 %v272, %v438
        %v2981 = vadd.f32 %v273, %v442
        %v2982 = vadd.f32 %v274, %v446
        %v2983 = vadd.f32 %v275, %v450
        %v2984 = vadd.f32 %v276, %v454
        %v2985 = vadd.f32 %v277, %v458
        %v2986 = vadd.f32 %v278, %v462
        %v2987 = vadd.f32 %v279, %v466
        %v2988 = vadd.f32 %v280, %v470
        %v2989 = vadd.f32 %v281, %v474
        %v2990 = vadd.f32 %v282, %v478
        %v2991 = vadd.f32 %v283, %v482
        %v2992 = vadd.f32 %v284, %v486
        %v2993 = vadd.f32 %v285, %v490
        %v2994 = vadd.f32 %v270, %v497
        %v2995 = vadd.f32 %v271, %v501
        %v2996 = vadd.f32 %v272, %v505
        %v2997 = vadd.f32 %v273, %v509
        %v2998 = vadd.f32 %v274, %v513
        %v2999 = vadd.f32 %v275, %v517
        %v3000 = vadd.f32 %v276, %v521
        %v3001 = vadd.f32 %v277, %v525
        %v3002 = vadd.f32 %v278, %v529
        %v3003 = vadd.f32 %v279, %v533
        %v3004 = vadd.f32 %v280, %v537
        %v3005 = vadd.f32 %v281, %v541
        %v3006 = vadd.f32 %v282, %v545
        %v3007 = vadd.f32 %v283, %v549
        %v3008 = vadd.f32 %v284, %v553
        %v3009 = vadd.f32 %v285, %v557
        %v3010 = vadd.f32 %v270, %v564
        %v3011 = vadd.f32 %v271, %v568
        %v3012 = vadd.f32 %v272, %v572
        %v3013 = vadd.f32 %v273, %v576
        %v3014 = vadd.f32 %v274, %v580
        %v3015 = vadd.f32 %v275, %v584
        %v3016 = vadd.f32 %v276, %v588
        %v3017 = vadd.f32 %v277, %v592
        %v3018 = vadd.f32 %v278, %v596
        %v3019 = vadd.f32 %v279, %v600
        %v3020 = vadd.f32 %v280, %v604
        %v3021 = vadd.f32 %v281, %v608
        %v3022 = vadd.f32 %v282, %v612
        %v3023 = vadd.f32 %v283, %v616
        %v3024 = vadd.f32 %v284, %v620
        %v3025 = vadd.f32 %v285, %v624
        %v3026 = vadd.f32 %v270, %v631
        %v3027 = vadd.f32 %v271, %v635
        %v3028 = vadd.f32 %v272, %v639
        %v3029 = vadd.f32 %v273, %v643
        %v3030 = vadd.f32 %v274, %v647
        %v3031 = vadd.f32 %v275, %v651
        %v3032 = vadd.f32 %v276, %v655
        %v3033 = vadd.f32 %v277, %v659
        %v3034 = vadd.f32 %v278, %v663
        %v3035 = vadd.f32 %v279, %v667
        %v3036 = vadd.f32 %v280, %v671
        %v3037 = vadd.f32 %v281, %v675
        %v3038 = vadd.f32 %v282, %v679
        %v3039 = vadd.f32 %v283, %v683
        %v3040 = vadd.f32 %v284, %v687
        %v3041 = vadd.f32 %v285, %v691
        %v3042 = vadd.f32 %v270, %v698
        %v3043 = vadd.f32 %v271, %v702
        %v3044 = vadd.f32 %v272, %v706
        %v3045 = vadd.f32 %v273, %v710
        %v3046 = vadd.f32 %v274, %v714
        %v3047 = vadd.f32 %v275, %v718
        %v3048 = vadd.f32 %v276, %v722
        %v3049 = vadd.f32 %v277, %v726
        %v3050 = vadd.f32 %v278, %v730
        %v3051 = vadd.f32 %v279, %v734
        %v3052 = vadd.f32 %v280, %v738
        %v3053 = vadd.f32 %v281, %v742
        %v3054 = vadd.f32 %v282, %v746
        %v3055 = vadd.f32 %v283, %v750
        %v3056 = vadd.f32 %v284, %v754
        %v3057 = vadd.f32 %v285, %v758
        %v3058 = vadd.f32 %v270, %v765
        %v3059 = vadd.f32 %v271, %v769
        %v3060 = vadd.f32 %v272, %v773
        %v3061 = vadd.f32 %v273, %v777
        %v3062 = vadd.f32 %v274, %v781
        %v3063 = vadd.f32 %v275, %v785
        %v3064 = vadd.f32 %v276, %v789
        %v3065 = vadd.f32 %v277, %v793
        %v3066 = vadd.f32 %v278, %v797
        %v3067 = vadd.f32 %v279, %v801
        %v3068 = vadd.f32 %v280, %v805
        %v3069 = vadd.f32 %v281, %v809
        %v3070 = vadd.f32 %v282, %v813
        %v3071 = vadd.f32 %v283, %v817
        %v3072 = vadd.f32 %v284, %v821
        %v3073 = vadd.f32 %v285, %v825
        %v3074 = vadd.f32 %v270, %v832
        %v3075 = vadd.f32 %v271, %v836
        %v3076 = vadd.f32 %v272, %v840
        %v3077 = vadd.f32 %v273, %v844
        %v3078 = vadd.f32 %v274, %v848
        %v3079 = vadd.f32 %v275, %v852
        %v3080 = vadd.f32 %v276, %v856
        %v3081 = vadd.f32 %v277, %v860
        %v3082 = vadd.f32 %v278, %v864
        %v3083 = vadd.f32 %v279, %v868
        %v3084 = vadd.f32 %v280, %v872
        %v3085 = vadd.f32 %v281, %v876
        %v3086 = vadd.f32 %v282, %v880
        %v3087 = vadd.f32 %v283, %v884
        %v3088 = vadd.f32 %v284, %v888
        %v3089 = vadd.f32 %v285, %v892
        %v3090 = vadd.f32 %v270, %v899
        %v3091 = vadd.f32 %v271, %v903
        %v3092 = vadd.f32 %v272, %v907
        %v3093 = vadd.f32 %v273, %v911
        %v3094 = vadd.f32 %v274, %v915
        %v3095 = vadd.f32 %v275, %v919
        %v3096 = vadd.f32 %v276, %v923
        %v3097 = vadd.f32 %v277, %v927
        %v3098 = vadd.f32 %v278, %v931
        %v3099 = vadd.f32 %v279, %v935
        %v3100 = vadd.f32 %v280, %v939
        %v3101 = vadd.f32 %v281, %v943
        %v3102 = vadd.f32 %v282, %v947
        %v3103 = vadd.f32 %v283, %v951
        %v3104 = vadd.f32 %v284, %v955
        %v3105 = vadd.f32 %v285, %v959
        %v3106 = vadd.f32 %v270, %v966
        %v3107 = vadd.f32 %v271, %v970
        %v3108 = vadd.f32 %v272, %v974
        %v3109 = vadd.f32 %v273, %v978
        %v3110 = vadd.f32 %v274, %v982
        %v3111 = vadd.f32 %v275, %v986
        %v3112 = vadd.f32 %v276, %v990
        %v3113 = vadd.f32 %v277, %v994
        %v3114 = vadd.f32 %v278, %v998
        %v3115 = vadd.f32 %v279, %v1002
        %v3116 = vadd.f32 %v280, %v1006
        %v3117 = vadd.f32 %v281, %v1010
        %v3118 = vadd.f32 %v282, %v1014
        %v3119 = vadd.f32 %v283, %v1018
        %v3120 = vadd.f32 %v284, %v1022
        %v3121 = vadd.f32 %v285, %v1026
        %v3122 = vadd.f32 %v270, %v1033
        %v3123 = vadd.f32 %v271, %v1037
        %v3124 = vadd.f32 %v272, %v1041
        %v3125 = vadd.f32 %v273, %v1045
        %v3126 = vadd.f32 %v274, %v1049
        %v3127 = vadd.f32 %v275, %v1053
        %v3128 = vadd.f32 %v276, %v1057
        %v3129 = vadd.f32 %v277, %v1061
        %v3130 = vadd.f32 %v278, %v1065
        %v3131 = vadd.f32 %v279, %v1069
        %v3132 = vadd.f32 %v280, %v1073
        %v3133 = vadd.f32 %v281, %v1077
        %v3134 = vadd.f32 %v282, %v1081
        %v3135 = vadd.f32 %v283, %v1085
        %v3136 = vadd.f32 %v284, %v1089
        %v3137 = vadd.f32 %v285, %v1093
        %v3138 = vadd.f32 %v270, %v1100
        %v3139 = vadd.f32 %v271, %v1104
        %v3140 = vadd.f32 %v272, %v1108
        %v3141 = vadd.f32 %v273, %v1112
        %v3142 = vadd.f32 %v274, %v1116
        %v3143 = vadd.f32 %v275, %v1120
        %v3144 = vadd.f32 %v276, %v1124
        %v3145 = vadd.f32 %v277, %v1128
        %v3146 = vadd.f32 %v278, %v1132
        %v3147 = vadd.f32 %v279, %v1136
        %v3148 = vadd.f32 %v280, %v1140
        %v3149 = vadd.f32 %v281, %v1144
        %v3150 = vadd.f32 %v282, %v1148
        %v3151 = vadd.f32 %v283, %v1152
        %v3152 = vadd.f32 %v284, %v1156
        %v3153 = vadd.f32 %v285, %v1160
        %v3154 = vadd.f32 %v270, %v1167
        %v3155 = vadd.f32 %v271, %v1171
        %v3156 = vadd.f32 %v272, %v1175
        %v3157 = vadd.f32 %v273, %v1179
        %v3158 = vadd.f32 %v274, %v1183
        %v3159 = vadd.f32 %v275, %v1187
        %v3160 = vadd.f32 %v276, %v1191
        %v3161 = vadd.f32 %v277, %v1195
        %v3162 = vadd.f32 %v278, %v1199
        %v3163 = vadd.f32 %v279, %v1203
        %v3164 = vadd.f32 %v280, %v1207
        %v3165 = vadd.f32 %v281, %v1211
        %v3166 = vadd.f32 %v282, %v1215
        %v3167 = vadd.f32 %v283, %v1219
        %v3168 = vadd.f32 %v284, %v1223
        %v3169 = vadd.f32 %v285, %v1227
        %v3170 = vadd.f32 %v270, %v1234
        %v3171 = vadd.f32 %v271, %v1238
        %v3172 = vadd.f32 %v272, %v1242
        %v3173 = vadd.f32 %v273, %v1246
        %v3174 = vadd.f32 %v274, %v1250
        %v3175 = vadd.f32 %v275, %v1254
        %v3176 = vadd.f32 %v276, %v1258
        %v3177 = vadd.f32 %v277, %v1262
        %v3178 = vadd.f32 %v278, %v1266
        %v3179 = vadd.f32 %v279, %v1270
        %v3180 = vadd.f32 %v280, %v1274
        %v3181 = vadd.f32 %v281, %v1278
        %v3182 = vadd.f32 %v282, %v1282
        %v3183 = vadd.f32 %v283, %v1286
        %v3184 = vadd.f32 %v284, %v1290
        %v3185 = vadd.f32 %v285, %v1294
        %v3186 = vadd.f32 %v270, %v1301
        %v3187 = vadd.f32 %v271, %v1305
        %v3188 = vadd.f32 %v272, %v1309
        %v3189 = vadd.f32 %v273, %v1313
        %v3190 = vadd.f32 %v274, %v1317
        %v3191 = vadd.f32 %v275, %v1321
        %v3192 = vadd.f32 %v276, %v1325
        %v3193 = vadd.f32 %v277, %v1329
        %v3194 = vadd.f32 %v278, %v1333
        %v3195 = vadd.f32 %v279, %v1337
        %v3196 = vadd.f32 %v280, %v1341
        %v3197 = vadd.f32 %v281, %v1345
        %v3198 = vadd.f32 %v282, %v1349
        %v3199 = vadd.f32 %v283, %v1353
        %v3200 = vadd.f32 %v284, %v1357
        %v3201 = vadd.f32 %v285, %v1361
        %v3202 = vadd.f32 %v270, %v1368
        %v3203 = vadd.f32 %v271, %v1372
        %v3204 = vadd.f32 %v272, %v1376
        %v3205 = vadd.f32 %v273, %v1380
        %v3206 = vadd.f32 %v274, %v1384
        %v3207 = vadd.f32 %v275, %v1388
        %v3208 = vadd.f32 %v276, %v1392
        %v3209 = vadd.f32 %v277, %v1396
        %v3210 = vadd.f32 %v278, %v1400
        %v3211 = vadd.f32 %v279, %v1404
        %v3212 = vadd.f32 %v280, %v1408
        %v3213 = vadd.f32 %v281, %v1412
        %v3214 = vadd.f32 %v282, %v1416
        %v3215 = vadd.f32 %v283, %v1420
        %v3216 = vadd.f32 %v284, %v1424
        %v3217 = vadd.f32 %v285, %v1428
        %v3218 = vadd.f32 %v270, %v1435
        %v3219 = vadd.f32 %v271, %v1439
        %v3220 = vadd.f32 %v272, %v1443
        %v3221 = vadd.f32 %v273, %v1447
        %v3222 = vadd.f32 %v274, %v1451
        %v3223 = vadd.f32 %v275, %v1455
        %v3224 = vadd.f32 %v276, %v1459
        %v3225 = vadd.f32 %v277, %v1463
        %v3226 = vadd.f32 %v278, %v1467
        %v3227 = vadd.f32 %v279, %v1471
        %v3228 = vadd.f32 %v280, %v1475
        %v3229 = vadd.f32 %v281, %v1479
        %v3230 = vadd.f32 %v282, %v1483
        %v3231 = vadd.f32 %v283, %v1487
        %v3232 = vadd.f32 %v284, %v1491
        %v3233 = vadd.f32 %v285, %v1495
        %v3234 = vadd.f32 %v270, %v1502
        %v3235 = vadd.f32 %v271, %v1506
        %v3236 = vadd.f32 %v272, %v1510
        %v3237 = vadd.f32 %v273, %v1514
        %v3238 = vadd.f32 %v274, %v1518
        %v3239 = vadd.f32 %v275, %v1522
        %v3240 = vadd.f32 %v276, %v1526
        %v3241 = vadd.f32 %v277, %v1530
        %v3242 = vadd.f32 %v278, %v1534
        %v3243 = vadd.f32 %v279, %v1538
        %v3244 = vadd.f32 %v280, %v1542
        %v3245 = vadd.f32 %v281, %v1546
        %v3246 = vadd.f32 %v282, %v1550
        %v3247 = vadd.f32 %v283, %v1554
        %v3248 = vadd.f32 %v284, %v1558
        %v3249 = vadd.f32 %v285, %v1562
        %v3250 = vadd.f32 %v270, %v1569
        %v3251 = vadd.f32 %v271, %v1573
        %v3252 = vadd.f32 %v272, %v1577
        %v3253 = vadd.f32 %v273, %v1581
        %v3254 = vadd.f32 %v274, %v1585
        %v3255 = vadd.f32 %v275, %v1589
        %v3256 = vadd.f32 %v276, %v1593
        %v3257 = vadd.f32 %v277, %v1597
        %v3258 = vadd.f32 %v278, %v1601
        %v3259 = vadd.f32 %v279, %v1605
        %v3260 = vadd.f32 %v280, %v1609
        %v3261 = vadd.f32 %v281, %v1613
        %v3262 = vadd.f32 %v282, %v1617
        %v3263 = vadd.f32 %v283, %v1621
        %v3264 = vadd.f32 %v284, %v1625
        %v3265 = vadd.f32 %v285, %v1629
        %v3266 = vadd.f32 %v270, %v1636
        %v3267 = vadd.f32 %v271, %v1640
        %v3268 = vadd.f32 %v272, %v1644
        %v3269 = vadd.f32 %v273, %v1648
        %v3270 = vadd.f32 %v274, %v1652
        %v3271 = vadd.f32 %v275, %v1656
        %v3272 = vadd.f32 %v276, %v1660
        %v3273 = vadd.f32 %v277, %v1664
        %v3274 = vadd.f32 %v278, %v1668
        %v3275 = vadd.f32 %v279, %v1672
        %v3276 = vadd.f32 %v280, %v1676
        %v3277 = vadd.f32 %v281, %v1680
        %v3278 = vadd.f32 %v282, %v1684
        %v3279 = vadd.f32 %v283, %v1688
        %v3280 = vadd.f32 %v284, %v1692
        %v3281 = vadd.f32 %v285, %v1696
        %v3282 = vadd.f32 %v270, %v1703
        %v3283 = vadd.f32 %v271, %v1707
        %v3284 = vadd.f32 %v272, %v1711
        %v3285 = vadd.f32 %v273, %v1715
        %v3286 = vadd.f32 %v274, %v1719
        %v3287 = vadd.f32 %v275, %v1723
        %v3288 = vadd.f32 %v276, %v1727
        %v3289 = vadd.f32 %v277, %v1731
        %v3290 = vadd.f32 %v278, %v1735
        %v3291 = vadd.f32 %v279, %v1739
        %v3292 = vadd.f32 %v280, %v1743
        %v3293 = vadd.f32 %v281, %v1747
        %v3294 = vadd.f32 %v282, %v1751
        %v3295 = vadd.f32 %v283, %v1755
        %v3296 = vadd.f32 %v284, %v1759
        %v3297 = vadd.f32 %v285, %v1763
        %v3298 = vadd.f32 %v270, %v1770
        %v3299 = vadd.f32 %v271, %v1774
        %v3300 = vadd.f32 %v272, %v1778
        %v3301 = vadd.f32 %v273, %v1782
        %v3302 = vadd.f32 %v274, %v1786
        %v3303 = vadd.f32 %v275, %v1790
        %v3304 = vadd.f32 %v276, %v1794
        %v3305 = vadd.f32 %v277, %v1798
        %v3306 = vadd.f32 %v278, %v1802
        %v3307 = vadd.f32 %v279, %v1806
        %v3308 = vadd.f32 %v280, %v1810
        %v3309 = vadd.f32 %v281, %v1814
        %v3310 = vadd.f32 %v282, %v1818
        %v3311 = vadd.f32 %v283, %v1822
        %v3312 = vadd.f32 %v284, %v1826
        %v3313 = vadd.f32 %v285, %v1830
        %v3314 = vadd.f32 %v270, %v1837
        %v3315 = vadd.f32 %v271, %v1841
        %v3316 = vadd.f32 %v272, %v1845
        %v3317 = vadd.f32 %v273, %v1849
        %v3318 = vadd.f32 %v274, %v1853
        %v3319 = vadd.f32 %v275, %v1857
        %v3320 = vadd.f32 %v276, %v1861
        %v3321 = vadd.f32 %v277, %v1865
        %v3322 = vadd.f32 %v278, %v1869
        %v3323 = vadd.f32 %v279, %v1873
        %v3324 = vadd.f32 %v280, %v1877
        %v3325 = vadd.f32 %v281, %v1881
        %v3326 = vadd.f32 %v282, %v1885
        %v3327 = vadd.f32 %v283, %v1889
        %v3328 = vadd.f32 %v284, %v1893
        %v3329 = vadd.f32 %v285, %v1897
        %v3330 = vadd.f32 %v270, %v1904
        %v3331 = vadd.f32 %v271, %v1908
        %v3332 = vadd.f32 %v272, %v1912
        %v3333 = vadd.f32 %v273, %v1916
        %v3334 = vadd.f32 %v274, %v1920
        %v3335 = vadd.f32 %v275, %v1924
        %v3336 = vadd.f32 %v276, %v1928
        %v3337 = vadd.f32 %v277, %v1932
        %v3338 = vadd.f32 %v278, %v1936
        %v3339 = vadd.f32 %v279, %v1940
        %v3340 = vadd.f32 %v280, %v1944
        %v3341 = vadd.f32 %v281, %v1948
        %v3342 = vadd.f32 %v282, %v1952
        %v3343 = vadd.f32 %v283, %v1956
        %v3344 = vadd.f32 %v284, %v1960
        %v3345 = vadd.f32 %v285, %v1964
        %v3346 = vadd.f32 %v270, %v1971
        %v3347 = vadd.f32 %v271, %v1975
        %v3348 = vadd.f32 %v272, %v1979
        %v3349 = vadd.f32 %v273, %v1983
        %v3350 = vadd.f32 %v274, %v1987
        %v3351 = vadd.f32 %v275, %v1991
        %v3352 = vadd.f32 %v276, %v1995
        %v3353 = vadd.f32 %v277, %v1999
        %v3354 = vadd.f32 %v278, %v2003
        %v3355 = vadd.f32 %v279, %v2007
        %v3356 = vadd.f32 %v280, %v2011
        %v3357 = vadd.f32 %v281, %v2015
        %v3358 = vadd.f32 %v282, %v2019
        %v3359 = vadd.f32 %v283, %v2023
        %v3360 = vadd.f32 %v284, %v2027
        %v3361 = vadd.f32 %v285, %v2031
        %v3362 = vadd.f32 %v270, %v2038
        %v3363 = vadd.f32 %v271, %v2042
        %v3364 = vadd.f32 %v272, %v2046
        %v3365 = vadd.f32 %v273, %v2050
        %v3366 = vadd.f32 %v274, %v2054
        %v3367 = vadd.f32 %v275, %v2058
        %v3368 = vadd.f32 %v276, %v2062
        %v3369 = vadd.f32 %v277, %v2066
        %v3370 = vadd.f32 %v278, %v2070
        %v3371 = vadd.f32 %v279, %v2074
        %v3372 = vadd.f32 %v280, %v2078
        %v3373 = vadd.f32 %v281, %v2082
        %v3374 = vadd.f32 %v282, %v2086
        %v3375 = vadd.f32 %v283, %v2090
        %v3376 = vadd.f32 %v284, %v2094
        %v3377 = vadd.f32 %v285, %v2098
        %v3378 = vadd.f32 %v270, %v2105
        %v3379 = vadd.f32 %v271, %v2109
        %v3380 = vadd.f32 %v272, %v2113
        %v3381 = vadd.f32 %v273, %v2117
        %v3382 = vadd.f32 %v274, %v2121
        %v3383 = vadd.f32 %v275, %v2125
        %v3384 = vadd.f32 %v276, %v2129
        %v3385 = vadd.f32 %v277, %v2133
        %v3386 = vadd.f32 %v278, %v2137
        %v3387 = vadd.f32 %v279, %v2141
        %v3388 = vadd.f32 %v280, %v2145
        %v3389 = vadd.f32 %v281, %v2149
        %v3390 = vadd.f32 %v282, %v2153
        %v3391 = vadd.f32 %v283, %v2157
        %v3392 = vadd.f32 %v284, %v2161
        %v3393 = vadd.f32 %v285, %v2165
        %v3394 = vadd.f32 %v270, %v2172
        %v3395 = vadd.f32 %v271, %v2176
        %v3396 = vadd.f32 %v272, %v2180
        %v3397 = vadd.f32 %v273, %v2184
        %v3398 = vadd.f32 %v274, %v2188
        %v3399 = vadd.f32 %v275, %v2192
        %v3400 = vadd.f32 %v276, %v2196
        %v3401 = vadd.f32 %v277, %v2200
        %v3402 = vadd.f32 %v278, %v2204
        %v3403 = vadd.f32 %v279, %v2208
        %v3404 = vadd.f32 %v280, %v2212
        %v3405 = vadd.f32 %v281, %v2216
        %v3406 = vadd.f32 %v282, %v2220
        %v3407 = vadd.f32 %v283, %v2224
        %v3408 = vadd.f32 %v284, %v2228
        %v3409 = vadd.f32 %v285, %v2232
        %v3410 = vadd.f32 %v270, %v2239
        %v3411 = vadd.f32 %v271, %v2243
        %v3412 = vadd.f32 %v272, %v2247
        %v3413 = vadd.f32 %v273, %v2251
        %v3414 = vadd.f32 %v274, %v2255
        %v3415 = vadd.f32 %v275, %v2259
        %v3416 = vadd.f32 %v276, %v2263
        %v3417 = vadd.f32 %v277, %v2267
        %v3418 = vadd.f32 %v278, %v2271
        %v3419 = vadd.f32 %v279, %v2275
        %v3420 = vadd.f32 %v280, %v2279
        %v3421 = vadd.f32 %v281, %v2283
        %v3422 = vadd.f32 %v282, %v2287
        %v3423 = vadd.f32 %v283, %v2291
        %v3424 = vadd.f32 %v284, %v2295
        %v3425 = vadd.f32 %v285, %v2299
        %v3426 = vadd.f32 %v270, %v2306
        %v3427 = vadd.f32 %v271, %v2310
        %v3428 = vadd.f32 %v272, %v2314
        %v3429 = vadd.f32 %v273, %v2318
        %v3430 = vadd.f32 %v274, %v2322
        %v3431 = vadd.f32 %v275, %v2326
        %v3432 = vadd.f32 %v276, %v2330
        %v3433 = vadd.f32 %v277, %v2334
        %v3434 = vadd.f32 %v278, %v2338
        %v3435 = vadd.f32 %v279, %v2342
        %v3436 = vadd.f32 %v280, %v2346
        %v3437 = vadd.f32 %v281, %v2350
        %v3438 = vadd.f32 %v282, %v2354
        %v3439 = vadd.f32 %v283, %v2358
        %v3440 = vadd.f32 %v284, %v2362
        %v3441 = vadd.f32 %v285, %v2366
        %v3442 = vadd.f32 %v270, %v2373
        %v3443 = vadd.f32 %v271, %v2377
        %v3444 = vadd.f32 %v272, %v2381
        %v3445 = vadd.f32 %v273, %v2385
        %v3446 = vadd.f32 %v274, %v2389
        %v3447 = vadd.f32 %v275, %v2393
        %v3448 = vadd.f32 %v276, %v2397
        %v3449 = vadd.f32 %v277, %v2401
        %v3450 = vadd.f32 %v278, %v2405
        %v3451 = vadd.f32 %v279, %v2409
        %v3452 = vadd.f32 %v280, %v2413
        %v3453 = vadd.f32 %v281, %v2417
        %v3454 = vadd.f32 %v282, %v2421
        %v3455 = vadd.f32 %v283, %v2425
        %v3456 = vadd.f32 %v284, %v2429
        %v3457 = vadd.f32 %v285, %v2433
        %3458 = vst [vmem:[%s201] sm:$0xff] %v2434
        %3459 = vst [vmem:[%s201 + $0x18] sm:$0xff] %v2435
        %3460 = vst [vmem:[%s201 + $0x30] sm:$0xff] %v2436
        %3461 = vst [vmem:[%s201 + $0x48] sm:$0xff] %v2437
        %3462 = vst [vmem:[%s201 + $0x60] sm:$0xff] %v2438
        %3463 = vst [vmem:[%s201 + $0x78] sm:$0xff] %v2439
        %3464 = vst [vmem:[%s201 + $0x90] sm:$0xff] %v2440
        %3465 = vst [vmem:[%s201 + $0xa8] sm:$0xff] %v2441
        %3466 = vst [vmem:[%s201 + $0xc0] sm:$0xff] %v2442
        %3467 = vst [vmem:[%s201 + $0xd8] sm:$0xff] %v2443
        %3468 = vst [vmem:[%s201 + $0xf0] sm:$0xff] %v2444
        %3469 = vst [vmem:[%s201 + $0x108] sm:$0xff] %v2445
        %3470 = vst [vmem:[%s201 + $0x120] sm:$0xff] %v2446
        %3471 = vst [vmem:[%s201 + $0x138] sm:$0xff] %v2447
        %3472 = vst [vmem:[%s201 + $0x150] sm:$0xff] %v2448
        %3473 = vst [vmem:[%s201 + $0x168] sm:$0xff] %v2449
        %3474 = vst [vmem:[%s201 + $0x180] sm:$0xff] %v2450
        %3475 = vst [vmem:[%s201 + $0x198] sm:$0xff] %v2451
        %3476 = vst [vmem:[%s201 + $0x1b0] sm:$0xff] %v2452
        %3477 = vst [vmem:[%s201 + $0x1c8] sm:$0xff] %v2453
        %3478 = vst [vmem:[%s201 + $0x1e0] sm:$0xff] %v2454
        %3479 = vst [vmem:[%s201 + $0x1f8] sm:$0xff] %v2455
        %3480 = vst [vmem:[%s201 + $0x210] sm:$0xff] %v2456
        %3481 = vst [vmem:[%s201 + $0x228] sm:$0xff] %v2457
        %3482 = vst [vmem:[%s201 + $0x240] sm:$0xff] %v2458
        %3483 = vst [vmem:[%s201 + $0x258] sm:$0xff] %v2459
        %3484 = vst [vmem:[%s201 + $0x270] sm:$0xff] %v2460
        %3485 = vst [vmem:[%s201 + $0x288] sm:$0xff] %v2461
        %3486 = vst [vmem:[%s201 + $0x2a0] sm:$0xff] %v2462
        %3487 = vst [vmem:[%s201 + $0x2b8] sm:$0xff] %v2463
        %3488 = vst [vmem:[%s201 + $0x2d0] sm:$0xff] %v2464
        %3489 = vst [vmem:[%s201 + $0x2e8] sm:$0xff] %v2465
        %3490 = vst [vmem:[%s201 + $0x300] sm:$0xff] %v2466
        %3491 = vst [vmem:[%s201 + $0x318] sm:$0xff] %v2467
        %3492 = vst [vmem:[%s201 + $0x330] sm:$0xff] %v2468
        %3493 = vst [vmem:[%s201 + $0x348] sm:$0xff] %v2469
        %3494 = vst [vmem:[%s201 + $0x360] sm:$0xff] %v2470
        %3495 = vst [vmem:[%s201 + $0x378] sm:$0xff] %v2471
        %3496 = vst [vmem:[%s201 + $0x390] sm:$0xff] %v2472
        %3497 = vst [vmem:[%s201 + $0x3a8] sm:$0xff] %v2473
        %3498 = vst [vmem:[%s201 + $0x3c0] sm:$0xff] %v2474
        %3499 = vst [vmem:[%s201 + $0x3d8] sm:$0xff] %v2475
        %3500 = vst [vmem:[%s201 + $0x3f0] sm:$0xff] %v2476
        %3501 = vst [vmem:[%s201 + $0x408] sm:$0xff] %v2477
        %3502 = vst [vmem:[%s201 + $0x420] sm:$0xff] %v2478
        %3503 = vst [vmem:[%s201 + $0x438] sm:$0xff] %v2479
        %3504 = vst [vmem:[%s201 + $0x450] sm:$0xff] %v2480
        %3505 = vst [vmem:[%s201 + $0x468] sm:$0xff] %v2481
        %3506 = vst [vmem:[%s201 + $0x480] sm:$0xff] %v2482
        %3507 = vst [vmem:[%s201 + $0x498] sm:$0xff] %v2483
        %3508 = vst [vmem:[%s201 + $0x4b0] sm:$0xff] %v2484
        %3509 = vst [vmem:[%s201 + $0x4c8] sm:$0xff] %v2485
        %3510 = vst [vmem:[%s201 + $0x4e0] sm:$0xff] %v2486
        %3511 = vst [vmem:[%s201 + $0x4f8] sm:$0xff] %v2487
        %3512 = vst [vmem:[%s201 + $0x510] sm:$0xff] %v2488
        %3513 = vst [vmem:[%s201 + $0x528] sm:$0xff] %v2489
        %3514 = vst [vmem:[%s201 + $0x540] sm:$0xff] %v2490
        %3515 = vst [vmem:[%s201 + $0x558] sm:$0xff] %v2491
        %3516 = vst [vmem:[%s201 + $0x570] sm:$0xff] %v2492
        %3517 = vst [vmem:[%s201 + $0x588] sm:$0xff] %v2493
        %3518 = vst [vmem:[%s201 + $0x5a0] sm:$0xff] %v2494
        %3519 = vst [vmem:[%s201 + $0x5b8] sm:$0xff] %v2495
        %3520 = vst [vmem:[%s201 + $0x5d0] sm:$0xff] %v2496
        %3521 = vst [vmem:[%s201 + $0x5e8] sm:$0xff] %v2497
        %3522 = vst [vmem:[%s201 + $0x600] sm:$0xff] %v2498
        %3523 = vst [vmem:[%s201 + $0x618] sm:$0xff] %v2499
        %3524 = vst [vmem:[%s201 + $0x630] sm:$0xff] %v2500
        %3525 = vst [vmem:[%s201 + $0x648] sm:$0xff] %v2501
        %3526 = vst [vmem:[%s201 + $0x660] sm:$0xff] %v2502
        %3527 = vst [vmem:[%s201 + $0x678] sm:$0xff] %v2503
        %3528 = vst [vmem:[%s201 + $0x690] sm:$0xff] %v2504
        %3529 = vst [vmem:[%s201 + $0x6a8] sm:$0xff] %v2505
        %3530 = vst [vmem:[%s201 + $0x6c0] sm:$0xff] %v2506
        %3531 = vst [vmem:[%s201 + $0x6d8] sm:$0xff] %v2507
        %3532 = vst [vmem:[%s201 + $0x6f0] sm:$0xff] %v2508
        %3533 = vst [vmem:[%s201 + $0x708] sm:$0xff] %v2509
        %3534 = vst [vmem:[%s201 + $0x720] sm:$0xff] %v2510
        %3535 = vst [vmem:[%s201 + $0x738] sm:$0xff] %v2511
        %3536 = vst [vmem:[%s201 + $0x750] sm:$0xff] %v2512
        %3537 = vst [vmem:[%s201 + $0x768] sm:$0xff] %v2513
        %3538 = vst [vmem:[%s201 + $0x780] sm:$0xff] %v2514
        %3539 = vst [vmem:[%s201 + $0x798] sm:$0xff] %v2515
        %3540 = vst [vmem:[%s201 + $0x7b0] sm:$0xff] %v2516
        %3541 = vst [vmem:[%s201 + $0x7c8] sm:$0xff] %v2517
        %3542 = vst [vmem:[%s201 + $0x7e0] sm:$0xff] %v2518
        %3543 = vst [vmem:[%s201 + $0x7f8] sm:$0xff] %v2519
        %3544 = vst [vmem:[%s201 + $0x810] sm:$0xff] %v2520
        %3545 = vst [vmem:[%s201 + $0x828] sm:$0xff] %v2521
        %3546 = vst [vmem:[%s201 + $0x840] sm:$0xff] %v2522
        %3547 = vst [vmem:[%s201 + $0x858] sm:$0xff] %v2523
        %3548 = vst [vmem:[%s201 + $0x870] sm:$0xff] %v2524
        %3549 = vst [vmem:[%s201 + $0x888] sm:$0xff] %v2525
        %3550 = vst [vmem:[%s201 + $0x8a0] sm:$0xff] %v2526
        %3551 = vst [vmem:[%s201 + $0x8b8] sm:$0xff] %v2527
        %3552 = vst [vmem:[%s201 + $0x8d0] sm:$0xff] %v2528
        %3553 = vst [vmem:[%s201 + $0x8e8] sm:$0xff] %v2529
        %3554 = vst [vmem:[%s201 + $0x900] sm:$0xff] %v2530
        %3555 = vst [vmem:[%s201 + $0x918] sm:$0xff] %v2531
        %3556 = vst [vmem:[%s201 + $0x930] sm:$0xff] %v2532
        %3557 = vst [vmem:[%s201 + $0x948] sm:$0xff] %v2533
        %3558 = vst [vmem:[%s201 + $0x960] sm:$0xff] %v2534
        %3559 = vst [vmem:[%s201 + $0x978] sm:$0xff] %v2535
        %3560 = vst [vmem:[%s201 + $0x990] sm:$0xff] %v2536
        %3561 = vst [vmem:[%s201 + $0x9a8] sm:$0xff] %v2537
        %3562 = vst [vmem:[%s201 + $0x9c0] sm:$0xff] %v2538
        %3563 = vst [vmem:[%s201 + $0x9d8] sm:$0xff] %v2539
        %3564 = vst [vmem:[%s201 + $0x9f0] sm:$0xff] %v2540
        %3565 = vst [vmem:[%s201 + $0xa08] sm:$0xff] %v2541
        %3566 = vst [vmem:[%s201 + $0xa20] sm:$0xff] %v2542
        %3567 = vst [vmem:[%s201 + $0xa38] sm:$0xff] %v2543
        %3568 = vst [vmem:[%s201 + $0xa50] sm:$0xff] %v2544
        %3569 = vst [vmem:[%s201 + $0xa68] sm:$0xff] %v2545
        %3570 = vst [vmem:[%s201 + $0xa80] sm:$0xff] %v2546
        %3571 = vst [vmem:[%s201 + $0xa98] sm:$0xff] %v2547
        %3572 = vst [vmem:[%s201 + $0xab0] sm:$0xff] %v2548
        %3573 = vst [vmem:[%s201 + $0xac8] sm:$0xff] %v2549
        %3574 = vst [vmem:[%s201 + $0xae0] sm:$0xff] %v2550
        %3575 = vst [vmem:[%s201 + $0xaf8] sm:$0xff] %v2551
        %3576 = vst [vmem:[%s201 + $0xb10] sm:$0xff] %v2552
        %3577 = vst [vmem:[%s201 + $0xb28] sm:$0xff] %v2553
        %3578 = vst [vmem:[%s201 + $0xb40] sm:$0xff] %v2554
        %3579 = vst [vmem:[%s201 + $0xb58] sm:$0xff] %v2555
        %3580 = vst [vmem:[%s201 + $0xb70] sm:$0xff] %v2556
        %3581 = vst [vmem:[%s201 + $0xb88] sm:$0xff] %v2557
        %3582 = vst [vmem:[%s201 + $0xba0] sm:$0xff] %v2558
        %3583 = vst [vmem:[%s201 + $0xbb8] sm:$0xff] %v2559
        %3584 = vst [vmem:[%s201 + $0xbd0] sm:$0xff] %v2560
        %3585 = vst [vmem:[%s201 + $0xbe8] sm:$0xff] %v2561
        %3586 = vst [vmem:[%s201 + $0xc00] sm:$0xff] %v2562
        %3587 = vst [vmem:[%s201 + $0xc18] sm:$0xff] %v2563
        %3588 = vst [vmem:[%s201 + $0xc30] sm:$0xff] %v2564
        %3589 = vst [vmem:[%s201 + $0xc48] sm:$0xff] %v2565
        %3590 = vst [vmem:[%s201 + $0xc60] sm:$0xff] %v2566
        %3591 = vst [vmem:[%s201 + $0xc78] sm:$0xff] %v2567
        %3592 = vst [vmem:[%s201 + $0xc90] sm:$0xff] %v2568
        %3593 = vst [vmem:[%s201 + $0xca8] sm:$0xff] %v2569
        %3594 = vst [vmem:[%s201 + $0xcc0] sm:$0xff] %v2570
        %3595 = vst [vmem:[%s201 + $0xcd8] sm:$0xff] %v2571
        %3596 = vst [vmem:[%s201 + $0xcf0] sm:$0xff] %v2572
        %3597 = vst [vmem:[%s201 + $0xd08] sm:$0xff] %v2573
        %3598 = vst [vmem:[%s201 + $0xd20] sm:$0xff] %v2574
        %3599 = vst [vmem:[%s201 + $0xd38] sm:$0xff] %v2575
        %3600 = vst [vmem:[%s201 + $0xd50] sm:$0xff] %v2576
        %3601 = vst [vmem:[%s201 + $0xd68] sm:$0xff] %v2577
        %3602 = vst [vmem:[%s201 + $0xd80] sm:$0xff] %v2578
        %3603 = vst [vmem:[%s201 + $0xd98] sm:$0xff] %v2579
        %3604 = vst [vmem:[%s201 + $0xdb0] sm:$0xff] %v2580
        %3605 = vst [vmem:[%s201 + $0xdc8] sm:$0xff] %v2581
        %3606 = vst [vmem:[%s201 + $0xde0] sm:$0xff] %v2582
        %3607 = vst [vmem:[%s201 + $0xdf8] sm:$0xff] %v2583
        %3608 = vst [vmem:[%s201 + $0xe10] sm:$0xff] %v2584
        %3609 = vst [vmem:[%s201 + $0xe28] sm:$0xff] %v2585
        %3610 = vst [vmem:[%s201 + $0xe40] sm:$0xff] %v2586
        %3611 = vst [vmem:[%s201 + $0xe58] sm:$0xff] %v2587
        %3612 = vst [vmem:[%s201 + $0xe70] sm:$0xff] %v2588
        %3613 = vst [vmem:[%s201 + $0xe88] sm:$0xff] %v2589
        %3614 = vst [vmem:[%s201 + $0xea0] sm:$0xff] %v2590
        %3615 = vst [vmem:[%s201 + $0xeb8] sm:$0xff] %v2591
        %3616 = vst [vmem:[%s201 + $0xed0] sm:$0xff] %v2592
        %3617 = vst [vmem:[%s201 + $0xee8] sm:$0xff] %v2593
        %3618 = vst [vmem:[%s201 + $0xf00] sm:$0xff] %v2594
        %3619 = vst [vmem:[%s201 + $0xf18] sm:$0xff] %v2595
        %3620 = vst [vmem:[%s201 + $0xf30] sm:$0xff] %v2596
        %3621 = vst [vmem:[%s201 + $0xf48] sm:$0xff] %v2597
        %3622 = vst [vmem:[%s201 + $0xf60] sm:$0xff] %v2598
        %3623 = vst [vmem:[%s201 + $0xf78] sm:$0xff] %v2599
        %3624 = vst [vmem:[%s201 + $0xf90] sm:$0xff] %v2600
        %3625 = vst [vmem:[%s201 + $0xfa8] sm:$0xff] %v2601
        %3626 = vst [vmem:[%s201 + $0xfc0] sm:$0xff] %v2602
        %3627 = vst [vmem:[%s201 + $0xfd8] sm:$0xff] %v2603
        %3628 = vst [vmem:[%s201 + $0xff0] sm:$0xff] %v2604
        %3629 = vst [vmem:[%s201 + $0x1008] sm:$0xff] %v2605
        %3630 = vst [vmem:[%s201 + $0x1020] sm:$0xff] %v2606
        %3631 = vst [vmem:[%s201 + $0x1038] sm:$0xff] %v2607
        %3632 = vst [vmem:[%s201 + $0x1050] sm:$0xff] %v2608
        %3633 = vst [vmem:[%s201 + $0x1068] sm:$0xff] %v2609
        %3634 = vst [vmem:[%s201 + $0x1080] sm:$0xff] %v2610
        %3635 = vst [vmem:[%s201 + $0x1098] sm:$0xff] %v2611
        %3636 = vst [vmem:[%s201 + $0x10b0] sm:$0xff] %v2612
        %3637 = vst [vmem:[%s201 + $0x10c8] sm:$0xff] %v2613
        %3638 = vst [vmem:[%s201 + $0x10e0] sm:$0xff] %v2614
        %3639 = vst [vmem:[%s201 + $0x10f8] sm:$0xff] %v2615
        %3640 = vst [vmem:[%s201 + $0x1110] sm:$0xff] %v2616
        %3641 = vst [vmem:[%s201 + $0x1128] sm:$0xff] %v2617
        %3642 = vst [vmem:[%s201 + $0x1140] sm:$0xff] %v2618
        %3643 = vst [vmem:[%s201 + $0x1158] sm:$0xff] %v2619
        %3644 = vst [vmem:[%s201 + $0x1170] sm:$0xff] %v2620
        %3645 = vst [vmem:[%s201 + $0x1188] sm:$0xff] %v2621
        %3646 = vst [vmem:[%s201 + $0x11a0] sm:$0xff] %v2622
        %3647 = vst [vmem:[%s201 + $0x11b8] sm:$0xff] %v2623
        %3648 = vst [vmem:[%s201 + $0x11d0] sm:$0xff] %v2624
        %3649 = vst [vmem:[%s201 + $0x11e8] sm:$0xff] %v2625
        %3650 = vst [vmem:[%s201 + $0x1200] sm:$0xff] %v2626
        %3651 = vst [vmem:[%s201 + $0x1218] sm:$0xff] %v2627
        %3652 = vst [vmem:[%s201 + $0x1230] sm:$0xff] %v2628
        %3653 = vst [vmem:[%s201 + $0x1248] sm:$0xff] %v2629
        %3654 = vst [vmem:[%s201 + $0x1260] sm:$0xff] %v2630
        %3655 = vst [vmem:[%s201 + $0x1278] sm:$0xff] %v2631
        %3656 = vst [vmem:[%s201 + $0x1290] sm:$0xff] %v2632
        %3657 = vst [vmem:[%s201 + $0x12a8] sm:$0xff] %v2633
        %3658 = vst [vmem:[%s201 + $0x12c0] sm:$0xff] %v2634
        %3659 = vst [vmem:[%s201 + $0x12d8] sm:$0xff] %v2635
        %3660 = vst [vmem:[%s201 + $0x12f0] sm:$0xff] %v2636
        %3661 = vst [vmem:[%s201 + $0x1308] sm:$0xff] %v2637
        %3662 = vst [vmem:[%s201 + $0x1320] sm:$0xff] %v2638
        %3663 = vst [vmem:[%s201 + $0x1338] sm:$0xff] %v2639
        %3664 = vst [vmem:[%s201 + $0x1350] sm:$0xff] %v2640
        %3665 = vst [vmem:[%s201 + $0x1368] sm:$0xff] %v2641
        %3666 = vst [vmem:[%s201 + $0x1380] sm:$0xff] %v2642
        %3667 = vst [vmem:[%s201 + $0x1398] sm:$0xff] %v2643
        %3668 = vst [vmem:[%s201 + $0x13b0] sm:$0xff] %v2644
        %3669 = vst [vmem:[%s201 + $0x13c8] sm:$0xff] %v2645
        %3670 = vst [vmem:[%s201 + $0x13e0] sm:$0xff] %v2646
        %3671 = vst [vmem:[%s201 + $0x13f8] sm:$0xff] %v2647
        %3672 = vst [vmem:[%s201 + $0x1410] sm:$0xff] %v2648
        %3673 = vst [vmem:[%s201 + $0x1428] sm:$0xff] %v2649
        %3674 = vst [vmem:[%s201 + $0x1440] sm:$0xff] %v2650
        %3675 = vst [vmem:[%s201 + $0x1458] sm:$0xff] %v2651
        %3676 = vst [vmem:[%s201 + $0x1470] sm:$0xff] %v2652
        %3677 = vst [vmem:[%s201 + $0x1488] sm:$0xff] %v2653
        %3678 = vst [vmem:[%s201 + $0x14a0] sm:$0xff] %v2654
        %3679 = vst [vmem:[%s201 + $0x14b8] sm:$0xff] %v2655
        %3680 = vst [vmem:[%s201 + $0x14d0] sm:$0xff] %v2656
        %3681 = vst [vmem:[%s201 + $0x14e8] sm:$0xff] %v2657
        %3682 = vst [vmem:[%s201 + $0x1500] sm:$0xff] %v2658
        %3683 = vst [vmem:[%s201 + $0x1518] sm:$0xff] %v2659
        %3684 = vst [vmem:[%s201 + $0x1530] sm:$0xff] %v2660
        %3685 = vst [vmem:[%s201 + $0x1548] sm:$0xff] %v2661
        %3686 = vst [vmem:[%s201 + $0x1560] sm:$0xff] %v2662
        %3687 = vst [vmem:[%s201 + $0x1578] sm:$0xff] %v2663
        %3688 = vst [vmem:[%s201 + $0x1590] sm:$0xff] %v2664
        %3689 = vst [vmem:[%s201 + $0x15a8] sm:$0xff] %v2665
        %3690 = vst [vmem:[%s201 + $0x15c0] sm:$0xff] %v2666
        %3691 = vst [vmem:[%s201 + $0x15d8] sm:$0xff] %v2667
        %3692 = vst [vmem:[%s201 + $0x15f0] sm:$0xff] %v2668
        %3693 = vst [vmem:[%s201 + $0x1608] sm:$0xff] %v2669
        %3694 = vst [vmem:[%s201 + $0x1620] sm:$0xff] %v2670
        %3695 = vst [vmem:[%s201 + $0x1638] sm:$0xff] %v2671
        %3696 = vst [vmem:[%s201 + $0x1650] sm:$0xff] %v2672
        %3697 = vst [vmem:[%s201 + $0x1668] sm:$0xff] %v2673
        %3698 = vst [vmem:[%s201 + $0x1680] sm:$0xff] %v2674
        %3699 = vst [vmem:[%s201 + $0x1698] sm:$0xff] %v2675
        %3700 = vst [vmem:[%s201 + $0x16b0] sm:$0xff] %v2676
        %3701 = vst [vmem:[%s201 + $0x16c8] sm:$0xff] %v2677
        %3702 = vst [vmem:[%s201 + $0x16e0] sm:$0xff] %v2678
        %3703 = vst [vmem:[%s201 + $0x16f8] sm:$0xff] %v2679
        %3704 = vst [vmem:[%s201 + $0x1710] sm:$0xff] %v2680
        %3705 = vst [vmem:[%s201 + $0x1728] sm:$0xff] %v2681
        %3706 = vst [vmem:[%s201 + $0x1740] sm:$0xff] %v2682
        %3707 = vst [vmem:[%s201 + $0x1758] sm:$0xff] %v2683
        %3708 = vst [vmem:[%s201 + $0x1770] sm:$0xff] %v2684
        %3709 = vst [vmem:[%s201 + $0x1788] sm:$0xff] %v2685
        %3710 = vst [vmem:[%s201 + $0x17a0] sm:$0xff] %v2686
        %3711 = vst [vmem:[%s201 + $0x17b8] sm:$0xff] %v2687
        %3712 = vst [vmem:[%s201 + $0x17d0] sm:$0xff] %v2688
        %3713 = vst [vmem:[%s201 + $0x17e8] sm:$0xff] %v2689
        %3714 = vst [vmem:[%s201 + $0x1800] sm:$0xff] %v2690
        %3715 = vst [vmem:[%s201 + $0x1818] sm:$0xff] %v2691
        %3716 = vst [vmem:[%s201 + $0x1830] sm:$0xff] %v2692
        %3717 = vst [vmem:[%s201 + $0x1848] sm:$0xff] %v2693
        %3718 = vst [vmem:[%s201 + $0x1860] sm:$0xff] %v2694
        %3719 = vst [vmem:[%s201 + $0x1878] sm:$0xff] %v2695
        %3720 = vst [vmem:[%s201 + $0x1890] sm:$0xff] %v2696
        %3721 = vst [vmem:[%s201 + $0x18a8] sm:$0xff] %v2697
        %3722 = vst [vmem:[%s201 + $0x18c0] sm:$0xff] %v2698
        %3723 = vst [vmem:[%s201 + $0x18d8] sm:$0xff] %v2699
        %3724 = vst [vmem:[%s201 + $0x18f0] sm:$0xff] %v2700
        %3725 = vst [vmem:[%s201 + $0x1908] sm:$0xff] %v2701
        %3726 = vst [vmem:[%s201 + $0x1920] sm:$0xff] %v2702
        %3727 = vst [vmem:[%s201 + $0x1938] sm:$0xff] %v2703
        %3728 = vst [vmem:[%s201 + $0x1950] sm:$0xff] %v2704
        %3729 = vst [vmem:[%s201 + $0x1968] sm:$0xff] %v2705
        %3730 = vst [vmem:[%s201 + $0x1980] sm:$0xff] %v2706
        %3731 = vst [vmem:[%s201 + $0x1998] sm:$0xff] %v2707
        %3732 = vst [vmem:[%s201 + $0x19b0] sm:$0xff] %v2708
        %3733 = vst [vmem:[%s201 + $0x19c8] sm:$0xff] %v2709
        %3734 = vst [vmem:[%s201 + $0x19e0] sm:$0xff] %v2710
        %3735 = vst [vmem:[%s201 + $0x19f8] sm:$0xff] %v2711
        %3736 = vst [vmem:[%s201 + $0x1a10] sm:$0xff] %v2712
        %3737 = vst [vmem:[%s201 + $0x1a28] sm:$0xff] %v2713
        %3738 = vst [vmem:[%s201 + $0x1a40] sm:$0xff] %v2714
        %3739 = vst [vmem:[%s201 + $0x1a58] sm:$0xff] %v2715
        %3740 = vst [vmem:[%s201 + $0x1a70] sm:$0xff] %v2716
        %3741 = vst [vmem:[%s201 + $0x1a88] sm:$0xff] %v2717
        %3742 = vst [vmem:[%s201 + $0x1aa0] sm:$0xff] %v2718
        %3743 = vst [vmem:[%s201 + $0x1ab8] sm:$0xff] %v2719
        %3744 = vst [vmem:[%s201 + $0x1ad0] sm:$0xff] %v2720
        %3745 = vst [vmem:[%s201 + $0x1ae8] sm:$0xff] %v2721
        %3746 = vst [vmem:[%s201 + $0x1b00] sm:$0xff] %v2722
        %3747 = vst [vmem:[%s201 + $0x1b18] sm:$0xff] %v2723
        %3748 = vst [vmem:[%s201 + $0x1b30] sm:$0xff] %v2724
        %3749 = vst [vmem:[%s201 + $0x1b48] sm:$0xff] %v2725
        %3750 = vst [vmem:[%s201 + $0x1b60] sm:$0xff] %v2726
        %3751 = vst [vmem:[%s201 + $0x1b78] sm:$0xff] %v2727
        %3752 = vst [vmem:[%s201 + $0x1b90] sm:$0xff] %v2728
        %3753 = vst [vmem:[%s201 + $0x1ba8] sm:$0xff] %v2729
        %3754 = vst [vmem:[%s201 + $0x1bc0] sm:$0xff] %v2730
        %3755 = vst [vmem:[%s201 + $0x1bd8] sm:$0xff] %v2731
        %3756 = vst [vmem:[%s201 + $0x1bf0] sm:$0xff] %v2732
        %3757 = vst [vmem:[%s201 + $0x1c08] sm:$0xff] %v2733
        %3758 = vst [vmem:[%s201 + $0x1c20] sm:$0xff] %v2734
        %3759 = vst [vmem:[%s201 + $0x1c38] sm:$0xff] %v2735
        %3760 = vst [vmem:[%s201 + $0x1c50] sm:$0xff] %v2736
        %3761 = vst [vmem:[%s201 + $0x1c68] sm:$0xff] %v2737
        %3762 = vst [vmem:[%s201 + $0x1c80] sm:$0xff] %v2738
        %3763 = vst [vmem:[%s201 + $0x1c98] sm:$0xff] %v2739
        %3764 = vst [vmem:[%s201 + $0x1cb0] sm:$0xff] %v2740
        %3765 = vst [vmem:[%s201 + $0x1cc8] sm:$0xff] %v2741
        %3766 = vst [vmem:[%s201 + $0x1ce0] sm:$0xff] %v2742
        %3767 = vst [vmem:[%s201 + $0x1cf8] sm:$0xff] %v2743
        %3768 = vst [vmem:[%s201 + $0x1d10] sm:$0xff] %v2744
        %3769 = vst [vmem:[%s201 + $0x1d28] sm:$0xff] %v2745
        %3770 = vst [vmem:[%s201 + $0x1d40] sm:$0xff] %v2746
        %3771 = vst [vmem:[%s201 + $0x1d58] sm:$0xff] %v2747
        %3772 = vst [vmem:[%s201 + $0x1d70] sm:$0xff] %v2748
        %3773 = vst [vmem:[%s201 + $0x1d88] sm:$0xff] %v2749
        %3774 = vst [vmem:[%s201 + $0x1da0] sm:$0xff] %v2750
        %3775 = vst [vmem:[%s201 + $0x1db8] sm:$0xff] %v2751
        %3776 = vst [vmem:[%s201 + $0x1dd0] sm:$0xff] %v2752
        %3777 = vst [vmem:[%s201 + $0x1de8] sm:$0xff] %v2753
        %3778 = vst [vmem:[%s201 + $0x1e00] sm:$0xff] %v2754
        %3779 = vst [vmem:[%s201 + $0x1e18] sm:$0xff] %v2755
        %3780 = vst [vmem:[%s201 + $0x1e30] sm:$0xff] %v2756
        %3781 = vst [vmem:[%s201 + $0x1e48] sm:$0xff] %v2757
        %3782 = vst [vmem:[%s201 + $0x1e60] sm:$0xff] %v2758
        %3783 = vst [vmem:[%s201 + $0x1e78] sm:$0xff] %v2759
        %3784 = vst [vmem:[%s201 + $0x1e90] sm:$0xff] %v2760
        %3785 = vst [vmem:[%s201 + $0x1ea8] sm:$0xff] %v2761
        %3786 = vst [vmem:[%s201 + $0x1ec0] sm:$0xff] %v2762
        %3787 = vst [vmem:[%s201 + $0x1ed8] sm:$0xff] %v2763
        %3788 = vst [vmem:[%s201 + $0x1ef0] sm:$0xff] %v2764
        %3789 = vst [vmem:[%s201 + $0x1f08] sm:$0xff] %v2765
        %3790 = vst [vmem:[%s201 + $0x1f20] sm:$0xff] %v2766
        %3791 = vst [vmem:[%s201 + $0x1f38] sm:$0xff] %v2767
        %3792 = vst [vmem:[%s201 + $0x1f50] sm:$0xff] %v2768
        %3793 = vst [vmem:[%s201 + $0x1f68] sm:$0xff] %v2769
        %3794 = vst [vmem:[%s201 + $0x1f80] sm:$0xff] %v2770
        %3795 = vst [vmem:[%s201 + $0x1f98] sm:$0xff] %v2771
        %3796 = vst [vmem:[%s201 + $0x1fb0] sm:$0xff] %v2772
        %3797 = vst [vmem:[%s201 + $0x1fc8] sm:$0xff] %v2773
        %3798 = vst [vmem:[%s201 + $0x1fe0] sm:$0xff] %v2774
        %3799 = vst [vmem:[%s201 + $0x1ff8] sm:$0xff] %v2775
        %3800 = vst [vmem:[%s201 + $0x2010] sm:$0xff] %v2776
        %3801 = vst [vmem:[%s201 + $0x2028] sm:$0xff] %v2777
        %3802 = vst [vmem:[%s201 + $0x2040] sm:$0xff] %v2778
        %3803 = vst [vmem:[%s201 + $0x2058] sm:$0xff] %v2779
        %3804 = vst [vmem:[%s201 + $0x2070] sm:$0xff] %v2780
        %3805 = vst [vmem:[%s201 + $0x2088] sm:$0xff] %v2781
        %3806 = vst [vmem:[%s201 + $0x20a0] sm:$0xff] %v2782
        %3807 = vst [vmem:[%s201 + $0x20b8] sm:$0xff] %v2783
        %3808 = vst [vmem:[%s201 + $0x20d0] sm:$0xff] %v2784
        %3809 = vst [vmem:[%s201 + $0x20e8] sm:$0xff] %v2785
        %3810 = vst [vmem:[%s201 + $0x2100] sm:$0xff] %v2786
        %3811 = vst [vmem:[%s201 + $0x2118] sm:$0xff] %v2787
        %3812 = vst [vmem:[%s201 + $0x2130] sm:$0xff] %v2788
        %3813 = vst [vmem:[%s201 + $0x2148] sm:$0xff] %v2789
        %3814 = vst [vmem:[%s201 + $0x2160] sm:$0xff] %v2790
        %3815 = vst [vmem:[%s201 + $0x2178] sm:$0xff] %v2791
        %3816 = vst [vmem:[%s201 + $0x2190] sm:$0xff] %v2792
        %3817 = vst [vmem:[%s201 + $0x21a8] sm:$0xff] %v2793
        %3818 = vst [vmem:[%s201 + $0x21c0] sm:$0xff] %v2794
        %3819 = vst [vmem:[%s201 + $0x21d8] sm:$0xff] %v2795
        %3820 = vst [vmem:[%s201 + $0x21f0] sm:$0xff] %v2796
        %3821 = vst [vmem:[%s201 + $0x2208] sm:$0xff] %v2797
        %3822 = vst [vmem:[%s201 + $0x2220] sm:$0xff] %v2798
        %3823 = vst [vmem:[%s201 + $0x2238] sm:$0xff] %v2799
        %3824 = vst [vmem:[%s201 + $0x2250] sm:$0xff] %v2800
        %3825 = vst [vmem:[%s201 + $0x2268] sm:$0xff] %v2801
        %3826 = vst [vmem:[%s201 + $0x2280] sm:$0xff] %v2802
        %3827 = vst [vmem:[%s201 + $0x2298] sm:$0xff] %v2803
        %3828 = vst [vmem:[%s201 + $0x22b0] sm:$0xff] %v2804
        %3829 = vst [vmem:[%s201 + $0x22c8] sm:$0xff] %v2805
        %3830 = vst [vmem:[%s201 + $0x22e0] sm:$0xff] %v2806
        %3831 = vst [vmem:[%s201 + $0x22f8] sm:$0xff] %v2807
        %3832 = vst [vmem:[%s201 + $0x2310] sm:$0xff] %v2808
        %3833 = vst [vmem:[%s201 + $0x2328] sm:$0xff] %v2809
        %3834 = vst [vmem:[%s201 + $0x2340] sm:$0xff] %v2810
        %3835 = vst [vmem:[%s201 + $0x2358] sm:$0xff] %v2811
        %3836 = vst [vmem:[%s201 + $0x2370] sm:$0xff] %v2812
        %3837 = vst [vmem:[%s201 + $0x2388] sm:$0xff] %v2813
        %3838 = vst [vmem:[%s201 + $0x23a0] sm:$0xff] %v2814
        %3839 = vst [vmem:[%s201 + $0x23b8] sm:$0xff] %v2815
        %3840 = vst [vmem:[%s201 + $0x23d0] sm:$0xff] %v2816
        %3841 = vst [vmem:[%s201 + $0x23e8] sm:$0xff] %v2817
        %3842 = vst [vmem:[%s201 + $0x2400] sm:$0xff] %v2818
        %3843 = vst [vmem:[%s201 + $0x2418] sm:$0xff] %v2819
        %3844 = vst [vmem:[%s201 + $0x2430] sm:$0xff] %v2820
        %3845 = vst [vmem:[%s201 + $0x2448] sm:$0xff] %v2821
        %3846 = vst [vmem:[%s201 + $0x2460] sm:$0xff] %v2822
        %3847 = vst [vmem:[%s201 + $0x2478] sm:$0xff] %v2823
        %3848 = vst [vmem:[%s201 + $0x2490] sm:$0xff] %v2824
        %3849 = vst [vmem:[%s201 + $0x24a8] sm:$0xff] %v2825
        %3850 = vst [vmem:[%s201 + $0x24c0] sm:$0xff] %v2826
        %3851 = vst [vmem:[%s201 + $0x24d8] sm:$0xff] %v2827
        %3852 = vst [vmem:[%s201 + $0x24f0] sm:$0xff] %v2828
        %3853 = vst [vmem:[%s201 + $0x2508] sm:$0xff] %v2829
        %3854 = vst [vmem:[%s201 + $0x2520] sm:$0xff] %v2830
        %3855 = vst [vmem:[%s201 + $0x2538] sm:$0xff] %v2831
        %3856 = vst [vmem:[%s201 + $0x2550] sm:$0xff] %v2832
        %3857 = vst [vmem:[%s201 + $0x2568] sm:$0xff] %v2833
        %3858 = vst [vmem:[%s201 + $0x2580] sm:$0xff] %v2834
        %3859 = vst [vmem:[%s201 + $0x2598] sm:$0xff] %v2835
        %3860 = vst [vmem:[%s201 + $0x25b0] sm:$0xff] %v2836
        %3861 = vst [vmem:[%s201 + $0x25c8] sm:$0xff] %v2837
        %3862 = vst [vmem:[%s201 + $0x25e0] sm:$0xff] %v2838
        %3863 = vst [vmem:[%s201 + $0x25f8] sm:$0xff] %v2839
        %3864 = vst [vmem:[%s201 + $0x2610] sm:$0xff] %v2840
        %3865 = vst [vmem:[%s201 + $0x2628] sm:$0xff] %v2841
        %3866 = vst [vmem:[%s201 + $0x2640] sm:$0xff] %v2842
        %3867 = vst [vmem:[%s201 + $0x2658] sm:$0xff] %v2843
        %3868 = vst [vmem:[%s201 + $0x2670] sm:$0xff] %v2844
        %3869 = vst [vmem:[%s201 + $0x2688] sm:$0xff] %v2845
        %3870 = vst [vmem:[%s201 + $0x26a0] sm:$0xff] %v2846
        %3871 = vst [vmem:[%s201 + $0x26b8] sm:$0xff] %v2847
        %3872 = vst [vmem:[%s201 + $0x26d0] sm:$0xff] %v2848
        %3873 = vst [vmem:[%s201 + $0x26e8] sm:$0xff] %v2849
        %3874 = vst [vmem:[%s201 + $0x2700] sm:$0xff] %v2850
        %3875 = vst [vmem:[%s201 + $0x2718] sm:$0xff] %v2851
        %3876 = vst [vmem:[%s201 + $0x2730] sm:$0xff] %v2852
        %3877 = vst [vmem:[%s201 + $0x2748] sm:$0xff] %v2853
        %3878 = vst [vmem:[%s201 + $0x2760] sm:$0xff] %v2854
        %3879 = vst [vmem:[%s201 + $0x2778] sm:$0xff] %v2855
        %3880 = vst [vmem:[%s201 + $0x2790] sm:$0xff] %v2856
        %3881 = vst [vmem:[%s201 + $0x27a8] sm:$0xff] %v2857
        %3882 = vst [vmem:[%s201 + $0x27c0] sm:$0xff] %v2858
        %3883 = vst [vmem:[%s201 + $0x27d8] sm:$0xff] %v2859
        %3884 = vst [vmem:[%s201 + $0x27f0] sm:$0xff] %v2860
        %3885 = vst [vmem:[%s201 + $0x2808] sm:$0xff] %v2861
        %3886 = vst [vmem:[%s201 + $0x2820] sm:$0xff] %v2862
        %3887 = vst [vmem:[%s201 + $0x2838] sm:$0xff] %v2863
        %3888 = vst [vmem:[%s201 + $0x2850] sm:$0xff] %v2864
        %3889 = vst [vmem:[%s201 + $0x2868] sm:$0xff] %v2865
        %3890 = vst [vmem:[%s201 + $0x2880] sm:$0xff] %v2866
        %3891 = vst [vmem:[%s201 + $0x2898] sm:$0xff] %v2867
        %3892 = vst [vmem:[%s201 + $0x28b0] sm:$0xff] %v2868
        %3893 = vst [vmem:[%s201 + $0x28c8] sm:$0xff] %v2869
        %3894 = vst [vmem:[%s201 + $0x28e0] sm:$0xff] %v2870
        %3895 = vst [vmem:[%s201 + $0x28f8] sm:$0xff] %v2871
        %3896 = vst [vmem:[%s201 + $0x2910] sm:$0xff] %v2872
        %3897 = vst [vmem:[%s201 + $0x2928] sm:$0xff] %v2873
        %3898 = vst [vmem:[%s201 + $0x2940] sm:$0xff] %v2874
        %3899 = vst [vmem:[%s201 + $0x2958] sm:$0xff] %v2875
        %3900 = vst [vmem:[%s201 + $0x2970] sm:$0xff] %v2876
        %3901 = vst [vmem:[%s201 + $0x2988] sm:$0xff] %v2877
        %3902 = vst [vmem:[%s201 + $0x29a0] sm:$0xff] %v2878
        %3903 = vst [vmem:[%s201 + $0x29b8] sm:$0xff] %v2879
        %3904 = vst [vmem:[%s201 + $0x29d0] sm:$0xff] %v2880
        %3905 = vst [vmem:[%s201 + $0x29e8] sm:$0xff] %v2881
        %3906 = vst [vmem:[%s201 + $0x2a00] sm:$0xff] %v2882
        %3907 = vst [vmem:[%s201 + $0x2a18] sm:$0xff] %v2883
        %3908 = vst [vmem:[%s201 + $0x2a30] sm:$0xff] %v2884
        %3909 = vst [vmem:[%s201 + $0x2a48] sm:$0xff] %v2885
        %3910 = vst [vmem:[%s201 + $0x2a60] sm:$0xff] %v2886
        %3911 = vst [vmem:[%s201 + $0x2a78] sm:$0xff] %v2887
        %3912 = vst [vmem:[%s201 + $0x2a90] sm:$0xff] %v2888
        %3913 = vst [vmem:[%s201 + $0x2aa8] sm:$0xff] %v2889
        %3914 = vst [vmem:[%s201 + $0x2ac0] sm:$0xff] %v2890
        %3915 = vst [vmem:[%s201 + $0x2ad8] sm:$0xff] %v2891
        %3916 = vst [vmem:[%s201 + $0x2af0] sm:$0xff] %v2892
        %3917 = vst [vmem:[%s201 + $0x2b08] sm:$0xff] %v2893
        %3918 = vst [vmem:[%s201 + $0x2b20] sm:$0xff] %v2894
        %3919 = vst [vmem:[%s201 + $0x2b38] sm:$0xff] %v2895
        %3920 = vst [vmem:[%s201 + $0x2b50] sm:$0xff] %v2896
        %3921 = vst [vmem:[%s201 + $0x2b68] sm:$0xff] %v2897
        %3922 = vst [vmem:[%s201 + $0x2b80] sm:$0xff] %v2898
        %3923 = vst [vmem:[%s201 + $0x2b98] sm:$0xff] %v2899
        %3924 = vst [vmem:[%s201 + $0x2bb0] sm:$0xff] %v2900
        %3925 = vst [vmem:[%s201 + $0x2bc8] sm:$0xff] %v2901
        %3926 = vst [vmem:[%s201 + $0x2be0] sm:$0xff] %v2902
        %3927 = vst [vmem:[%s201 + $0x2bf8] sm:$0xff] %v2903
        %3928 = vst [vmem:[%s201 + $0x2c10] sm:$0xff] %v2904
        %3929 = vst [vmem:[%s201 + $0x2c28] sm:$0xff] %v2905
        %3930 = vst [vmem:[%s201 + $0x2c40] sm:$0xff] %v2906
        %3931 = vst [vmem:[%s201 + $0x2c58] sm:$0xff] %v2907
        %3932 = vst [vmem:[%s201 + $0x2c70] sm:$0xff] %v2908
        %3933 = vst [vmem:[%s201 + $0x2c88] sm:$0xff] %v2909
        %3934 = vst [vmem:[%s201 + $0x2ca0] sm:$0xff] %v2910
        %3935 = vst [vmem:[%s201 + $0x2cb8] sm:$0xff] %v2911
        %3936 = vst [vmem:[%s201 + $0x2cd0] sm:$0xff] %v2912
        %3937 = vst [vmem:[%s201 + $0x2ce8] sm:$0xff] %v2913
        %3938 = vst [vmem:[%s201 + $0x2d00] sm:$0xff] %v2914
        %3939 = vst [vmem:[%s201 + $0x2d18] sm:$0xff] %v2915
        %3940 = vst [vmem:[%s201 + $0x2d30] sm:$0xff] %v2916
        %3941 = vst [vmem:[%s201 + $0x2d48] sm:$0xff] %v2917
        %3942 = vst [vmem:[%s201 + $0x2d60] sm:$0xff] %v2918
        %3943 = vst [vmem:[%s201 + $0x2d78] sm:$0xff] %v2919
        %3944 = vst [vmem:[%s201 + $0x2d90] sm:$0xff] %v2920
        %3945 = vst [vmem:[%s201 + $0x2da8] sm:$0xff] %v2921
        %3946 = vst [vmem:[%s201 + $0x2dc0] sm:$0xff] %v2922
        %3947 = vst [vmem:[%s201 + $0x2dd8] sm:$0xff] %v2923
        %3948 = vst [vmem:[%s201 + $0x2df0] sm:$0xff] %v2924
        %3949 = vst [vmem:[%s201 + $0x2e08] sm:$0xff] %v2925
        %3950 = vst [vmem:[%s201 + $0x2e20] sm:$0xff] %v2926
        %3951 = vst [vmem:[%s201 + $0x2e38] sm:$0xff] %v2927
        %3952 = vst [vmem:[%s201 + $0x2e50] sm:$0xff] %v2928
        %3953 = vst [vmem:[%s201 + $0x2e68] sm:$0xff] %v2929
        %3954 = vst [vmem:[%s201 + $0x2e80] sm:$0xff] %v2930
        %3955 = vst [vmem:[%s201 + $0x2e98] sm:$0xff] %v2931
        %3956 = vst [vmem:[%s201 + $0x2eb0] sm:$0xff] %v2932
        %3957 = vst [vmem:[%s201 + $0x2ec8] sm:$0xff] %v2933
        %3958 = vst [vmem:[%s201 + $0x2ee0] sm:$0xff] %v2934
        %3959 = vst [vmem:[%s201 + $0x2ef8] sm:$0xff] %v2935
        %3960 = vst [vmem:[%s201 + $0x2f10] sm:$0xff] %v2936
        %3961 = vst [vmem:[%s201 + $0x2f28] sm:$0xff] %v2937
        %3962 = vst [vmem:[%s201 + $0x2f40] sm:$0xff] %v2938
        %3963 = vst [vmem:[%s201 + $0x2f58] sm:$0xff] %v2939
        %3964 = vst [vmem:[%s201 + $0x2f70] sm:$0xff] %v2940
        %3965 = vst [vmem:[%s201 + $0x2f88] sm:$0xff] %v2941
        %3966 = vst [vmem:[%s201 + $0x2fa0] sm:$0xff] %v2942
        %3967 = vst [vmem:[%s201 + $0x2fb8] sm:$0xff] %v2943
        %3968 = vst [vmem:[%s201 + $0x2fd0] sm:$0xff] %v2944
        %3969 = vst [vmem:[%s201 + $0x2fe8] sm:$0xff] %v2945
        %3970 = vst [vmem:[%s201 + $0x8] sm:$0xff] %v2946
        %3971 = vst [vmem:[%s201 + $0x20] sm:$0xff] %v2947
        %3972 = vst [vmem:[%s201 + $0x38] sm:$0xff] %v2948
        %3973 = vst [vmem:[%s201 + $0x50] sm:$0xff] %v2949
        %3974 = vst [vmem:[%s201 + $0x68] sm:$0xff] %v2950
        %3975 = vst [vmem:[%s201 + $0x80] sm:$0xff] %v2951
        %3976 = vst [vmem:[%s201 + $0x98] sm:$0xff] %v2952
        %3977 = vst [vmem:[%s201 + $0xb0] sm:$0xff] %v2953
        %3978 = vst [vmem:[%s201 + $0xc8] sm:$0xff] %v2954
        %3979 = vst [vmem:[%s201 + $0xe0] sm:$0xff] %v2955
        %3980 = vst [vmem:[%s201 + $0xf8] sm:$0xff] %v2956
        %3981 = vst [vmem:[%s201 + $0x110] sm:$0xff] %v2957
        %3982 = vst [vmem:[%s201 + $0x128] sm:$0xff] %v2958
        %3983 = vst [vmem:[%s201 + $0x140] sm:$0xff] %v2959
        %3984 = vst [vmem:[%s201 + $0x158] sm:$0xff] %v2960
        %3985 = vst [vmem:[%s201 + $0x170] sm:$0xff] %v2961
        %3986 = vst [vmem:[%s201 + $0x188] sm:$0xff] %v2962
        %3987 = vst [vmem:[%s201 + $0x1a0] sm:$0xff] %v2963
        %3988 = vst [vmem:[%s201 + $0x1b8] sm:$0xff] %v2964
        %3989 = vst [vmem:[%s201 + $0x1d0] sm:$0xff] %v2965
        %3990 = vst [vmem:[%s201 + $0x1e8] sm:$0xff] %v2966
        %3991 = vst [vmem:[%s201 + $0x200] sm:$0xff] %v2967
        %3992 = vst [vmem:[%s201 + $0x218] sm:$0xff] %v2968
        %3993 = vst [vmem:[%s201 + $0x230] sm:$0xff] %v2969
        %3994 = vst [vmem:[%s201 + $0x248] sm:$0xff] %v2970
        %3995 = vst [vmem:[%s201 + $0x260] sm:$0xff] %v2971
        %3996 = vst [vmem:[%s201 + $0x278] sm:$0xff] %v2972
        %3997 = vst [vmem:[%s201 + $0x290] sm:$0xff] %v2973
        %3998 = vst [vmem:[%s201 + $0x2a8] sm:$0xff] %v2974
        %3999 = vst [vmem:[%s201 + $0x2c0] sm:$0xff] %v2975
        %4000 = vst [vmem:[%s201 + $0x2d8] sm:$0xff] %v2976
        %4001 = vst [vmem:[%s201 + $0x2f0] sm:$0xff] %v2977
        %4002 = vst [vmem:[%s201 + $0x308] sm:$0xff] %v2978
        %4003 = vst [vmem:[%s201 + $0x320] sm:$0xff] %v2979
        %4004 = vst [vmem:[%s201 + $0x338] sm:$0xff] %v2980
        %4005 = vst [vmem:[%s201 + $0x350] sm:$0xff] %v2981
        %4006 = vst [vmem:[%s201 + $0x368] sm:$0xff] %v2982
        %4007 = vst [vmem:[%s201 + $0x380] sm:$0xff] %v2983
        %4008 = vst [vmem:[%s201 + $0x398] sm:$0xff] %v2984
        %4009 = vst [vmem:[%s201 + $0x3b0] sm:$0xff] %v2985
        %4010 = vst [vmem:[%s201 + $0x3c8] sm:$0xff] %v2986
        %4011 = vst [vmem:[%s201 + $0x3e0] sm:$0xff] %v2987
        %4012 = vst [vmem:[%s201 + $0x3f8] sm:$0xff] %v2988
        %4013 = vst [vmem:[%s201 + $0x410] sm:$0xff] %v2989
        %4014 = vst [vmem:[%s201 + $0x428] sm:$0xff] %v2990
        %4015 = vst [vmem:[%s201 + $0x440] sm:$0xff] %v2991
        %4016 = vst [vmem:[%s201 + $0x458] sm:$0xff] %v2992
        %4017 = vst [vmem:[%s201 + $0x470] sm:$0xff] %v2993
        %4018 = vst [vmem:[%s201 + $0x488] sm:$0xff] %v2994
        %4019 = vst [vmem:[%s201 + $0x4a0] sm:$0xff] %v2995
        %4020 = vst [vmem:[%s201 + $0x4b8] sm:$0xff] %v2996
        %4021 = vst [vmem:[%s201 + $0x4d0] sm:$0xff] %v2997
        %4022 = vst [vmem:[%s201 + $0x4e8] sm:$0xff] %v2998
        %4023 = vst [vmem:[%s201 + $0x500] sm:$0xff] %v2999
        %4024 = vst [vmem:[%s201 + $0x518] sm:$0xff] %v3000
        %4025 = vst [vmem:[%s201 + $0x530] sm:$0xff] %v3001
        %4026 = vst [vmem:[%s201 + $0x548] sm:$0xff] %v3002
        %4027 = vst [vmem:[%s201 + $0x560] sm:$0xff] %v3003
        %4028 = vst [vmem:[%s201 + $0x578] sm:$0xff] %v3004
        %4029 = vst [vmem:[%s201 + $0x590] sm:$0xff] %v3005
        %4030 = vst [vmem:[%s201 + $0x5a8] sm:$0xff] %v3006
        %4031 = vst [vmem:[%s201 + $0x5c0] sm:$0xff] %v3007
        %4032 = vst [vmem:[%s201 + $0x5d8] sm:$0xff] %v3008
        %4033 = vst [vmem:[%s201 + $0x5f0] sm:$0xff] %v3009
        %4034 = vst [vmem:[%s201 + $0x608] sm:$0xff] %v3010
        %4035 = vst [vmem:[%s201 + $0x620] sm:$0xff] %v3011
        %4036 = vst [vmem:[%s201 + $0x638] sm:$0xff] %v3012
        %4037 = vst [vmem:[%s201 + $0x650] sm:$0xff] %v3013
        %4038 = vst [vmem:[%s201 + $0x668] sm:$0xff] %v3014
        %4039 = vst [vmem:[%s201 + $0x680] sm:$0xff] %v3015
        %4040 = vst [vmem:[%s201 + $0x698] sm:$0xff] %v3016
        %4041 = vst [vmem:[%s201 + $0x6b0] sm:$0xff] %v3017
        %4042 = vst [vmem:[%s201 + $0x6c8] sm:$0xff] %v3018
        %4043 = vst [vmem:[%s201 + $0x6e0] sm:$0xff] %v3019
        %4044 = vst [vmem:[%s201 + $0x6f8] sm:$0xff] %v3020
        %4045 = vst [vmem:[%s201 + $0x710] sm:$0xff] %v3021
        %4046 = vst [vmem:[%s201 + $0x728] sm:$0xff] %v3022
        %4047 = vst [vmem:[%s201 + $0x740] sm:$0xff] %v3023
        %4048 = vst [vmem:[%s201 + $0x758] sm:$0xff] %v3024
        %4049 = vst [vmem:[%s201 + $0x770] sm:$0xff] %v3025
        %4050 = vst [vmem:[%s201 + $0x788] sm:$0xff] %v3026
        %4051 = vst [vmem:[%s201 + $0x7a0] sm:$0xff] %v3027
        %4052 = vst [vmem:[%s201 + $0x7b8] sm:$0xff] %v3028
        %4053 = vst [vmem:[%s201 + $0x7d0] sm:$0xff] %v3029
        %4054 = vst [vmem:[%s201 + $0x7e8] sm:$0xff] %v3030
        %4055 = vst [vmem:[%s201 + $0x800] sm:$0xff] %v3031
        %4056 = vst [vmem:[%s201 + $0x818] sm:$0xff] %v3032
        %4057 = vst [vmem:[%s201 + $0x830] sm:$0xff] %v3033
        %4058 = vst [vmem:[%s201 + $0x848] sm:$0xff] %v3034
        %4059 = vst [vmem:[%s201 + $0x860] sm:$0xff] %v3035
        %4060 = vst [vmem:[%s201 + $0x878] sm:$0xff] %v3036
        %4061 = vst [vmem:[%s201 + $0x890] sm:$0xff] %v3037
        %4062 = vst [vmem:[%s201 + $0x8a8] sm:$0xff] %v3038
        %4063 = vst [vmem:[%s201 + $0x8c0] sm:$0xff] %v3039
        %4064 = vst [vmem:[%s201 + $0x8d8] sm:$0xff] %v3040
        %4065 = vst [vmem:[%s201 + $0x8f0] sm:$0xff] %v3041
        %4066 = vst [vmem:[%s201 + $0x908] sm:$0xff] %v3042
        %4067 = vst [vmem:[%s201 + $0x920] sm:$0xff] %v3043
        %4068 = vst [vmem:[%s201 + $0x938] sm:$0xff] %v3044
        %4069 = vst [vmem:[%s201 + $0x950] sm:$0xff] %v3045
        %4070 = vst [vmem:[%s201 + $0x968] sm:$0xff] %v3046
        %4071 = vst [vmem:[%s201 + $0x980] sm:$0xff] %v3047
        %4072 = vst [vmem:[%s201 + $0x998] sm:$0xff] %v3048
        %4073 = vst [vmem:[%s201 + $0x9b0] sm:$0xff] %v3049
        %4074 = vst [vmem:[%s201 + $0x9c8] sm:$0xff] %v3050
        %4075 = vst [vmem:[%s201 + $0x9e0] sm:$0xff] %v3051
        %4076 = vst [vmem:[%s201 + $0x9f8] sm:$0xff] %v3052
        %4077 = vst [vmem:[%s201 + $0xa10] sm:$0xff] %v3053
        %4078 = vst [vmem:[%s201 + $0xa28] sm:$0xff] %v3054
        %4079 = vst [vmem:[%s201 + $0xa40] sm:$0xff] %v3055
        %4080 = vst [vmem:[%s201 + $0xa58] sm:$0xff] %v3056
        %4081 = vst [vmem:[%s201 + $0xa70] sm:$0xff] %v3057
        %4082 = vst [vmem:[%s201 + $0xa88] sm:$0xff] %v3058
        %4083 = vst [vmem:[%s201 + $0xaa0] sm:$0xff] %v3059
        %4084 = vst [vmem:[%s201 + $0xab8] sm:$0xff] %v3060
        %4085 = vst [vmem:[%s201 + $0xad0] sm:$0xff] %v3061
        %4086 = vst [vmem:[%s201 + $0xae8] sm:$0xff] %v3062
        %4087 = vst [vmem:[%s201 + $0xb00] sm:$0xff] %v3063
        %4088 = vst [vmem:[%s201 + $0xb18] sm:$0xff] %v3064
        %4089 = vst [vmem:[%s201 + $0xb30] sm:$0xff] %v3065
        %4090 = vst [vmem:[%s201 + $0xb48] sm:$0xff] %v3066
        %4091 = vst [vmem:[%s201 + $0xb60] sm:$0xff] %v3067
        %4092 = vst [vmem:[%s201 + $0xb78] sm:$0xff] %v3068
        %4093 = vst [vmem:[%s201 + $0xb90] sm:$0xff] %v3069
        %4094 = vst [vmem:[%s201 + $0xba8] sm:$0xff] %v3070
        %4095 = vst [vmem:[%s201 + $0xbc0] sm:$0xff] %v3071
        %4096 = vst [vmem:[%s201 + $0xbd8] sm:$0xff] %v3072
        %4097 = vst [vmem:[%s201 + $0xbf0] sm:$0xff] %v3073
        %4098 = vst [vmem:[%s201 + $0xc08] sm:$0xff] %v3074
        %4099 = vst [vmem:[%s201 + $0xc20] sm:$0xff] %v3075
        %4100 = vst [vmem:[%s201 + $0xc38] sm:$0xff] %v3076
        %4101 = vst [vmem:[%s201 + $0xc50] sm:$0xff] %v3077
        %4102 = vst [vmem:[%s201 + $0xc68] sm:$0xff] %v3078
        %4103 = vst [vmem:[%s201 + $0xc80] sm:$0xff] %v3079
        %4104 = vst [vmem:[%s201 + $0xc98] sm:$0xff] %v3080
        %4105 = vst [vmem:[%s201 + $0xcb0] sm:$0xff] %v3081
        %4106 = vst [vmem:[%s201 + $0xcc8] sm:$0xff] %v3082
        %4107 = vst [vmem:[%s201 + $0xce0] sm:$0xff] %v3083
        %4108 = vst [vmem:[%s201 + $0xcf8] sm:$0xff] %v3084
        %4109 = vst [vmem:[%s201 + $0xd10] sm:$0xff] %v3085
        %4110 = vst [vmem:[%s201 + $0xd28] sm:$0xff] %v3086
        %4111 = vst [vmem:[%s201 + $0xd40] sm:$0xff] %v3087
        %4112 = vst [vmem:[%s201 + $0xd58] sm:$0xff] %v3088
        %4113 = vst [vmem:[%s201 + $0xd70] sm:$0xff] %v3089
        %4114 = vst [vmem:[%s201 + $0xd88] sm:$0xff] %v3090
        %4115 = vst [vmem:[%s201 + $0xda0] sm:$0xff] %v3091
        %4116 = vst [vmem:[%s201 + $0xdb8] sm:$0xff] %v3092
        %4117 = vst [vmem:[%s201 + $0xdd0] sm:$0xff] %v3093
        %4118 = vst [vmem:[%s201 + $0xde8] sm:$0xff] %v3094
        %4119 = vst [vmem:[%s201 + $0xe00] sm:$0xff] %v3095
        %4120 = vst [vmem:[%s201 + $0xe18] sm:$0xff] %v3096
        %4121 = vst [vmem:[%s201 + $0xe30] sm:$0xff] %v3097
        %4122 = vst [vmem:[%s201 + $0xe48] sm:$0xff] %v3098
        %4123 = vst [vmem:[%s201 + $0xe60] sm:$0xff] %v3099
        %4124 = vst [vmem:[%s201 + $0xe78] sm:$0xff] %v3100
        %4125 = vst [vmem:[%s201 + $0xe90] sm:$0xff] %v3101
        %4126 = vst [vmem:[%s201 + $0xea8] sm:$0xff] %v3102
        %4127 = vst [vmem:[%s201 + $0xec0] sm:$0xff] %v3103
        %4128 = vst [vmem:[%s201 + $0xed8] sm:$0xff] %v3104
        %4129 = vst [vmem:[%s201 + $0xef0] sm:$0xff] %v3105
        %4130 = vst [vmem:[%s201 + $0xf08] sm:$0xff] %v3106
        %4131 = vst [vmem:[%s201 + $0xf20] sm:$0xff] %v3107
        %4132 = vst [vmem:[%s201 + $0xf38] sm:$0xff] %v3108
        %4133 = vst [vmem:[%s201 + $0xf50] sm:$0xff] %v3109
        %4134 = vst [vmem:[%s201 + $0xf68] sm:$0xff] %v3110
        %4135 = vst [vmem:[%s201 + $0xf80] sm:$0xff] %v3111
        %4136 = vst [vmem:[%s201 + $0xf98] sm:$0xff] %v3112
        %4137 = vst [vmem:[%s201 + $0xfb0] sm:$0xff] %v3113
        %4138 = vst [vmem:[%s201 + $0xfc8] sm:$0xff] %v3114
        %4139 = vst [vmem:[%s201 + $0xfe0] sm:$0xff] %v3115
        %4140 = vst [vmem:[%s201 + $0xff8] sm:$0xff] %v3116
        %4141 = vst [vmem:[%s201 + $0x1010] sm:$0xff] %v3117
        %4142 = vst [vmem:[%s201 + $0x1028] sm:$0xff] %v3118
        %4143 = vst [vmem:[%s201 + $0x1040] sm:$0xff] %v3119
        %4144 = vst [vmem:[%s201 + $0x1058] sm:$0xff] %v3120
        %4145 = vst [vmem:[%s201 + $0x1070] sm:$0xff] %v3121
        %4146 = vst [vmem:[%s201 + $0x1088] sm:$0xff] %v3122
        %4147 = vst [vmem:[%s201 + $0x10a0] sm:$0xff] %v3123
        %4148 = vst [vmem:[%s201 + $0x10b8] sm:$0xff] %v3124
        %4149 = vst [vmem:[%s201 + $0x10d0] sm:$0xff] %v3125
        %4150 = vst [vmem:[%s201 + $0x10e8] sm:$0xff] %v3126
        %4151 = vst [vmem:[%s201 + $0x1100] sm:$0xff] %v3127
        %4152 = vst [vmem:[%s201 + $0x1118] sm:$0xff] %v3128
        %4153 = vst [vmem:[%s201 + $0x1130] sm:$0xff] %v3129
        %4154 = vst [vmem:[%s201 + $0x1148] sm:$0xff] %v3130
        %4155 = vst [vmem:[%s201 + $0x1160] sm:$0xff] %v3131
        %4156 = vst [vmem:[%s201 + $0x1178] sm:$0xff] %v3132
        %4157 = vst [vmem:[%s201 + $0x1190] sm:$0xff] %v3133
        %4158 = vst [vmem:[%s201 + $0x11a8] sm:$0xff] %v3134
        %4159 = vst [vmem:[%s201 + $0x11c0] sm:$0xff] %v3135
        %4160 = vst [vmem:[%s201 + $0x11d8] sm:$0xff] %v3136
        %4161 = vst [vmem:[%s201 + $0x11f0] sm:$0xff] %v3137
        %4162 = vst [vmem:[%s201 + $0x1208] sm:$0xff] %v3138
        %4163 = vst [vmem:[%s201 + $0x1220] sm:$0xff] %v3139
        %4164 = vst [vmem:[%s201 + $0x1238] sm:$0xff] %v3140
        %4165 = vst [vmem:[%s201 + $0x1250] sm:$0xff] %v3141
        %4166 = vst [vmem:[%s201 + $0x1268] sm:$0xff] %v3142
        %4167 = vst [vmem:[%s201 + $0x1280] sm:$0xff] %v3143
        %4168 = vst [vmem:[%s201 + $0x1298] sm:$0xff] %v3144
        %4169 = vst [vmem:[%s201 + $0x12b0] sm:$0xff] %v3145
        %4170 = vst [vmem:[%s201 + $0x12c8] sm:$0xff] %v3146
        %4171 = vst [vmem:[%s201 + $0x12e0] sm:$0xff] %v3147
        %4172 = vst [vmem:[%s201 + $0x12f8] sm:$0xff] %v3148
        %4173 = vst [vmem:[%s201 + $0x1310] sm:$0xff] %v3149
        %4174 = vst [vmem:[%s201 + $0x1328] sm:$0xff] %v3150
        %4175 = vst [vmem:[%s201 + $0x1340] sm:$0xff] %v3151
        %4176 = vst [vmem:[%s201 + $0x1358] sm:$0xff] %v3152
        %4177 = vst [vmem:[%s201 + $0x1370] sm:$0xff] %v3153
        %4178 = vst [vmem:[%s201 + $0x1388] sm:$0xff] %v3154
        %4179 = vst [vmem:[%s201 + $0x13a0] sm:$0xff] %v3155
        %4180 = vst [vmem:[%s201 + $0x13b8] sm:$0xff] %v3156
        %4181 = vst [vmem:[%s201 + $0x13d0] sm:$0xff] %v3157
        %4182 = vst [vmem:[%s201 + $0x13e8] sm:$0xff] %v3158
        %4183 = vst [vmem:[%s201 + $0x1400] sm:$0xff] %v3159
        %4184 = vst [vmem:[%s201 + $0x1418] sm:$0xff] %v3160
        %4185 = vst [vmem:[%s201 + $0x1430] sm:$0xff] %v3161
        %4186 = vst [vmem:[%s201 + $0x1448] sm:$0xff] %v3162
        %4187 = vst [vmem:[%s201 + $0x1460] sm:$0xff] %v3163
        %4188 = vst [vmem:[%s201 + $0x1478] sm:$0xff] %v3164
        %4189 = vst [vmem:[%s201 + $0x1490] sm:$0xff] %v3165
        %4190 = vst [vmem:[%s201 + $0x14a8] sm:$0xff] %v3166
        %4191 = vst [vmem:[%s201 + $0x14c0] sm:$0xff] %v3167
        %4192 = vst [vmem:[%s201 + $0x14d8] sm:$0xff] %v3168
        %4193 = vst [vmem:[%s201 + $0x14f0] sm:$0xff] %v3169
        %4194 = vst [vmem:[%s201 + $0x1508] sm:$0xff] %v3170
        %4195 = vst [vmem:[%s201 + $0x1520] sm:$0xff] %v3171
        %4196 = vst [vmem:[%s201 + $0x1538] sm:$0xff] %v3172
        %4197 = vst [vmem:[%s201 + $0x1550] sm:$0xff] %v3173
        %4198 = vst [vmem:[%s201 + $0x1568] sm:$0xff] %v3174
        %4199 = vst [vmem:[%s201 + $0x1580] sm:$0xff] %v3175
        %4200 = vst [vmem:[%s201 + $0x1598] sm:$0xff] %v3176
        %4201 = vst [vmem:[%s201 + $0x15b0] sm:$0xff] %v3177
        %4202 = vst [vmem:[%s201 + $0x15c8] sm:$0xff] %v3178
        %4203 = vst [vmem:[%s201 + $0x15e0] sm:$0xff] %v3179
        %4204 = vst [vmem:[%s201 + $0x15f8] sm:$0xff] %v3180
        %4205 = vst [vmem:[%s201 + $0x1610] sm:$0xff] %v3181
        %4206 = vst [vmem:[%s201 + $0x1628] sm:$0xff] %v3182
        %4207 = vst [vmem:[%s201 + $0x1640] sm:$0xff] %v3183
        %4208 = vst [vmem:[%s201 + $0x1658] sm:$0xff] %v3184
        %4209 = vst [vmem:[%s201 + $0x1670] sm:$0xff] %v3185
        %4210 = vst [vmem:[%s201 + $0x1688] sm:$0xff] %v3186
        %4211 = vst [vmem:[%s201 + $0x16a0] sm:$0xff] %v3187
        %4212 = vst [vmem:[%s201 + $0x16b8] sm:$0xff] %v3188
        %4213 = vst [vmem:[%s201 + $0x16d0] sm:$0xff] %v3189
        %4214 = vst [vmem:[%s201 + $0x16e8] sm:$0xff] %v3190
        %4215 = vst [vmem:[%s201 + $0x1700] sm:$0xff] %v3191
        %4216 = vst [vmem:[%s201 + $0x1718] sm:$0xff] %v3192
        %4217 = vst [vmem:[%s201 + $0x1730] sm:$0xff] %v3193
        %4218 = vst [vmem:[%s201 + $0x1748] sm:$0xff] %v3194
        %4219 = vst [vmem:[%s201 + $0x1760] sm:$0xff] %v3195
        %4220 = vst [vmem:[%s201 + $0x1778] sm:$0xff] %v3196
        %4221 = vst [vmem:[%s201 + $0x1790] sm:$0xff] %v3197
        %4222 = vst [vmem:[%s201 + $0x17a8] sm:$0xff] %v3198
        %4223 = vst [vmem:[%s201 + $0x17c0] sm:$0xff] %v3199
        %4224 = vst [vmem:[%s201 + $0x17d8] sm:$0xff] %v3200
        %4225 = vst [vmem:[%s201 + $0x17f0] sm:$0xff] %v3201
        %4226 = vst [vmem:[%s201 + $0x1808] sm:$0xff] %v3202
        %4227 = vst [vmem:[%s201 + $0x1820] sm:$0xff] %v3203
        %4228 = vst [vmem:[%s201 + $0x1838] sm:$0xff] %v3204
        %4229 = vst [vmem:[%s201 + $0x1850] sm:$0xff] %v3205
        %4230 = vst [vmem:[%s201 + $0x1868] sm:$0xff] %v3206
        %4231 = vst [vmem:[%s201 + $0x1880] sm:$0xff] %v3207
        %4232 = vst [vmem:[%s201 + $0x1898] sm:$0xff] %v3208
        %4233 = vst [vmem:[%s201 + $0x18b0] sm:$0xff] %v3209
        %4234 = vst [vmem:[%s201 + $0x18c8] sm:$0xff] %v3210
        %4235 = vst [vmem:[%s201 + $0x18e0] sm:$0xff] %v3211
        %4236 = vst [vmem:[%s201 + $0x18f8] sm:$0xff] %v3212
        %4237 = vst [vmem:[%s201 + $0x1910] sm:$0xff] %v3213
        %4238 = vst [vmem:[%s201 + $0x1928] sm:$0xff] %v3214
        %4239 = vst [vmem:[%s201 + $0x1940] sm:$0xff] %v3215
        %4240 = vst [vmem:[%s201 + $0x1958] sm:$0xff] %v3216
        %4241 = vst [vmem:[%s201 + $0x1970] sm:$0xff] %v3217
        %4242 = vst [vmem:[%s201 + $0x1988] sm:$0xff] %v3218
        %4243 = vst [vmem:[%s201 + $0x19a0] sm:$0xff] %v3219
        %4244 = vst [vmem:[%s201 + $0x19b8] sm:$0xff] %v3220
        %4245 = vst [vmem:[%s201 + $0x19d0] sm:$0xff] %v3221
        %4246 = vst [vmem:[%s201 + $0x19e8] sm:$0xff] %v3222
        %4247 = vst [vmem:[%s201 + $0x1a00] sm:$0xff] %v3223
        %4248 = vst [vmem:[%s201 + $0x1a18] sm:$0xff] %v3224
        %4249 = vst [vmem:[%s201 + $0x1a30] sm:$0xff] %v3225
        %4250 = vst [vmem:[%s201 + $0x1a48] sm:$0xff] %v3226
        %4251 = vst [vmem:[%s201 + $0x1a60] sm:$0xff] %v3227
        %4252 = vst [vmem:[%s201 + $0x1a78] sm:$0xff] %v3228
        %4253 = vst [vmem:[%s201 + $0x1a90] sm:$0xff] %v3229
        %4254 = vst [vmem:[%s201 + $0x1aa8] sm:$0xff] %v3230
        %4255 = vst [vmem:[%s201 + $0x1ac0] sm:$0xff] %v3231
        %4256 = vst [vmem:[%s201 + $0x1ad8] sm:$0xff] %v3232
        %4257 = vst [vmem:[%s201 + $0x1af0] sm:$0xff] %v3233
        %4258 = vst [vmem:[%s201 + $0x1b08] sm:$0xff] %v3234
        %4259 = vst [vmem:[%s201 + $0x1b20] sm:$0xff] %v3235
        %4260 = vst [vmem:[%s201 + $0x1b38] sm:$0xff] %v3236
        %4261 = vst [vmem:[%s201 + $0x1b50] sm:$0xff] %v3237
        %4262 = vst [vmem:[%s201 + $0x1b68] sm:$0xff] %v3238
        %4263 = vst [vmem:[%s201 + $0x1b80] sm:$0xff] %v3239
        %4264 = vst [vmem:[%s201 + $0x1b98] sm:$0xff] %v3240
        %4265 = vst [vmem:[%s201 + $0x1bb0] sm:$0xff] %v3241
        %4266 = vst [vmem:[%s201 + $0x1bc8] sm:$0xff] %v3242
        %4267 = vst [vmem:[%s201 + $0x1be0] sm:$0xff] %v3243
        %4268 = vst [vmem:[%s201 + $0x1bf8] sm:$0xff] %v3244
        %4269 = vst [vmem:[%s201 + $0x1c10] sm:$0xff] %v3245
        %4270 = vst [vmem:[%s201 + $0x1c28] sm:$0xff] %v3246
        %4271 = vst [vmem:[%s201 + $0x1c40] sm:$0xff] %v3247
        %4272 = vst [vmem:[%s201 + $0x1c58] sm:$0xff] %v3248
        %4273 = vst [vmem:[%s201 + $0x1c70] sm:$0xff] %v3249
        %4274 = vst [vmem:[%s201 + $0x1c88] sm:$0xff] %v3250
        %4275 = vst [vmem:[%s201 + $0x1ca0] sm:$0xff] %v3251
        %4276 = vst [vmem:[%s201 + $0x1cb8] sm:$0xff] %v3252
        %4277 = vst [vmem:[%s201 + $0x1cd0] sm:$0xff] %v3253
        %4278 = vst [vmem:[%s201 + $0x1ce8] sm:$0xff] %v3254
        %4279 = vst [vmem:[%s201 + $0x1d00] sm:$0xff] %v3255
        %4280 = vst [vmem:[%s201 + $0x1d18] sm:$0xff] %v3256
        %4281 = vst [vmem:[%s201 + $0x1d30] sm:$0xff] %v3257
        %4282 = vst [vmem:[%s201 + $0x1d48] sm:$0xff] %v3258
        %4283 = vst [vmem:[%s201 + $0x1d60] sm:$0xff] %v3259
        %4284 = vst [vmem:[%s201 + $0x1d78] sm:$0xff] %v3260
        %4285 = vst [vmem:[%s201 + $0x1d90] sm:$0xff] %v3261
        %4286 = vst [vmem:[%s201 + $0x1da8] sm:$0xff] %v3262
        %4287 = vst [vmem:[%s201 + $0x1dc0] sm:$0xff] %v3263
        %4288 = vst [vmem:[%s201 + $0x1dd8] sm:$0xff] %v3264
        %4289 = vst [vmem:[%s201 + $0x1df0] sm:$0xff] %v3265
        %4290 = vst [vmem:[%s201 + $0x1e08] sm:$0xff] %v3266
        %4291 = vst [vmem:[%s201 + $0x1e20] sm:$0xff] %v3267
        %4292 = vst [vmem:[%s201 + $0x1e38] sm:$0xff] %v3268
        %4293 = vst [vmem:[%s201 + $0x1e50] sm:$0xff] %v3269
        %4294 = vst [vmem:[%s201 + $0x1e68] sm:$0xff] %v3270
        %4295 = vst [vmem:[%s201 + $0x1e80] sm:$0xff] %v3271
        %4296 = vst [vmem:[%s201 + $0x1e98] sm:$0xff] %v3272
        %4297 = vst [vmem:[%s201 + $0x1eb0] sm:$0xff] %v3273
        %4298 = vst [vmem:[%s201 + $0x1ec8] sm:$0xff] %v3274
        %4299 = vst [vmem:[%s201 + $0x1ee0] sm:$0xff] %v3275
        %4300 = vst [vmem:[%s201 + $0x1ef8] sm:$0xff] %v3276
        %4301 = vst [vmem:[%s201 + $0x1f10] sm:$0xff] %v3277
        %4302 = vst [vmem:[%s201 + $0x1f28] sm:$0xff] %v3278
        %4303 = vst [vmem:[%s201 + $0x1f40] sm:$0xff] %v3279
        %4304 = vst [vmem:[%s201 + $0x1f58] sm:$0xff] %v3280
        %4305 = vst [vmem:[%s201 + $0x1f70] sm:$0xff] %v3281
        %4306 = vst [vmem:[%s201 + $0x1f88] sm:$0xff] %v3282
        %4307 = vst [vmem:[%s201 + $0x1fa0] sm:$0xff] %v3283
        %4308 = vst [vmem:[%s201 + $0x1fb8] sm:$0xff] %v3284
        %4309 = vst [vmem:[%s201 + $0x1fd0] sm:$0xff] %v3285
        %4310 = vst [vmem:[%s201 + $0x1fe8] sm:$0xff] %v3286
        %4311 = vst [vmem:[%s201 + $0x2000] sm:$0xff] %v3287
        %4312 = vst [vmem:[%s201 + $0x2018] sm:$0xff] %v3288
        %4313 = vst [vmem:[%s201 + $0x2030] sm:$0xff] %v3289
        %4314 = vst [vmem:[%s201 + $0x2048] sm:$0xff] %v3290
        %4315 = vst [vmem:[%s201 + $0x2060] sm:$0xff] %v3291
        %4316 = vst [vmem:[%s201 + $0x2078] sm:$0xff] %v3292
        %4317 = vst [vmem:[%s201 + $0x2090] sm:$0xff] %v3293
        %4318 = vst [vmem:[%s201 + $0x20a8] sm:$0xff] %v3294
        %4319 = vst [vmem:[%s201 + $0x20c0] sm:$0xff] %v3295
        %4320 = vst [vmem:[%s201 + $0x20d8] sm:$0xff] %v3296
        %4321 = vst [vmem:[%s201 + $0x20f0] sm:$0xff] %v3297
        %4322 = vst [vmem:[%s201 + $0x2108] sm:$0xff] %v3298
        %4323 = vst [vmem:[%s201 + $0x2120] sm:$0xff] %v3299
        %4324 = vst [vmem:[%s201 + $0x2138] sm:$0xff] %v3300
        %4325 = vst [vmem:[%s201 + $0x2150] sm:$0xff] %v3301
        %4326 = vst [vmem:[%s201 + $0x2168] sm:$0xff] %v3302
        %4327 = vst [vmem:[%s201 + $0x2180] sm:$0xff] %v3303
        %4328 = vst [vmem:[%s201 + $0x2198] sm:$0xff] %v3304
        %4329 = vst [vmem:[%s201 + $0x21b0] sm:$0xff] %v3305
        %4330 = vst [vmem:[%s201 + $0x21c8] sm:$0xff] %v3306
        %4331 = vst [vmem:[%s201 + $0x21e0] sm:$0xff] %v3307
        %4332 = vst [vmem:[%s201 + $0x21f8] sm:$0xff] %v3308
        %4333 = vst [vmem:[%s201 + $0x2210] sm:$0xff] %v3309
        %4334 = vst [vmem:[%s201 + $0x2228] sm:$0xff] %v3310
        %4335 = vst [vmem:[%s201 + $0x2240] sm:$0xff] %v3311
        %4336 = vst [vmem:[%s201 + $0x2258] sm:$0xff] %v3312
        %4337 = vst [vmem:[%s201 + $0x2270] sm:$0xff] %v3313
        %4338 = vst [vmem:[%s201 + $0x2288] sm:$0xff] %v3314
        %4339 = vst [vmem:[%s201 + $0x22a0] sm:$0xff] %v3315
        %4340 = vst [vmem:[%s201 + $0x22b8] sm:$0xff] %v3316
        %4341 = vst [vmem:[%s201 + $0x22d0] sm:$0xff] %v3317
        %4342 = vst [vmem:[%s201 + $0x22e8] sm:$0xff] %v3318
        %4343 = vst [vmem:[%s201 + $0x2300] sm:$0xff] %v3319
        %4344 = vst [vmem:[%s201 + $0x2318] sm:$0xff] %v3320
        %4345 = vst [vmem:[%s201 + $0x2330] sm:$0xff] %v3321
        %4346 = vst [vmem:[%s201 + $0x2348] sm:$0xff] %v3322
        %4347 = vst [vmem:[%s201 + $0x2360] sm:$0xff] %v3323
        %4348 = vst [vmem:[%s201 + $0x2378] sm:$0xff] %v3324
        %4349 = vst [vmem:[%s201 + $0x2390] sm:$0xff] %v3325
        %4350 = vst [vmem:[%s201 + $0x23a8] sm:$0xff] %v3326
        %4351 = vst [vmem:[%s201 + $0x23c0] sm:$0xff] %v3327
        %4352 = vst [vmem:[%s201 + $0x23d8] sm:$0xff] %v3328
        %4353 = vst [vmem:[%s201 + $0x23f0] sm:$0xff] %v3329
        %4354 = vst [vmem:[%s201 + $0x2408] sm:$0xff] %v3330
        %4355 = vst [vmem:[%s201 + $0x2420] sm:$0xff] %v3331
        %4356 = vst [vmem:[%s201 + $0x2438] sm:$0xff] %v3332
        %4357 = vst [vmem:[%s201 + $0x2450] sm:$0xff] %v3333
        %4358 = vst [vmem:[%s201 + $0x2468] sm:$0xff] %v3334
        %4359 = vst [vmem:[%s201 + $0x2480] sm:$0xff] %v3335
        %4360 = vst [vmem:[%s201 + $0x2498] sm:$0xff] %v3336
        %4361 = vst [vmem:[%s201 + $0x24b0] sm:$0xff] %v3337
        %4362 = vst [vmem:[%s201 + $0x24c8] sm:$0xff] %v3338
        %4363 = vst [vmem:[%s201 + $0x24e0] sm:$0xff] %v3339
        %4364 = vst [vmem:[%s201 + $0x24f8] sm:$0xff] %v3340
        %4365 = vst [vmem:[%s201 + $0x2510] sm:$0xff] %v3341
        %4366 = vst [vmem:[%s201 + $0x2528] sm:$0xff] %v3342
        %4367 = vst [vmem:[%s201 + $0x2540] sm:$0xff] %v3343
        %4368 = vst [vmem:[%s201 + $0x2558] sm:$0xff] %v3344
        %4369 = vst [vmem:[%s201 + $0x2570] sm:$0xff] %v3345
        %4370 = vst [vmem:[%s201 + $0x2588] sm:$0xff] %v3346
        %4371 = vst [vmem:[%s201 + $0x25a0] sm:$0xff] %v3347
        %4372 = vst [vmem:[%s201 + $0x25b8] sm:$0xff] %v3348
        %4373 = vst [vmem:[%s201 + $0x25d0] sm:$0xff] %v3349
        %4374 = vst [vmem:[%s201 + $0x25e8] sm:$0xff] %v3350
        %4375 = vst [vmem:[%s201 + $0x2600] sm:$0xff] %v3351
        %4376 = vst [vmem:[%s201 + $0x2618] sm:$0xff] %v3352
        %4377 = vst [vmem:[%s201 + $0x2630] sm:$0xff] %v3353
        %4378 = vst [vmem:[%s201 + $0x2648] sm:$0xff] %v3354
        %4379 = vst [vmem:[%s201 + $0x2660] sm:$0xff] %v3355
        %4380 = vst [vmem:[%s201 + $0x2678] sm:$0xff] %v3356
        %4381 = vst [vmem:[%s201 + $0x2690] sm:$0xff] %v3357
        %4382 = vst [vmem:[%s201 + $0x26a8] sm:$0xff] %v3358
        %4383 = vst [vmem:[%s201 + $0x26c0] sm:$0xff] %v3359
        %4384 = vst [vmem:[%s201 + $0x26d8] sm:$0xff] %v3360
        %4385 = vst [vmem:[%s201 + $0x26f0] sm:$0xff] %v3361
        %4386 = vst [vmem:[%s201 + $0x2708] sm:$0xff] %v3362
        %4387 = vst [vmem:[%s201 + $0x2720] sm:$0xff] %v3363
        %4388 = vst [vmem:[%s201 + $0x2738] sm:$0xff] %v3364
        %4389 = vst [vmem:[%s201 + $0x2750] sm:$0xff] %v3365
        %4390 = vst [vmem:[%s201 + $0x2768] sm:$0xff] %v3366
        %4391 = vst [vmem:[%s201 + $0x2780] sm:$0xff] %v3367
        %4392 = vst [vmem:[%s201 + $0x2798] sm:$0xff] %v3368
        %4393 = vst [vmem:[%s201 + $0x27b0] sm:$0xff] %v3369
        %4394 = vst [vmem:[%s201 + $0x27c8] sm:$0xff] %v3370
        %4395 = vst [vmem:[%s201 + $0x27e0] sm:$0xff] %v3371
        %4396 = vst [vmem:[%s201 + $0x27f8] sm:$0xff] %v3372
        %4397 = vst [vmem:[%s201 + $0x2810] sm:$0xff] %v3373
        %4398 = vst [vmem:[%s201 + $0x2828] sm:$0xff] %v3374
        %4399 = vst [vmem:[%s201 + $0x2840] sm:$0xff] %v3375
        %4400 = vst [vmem:[%s201 + $0x2858] sm:$0xff] %v3376
        %4401 = vst [vmem:[%s201 + $0x2870] sm:$0xff] %v3377
        %4402 = vst [vmem:[%s201 + $0x2888] sm:$0xff] %v3378
        %4403 = vst [vmem:[%s201 + $0x28a0] sm:$0xff] %v3379
        %4404 = vst [vmem:[%s201 + $0x28b8] sm:$0xff] %v3380
        %4405 = vst [vmem:[%s201 + $0x28d0] sm:$0xff] %v3381
        %4406 = vst [vmem:[%s201 + $0x28e8] sm:$0xff] %v3382
        %4407 = vst [vmem:[%s201 + $0x2900] sm:$0xff] %v3383
        %4408 = vst [vmem:[%s201 + $0x2918] sm:$0xff] %v3384
        %4409 = vst [vmem:[%s201 + $0x2930] sm:$0xff] %v3385
        %4410 = vst [vmem:[%s201 + $0x2948] sm:$0xff] %v3386
        %4411 = vst [vmem:[%s201 + $0x2960] sm:$0xff] %v3387
        %4412 = vst [vmem:[%s201 + $0x2978] sm:$0xff] %v3388
        %4413 = vst [vmem:[%s201 + $0x2990] sm:$0xff] %v3389
        %4414 = vst [vmem:[%s201 + $0x29a8] sm:$0xff] %v3390
        %4415 = vst [vmem:[%s201 + $0x29c0] sm:$0xff] %v3391
        %4416 = vst [vmem:[%s201 + $0x29d8] sm:$0xff] %v3392
        %4417 = vst [vmem:[%s201 + $0x29f0] sm:$0xff] %v3393
        %4418 = vst [vmem:[%s201 + $0x2a08] sm:$0xff] %v3394
        %4419 = vst [vmem:[%s201 + $0x2a20] sm:$0xff] %v3395
        %4420 = vst [vmem:[%s201 + $0x2a38] sm:$0xff] %v3396
        %4421 = vst [vmem:[%s201 + $0x2a50] sm:$0xff] %v3397
        %4422 = vst [vmem:[%s201 + $0x2a68] sm:$0xff] %v3398
        %4423 = vst [vmem:[%s201 + $0x2a80] sm:$0xff] %v3399
        %4424 = vst [vmem:[%s201 + $0x2a98] sm:$0xff] %v3400
        %4425 = vst [vmem:[%s201 + $0x2ab0] sm:$0xff] %v3401
        %4426 = vst [vmem:[%s201 + $0x2ac8] sm:$0xff] %v3402
        %4427 = vst [vmem:[%s201 + $0x2ae0] sm:$0xff] %v3403
        %4428 = vst [vmem:[%s201 + $0x2af8] sm:$0xff] %v3404
        %4429 = vst [vmem:[%s201 + $0x2b10] sm:$0xff] %v3405
        %4430 = vst [vmem:[%s201 + $0x2b28] sm:$0xff] %v3406
        %4431 = vst [vmem:[%s201 + $0x2b40] sm:$0xff] %v3407
        %4432 = vst [vmem:[%s201 + $0x2b58] sm:$0xff] %v3408
        %4433 = vst [vmem:[%s201 + $0x2b70] sm:$0xff] %v3409
        %4434 = vst [vmem:[%s201 + $0x2b88] sm:$0xff] %v3410
        %4435 = vst [vmem:[%s201 + $0x2ba0] sm:$0xff] %v3411
        %4436 = vst [vmem:[%s201 + $0x2bb8] sm:$0xff] %v3412
        %4437 = vst [vmem:[%s201 + $0x2bd0] sm:$0xff] %v3413
        %4438 = vst [vmem:[%s201 + $0x2be8] sm:$0xff] %v3414
        %4439 = vst [vmem:[%s201 + $0x2c00] sm:$0xff] %v3415
        %4440 = vst [vmem:[%s201 + $0x2c18] sm:$0xff] %v3416
        %4441 = vst [vmem:[%s201 + $0x2c30] sm:$0xff] %v3417
        %4442 = vst [vmem:[%s201 + $0x2c48] sm:$0xff] %v3418
        %4443 = vst [vmem:[%s201 + $0x2c60] sm:$0xff] %v3419
        %4444 = vst [vmem:[%s201 + $0x2c78] sm:$0xff] %v3420
        %4445 = vst [vmem:[%s201 + $0x2c90] sm:$0xff] %v3421
        %4446 = vst [vmem:[%s201 + $0x2ca8] sm:$0xff] %v3422
        %4447 = vst [vmem:[%s201 + $0x2cc0] sm:$0xff] %v3423
        %4448 = vst [vmem:[%s201 + $0x2cd8] sm:$0xff] %v3424
        %4449 = vst [vmem:[%s201 + $0x2cf0] sm:$0xff] %v3425
        %4450 = vst [vmem:[%s201 + $0x2d08] sm:$0xff] %v3426
        %4451 = vst [vmem:[%s201 + $0x2d20] sm:$0xff] %v3427
        %4452 = vst [vmem:[%s201 + $0x2d38] sm:$0xff] %v3428
        %4453 = vst [vmem:[%s201 + $0x2d50] sm:$0xff] %v3429
        %4454 = vst [vmem:[%s201 + $0x2d68] sm:$0xff] %v3430
        %4455 = vst [vmem:[%s201 + $0x2d80] sm:$0xff] %v3431
        %4456 = vst [vmem:[%s201 + $0x2d98] sm:$0xff] %v3432
        %4457 = vst [vmem:[%s201 + $0x2db0] sm:$0xff] %v3433
        %4458 = vst [vmem:[%s201 + $0x2dc8] sm:$0xff] %v3434
        %4459 = vst [vmem:[%s201 + $0x2de0] sm:$0xff] %v3435
        %4460 = vst [vmem:[%s201 + $0x2df8] sm:$0xff] %v3436
        %4461 = vst [vmem:[%s201 + $0x2e10] sm:$0xff] %v3437
        %4462 = vst [vmem:[%s201 + $0x2e28] sm:$0xff] %v3438
        %4463 = vst [vmem:[%s201 + $0x2e40] sm:$0xff] %v3439
        %4464 = vst [vmem:[%s201 + $0x2e58] sm:$0xff] %v3440
        %4465 = vst [vmem:[%s201 + $0x2e70] sm:$0xff] %v3441
        %4466 = vst [vmem:[%s201 + $0x2e88] sm:$0xff] %v3442
        %4467 = vst [vmem:[%s201 + $0x2ea0] sm:$0xff] %v3443
        %4468 = vst [vmem:[%s201 + $0x2eb8] sm:$0xff] %v3444
        %4469 = vst [vmem:[%s201 + $0x2ed0] sm:$0xff] %v3445
        %4470 = vst [vmem:[%s201 + $0x2ee8] sm:$0xff] %v3446
        %4471 = vst [vmem:[%s201 + $0x2f00] sm:$0xff] %v3447
        %4472 = vst [vmem:[%s201 + $0x2f18] sm:$0xff] %v3448
        %4473 = vst [vmem:[%s201 + $0x2f30] sm:$0xff] %v3449
        %4474 = vst [vmem:[%s201 + $0x2f48] sm:$0xff] %v3450
        %4475 = vst [vmem:[%s201 + $0x2f60] sm:$0xff] %v3451
        %4476 = vst [vmem:[%s201 + $0x2f78] sm:$0xff] %v3452
        %4477 = vst [vmem:[%s201 + $0x2f90] sm:$0xff] %v3453
        %4478 = vst [vmem:[%s201 + $0x2fa8] sm:$0xff] %v3454
        %4479 = vst [vmem:[%s201 + $0x2fc0] sm:$0xff] %v3455
        %4480 = vst [vmem:[%s201 + $0x2fd8] sm:$0xff] %v3456
        %4481 = vst [vmem:[%s201 + $0x2ff0] sm:$0xff] %v3457
        %4482 = vst [vmem:[%s201 + $0x10] sm:$0xff] %v2434
        %4483 = vst [vmem:[%s201 + $0x28] sm:$0xff] %v2435
        %4484 = vst [vmem:[%s201 + $0x40] sm:$0xff] %v2436
        %4485 = vst [vmem:[%s201 + $0x58] sm:$0xff] %v2437
        %4486 = vst [vmem:[%s201 + $0x70] sm:$0xff] %v2438
        %4487 = vst [vmem:[%s201 + $0x88] sm:$0xff] %v2439
        %4488 = vst [vmem:[%s201 + $0xa0] sm:$0xff] %v2440
        %4489 = vst [vmem:[%s201 + $0xb8] sm:$0xff] %v2441
        %4490 = vst [vmem:[%s201 + $0xd0] sm:$0xff] %v2442
        %4491 = vst [vmem:[%s201 + $0xe8] sm:$0xff] %v2443
        %4492 = vst [vmem:[%s201 + $0x100] sm:$0xff] %v2444
        %4493 = vst [vmem:[%s201 + $0x118] sm:$0xff] %v2445
        %4494 = vst [vmem:[%s201 + $0x130] sm:$0xff] %v2446
        %4495 = vst [vmem:[%s201 + $0x148] sm:$0xff] %v2447
        %4496 = vst [vmem:[%s201 + $0x160] sm:$0xff] %v2448
        %4497 = vst [vmem:[%s201 + $0x178] sm:$0xff] %v2449
        %4498 = vst [vmem:[%s201 + $0x190] sm:$0xff] %v2450
        %4499 = vst [vmem:[%s201 + $0x1a8] sm:$0xff] %v2451
        %4500 = vst [vmem:[%s201 + $0x1c0] sm:$0xff] %v2452
        %4501 = vst [vmem:[%s201 + $0x1d8] sm:$0xff] %v2453
        %4502 = vst [vmem:[%s201 + $0x1f0] sm:$0xff] %v2454
        %4503 = vst [vmem:[%s201 + $0x208] sm:$0xff] %v2455
        %4504 = vst [vmem:[%s201 + $0x220] sm:$0xff] %v2456
        %4505 = vst [vmem:[%s201 + $0x238] sm:$0xff] %v2457
        %4506 = vst [vmem:[%s201 + $0x250] sm:$0xff] %v2458
        %4507 = vst [vmem:[%s201 + $0x268] sm:$0xff] %v2459
        %4508 = vst [vmem:[%s201 + $0x280] sm:$0xff] %v2460
        %4509 = vst [vmem:[%s201 + $0x298] sm:$0xff] %v2461
        %4510 = vst [vmem:[%s201 + $0x2b0] sm:$0xff] %v2462
        %4511 = vst [vmem:[%s201 + $0x2c8] sm:$0xff] %v2463
        %4512 = vst [vmem:[%s201 + $0x2e0] sm:$0xff] %v2464
        %4513 = vst [vmem:[%s201 + $0x2f8] sm:$0xff] %v2465
        %4514 = vst [vmem:[%s201 + $0x310] sm:$0xff] %v2466
        %4515 = vst [vmem:[%s201 + $0x328] sm:$0xff] %v2467
        %4516 = vst [vmem:[%s201 + $0x340] sm:$0xff] %v2468
        %4517 = vst [vmem:[%s201 + $0x358] sm:$0xff] %v2469
        %4518 = vst [vmem:[%s201 + $0x370] sm:$0xff] %v2470
        %4519 = vst [vmem:[%s201 + $0x388] sm:$0xff] %v2471
        %4520 = vst [vmem:[%s201 + $0x3a0] sm:$0xff] %v2472
        %4521 = vst [vmem:[%s201 + $0x3b8] sm:$0xff] %v2473
        %4522 = vst [vmem:[%s201 + $0x3d0] sm:$0xff] %v2474
        %4523 = vst [vmem:[%s201 + $0x3e8] sm:$0xff] %v2475
        %4524 = vst [vmem:[%s201 + $0x400] sm:$0xff] %v2476
        %4525 = vst [vmem:[%s201 + $0x418] sm:$0xff] %v2477
        %4526 = vst [vmem:[%s201 + $0x430] sm:$0xff] %v2478
        %4527 = vst [vmem:[%s201 + $0x448] sm:$0xff] %v2479
        %4528 = vst [vmem:[%s201 + $0x460] sm:$0xff] %v2480
        %4529 = vst [vmem:[%s201 + $0x478] sm:$0xff] %v2481
        %4530 = vst [vmem:[%s201 + $0x490] sm:$0xff] %v2482
        %4531 = vst [vmem:[%s201 + $0x4a8] sm:$0xff] %v2483
        %4532 = vst [vmem:[%s201 + $0x4c0] sm:$0xff] %v2484
        %4533 = vst [vmem:[%s201 + $0x4d8] sm:$0xff] %v2485
        %4534 = vst [vmem:[%s201 + $0x4f0] sm:$0xff] %v2486
        %4535 = vst [vmem:[%s201 + $0x508] sm:$0xff] %v2487
        %4536 = vst [vmem:[%s201 + $0x520] sm:$0xff] %v2488
        %4537 = vst [vmem:[%s201 + $0x538] sm:$0xff] %v2489
        %4538 = vst [vmem:[%s201 + $0x550] sm:$0xff] %v2490
        %4539 = vst [vmem:[%s201 + $0x568] sm:$0xff] %v2491
        %4540 = vst [vmem:[%s201 + $0x580] sm:$0xff] %v2492
        %4541 = vst [vmem:[%s201 + $0x598] sm:$0xff] %v2493
        %4542 = vst [vmem:[%s201 + $0x5b0] sm:$0xff] %v2494
        %4543 = vst [vmem:[%s201 + $0x5c8] sm:$0xff] %v2495
        %4544 = vst [vmem:[%s201 + $0x5e0] sm:$0xff] %v2496
        %4545 = vst [vmem:[%s201 + $0x5f8] sm:$0xff] %v2497
        %4546 = vst [vmem:[%s201 + $0x610] sm:$0xff] %v2498
        %4547 = vst [vmem:[%s201 + $0x628] sm:$0xff] %v2499
        %4548 = vst [vmem:[%s201 + $0x640] sm:$0xff] %v2500
        %4549 = vst [vmem:[%s201 + $0x658] sm:$0xff] %v2501
        %4550 = vst [vmem:[%s201 + $0x670] sm:$0xff] %v2502
        %4551 = vst [vmem:[%s201 + $0x688] sm:$0xff] %v2503
        %4552 = vst [vmem:[%s201 + $0x6a0] sm:$0xff] %v2504
        %4553 = vst [vmem:[%s201 + $0x6b8] sm:$0xff] %v2505
        %4554 = vst [vmem:[%s201 + $0x6d0] sm:$0xff] %v2506
        %4555 = vst [vmem:[%s201 + $0x6e8] sm:$0xff] %v2507
        %4556 = vst [vmem:[%s201 + $0x700] sm:$0xff] %v2508
        %4557 = vst [vmem:[%s201 + $0x718] sm:$0xff] %v2509
        %4558 = vst [vmem:[%s201 + $0x730] sm:$0xff] %v2510
        %4559 = vst [vmem:[%s201 + $0x748] sm:$0xff] %v2511
        %4560 = vst [vmem:[%s201 + $0x760] sm:$0xff] %v2512
        %4561 = vst [vmem:[%s201 + $0x778] sm:$0xff] %v2513
        %4562 = vst [vmem:[%s201 + $0x790] sm:$0xff] %v2514
        %4563 = vst [vmem:[%s201 + $0x7a8] sm:$0xff] %v2515
        %4564 = vst [vmem:[%s201 + $0x7c0] sm:$0xff] %v2516
        %4565 = vst [vmem:[%s201 + $0x7d8] sm:$0xff] %v2517
        %4566 = vst [vmem:[%s201 + $0x7f0] sm:$0xff] %v2518
        %4567 = vst [vmem:[%s201 + $0x808] sm:$0xff] %v2519
        %4568 = vst [vmem:[%s201 + $0x820] sm:$0xff] %v2520
        %4569 = vst [vmem:[%s201 + $0x838] sm:$0xff] %v2521
        %4570 = vst [vmem:[%s201 + $0x850] sm:$0xff] %v2522
        %4571 = vst [vmem:[%s201 + $0x868] sm:$0xff] %v2523
        %4572 = vst [vmem:[%s201 + $0x880] sm:$0xff] %v2524
        %4573 = vst [vmem:[%s201 + $0x898] sm:$0xff] %v2525
        %4574 = vst [vmem:[%s201 + $0x8b0] sm:$0xff] %v2526
        %4575 = vst [vmem:[%s201 + $0x8c8] sm:$0xff] %v2527
        %4576 = vst [vmem:[%s201 + $0x8e0] sm:$0xff] %v2528
        %4577 = vst [vmem:[%s201 + $0x8f8] sm:$0xff] %v2529
        %4578 = vst [vmem:[%s201 + $0x910] sm:$0xff] %v2530
        %4579 = vst [vmem:[%s201 + $0x928] sm:$0xff] %v2531
        %4580 = vst [vmem:[%s201 + $0x940] sm:$0xff] %v2532
        %4581 = vst [vmem:[%s201 + $0x958] sm:$0xff] %v2533
        %4582 = vst [vmem:[%s201 + $0x970] sm:$0xff] %v2534
        %4583 = vst [vmem:[%s201 + $0x988] sm:$0xff] %v2535
        %4584 = vst [vmem:[%s201 + $0x9a0] sm:$0xff] %v2536
        %4585 = vst [vmem:[%s201 + $0x9b8] sm:$0xff] %v2537
        %4586 = vst [vmem:[%s201 + $0x9d0] sm:$0xff] %v2538
        %4587 = vst [vmem:[%s201 + $0x9e8] sm:$0xff] %v2539
        %4588 = vst [vmem:[%s201 + $0xa00] sm:$0xff] %v2540
        %4589 = vst [vmem:[%s201 + $0xa18] sm:$0xff] %v2541
        %4590 = vst [vmem:[%s201 + $0xa30] sm:$0xff] %v2542
        %4591 = vst [vmem:[%s201 + $0xa48] sm:$0xff] %v2543
        %4592 = vst [vmem:[%s201 + $0xa60] sm:$0xff] %v2544
        %4593 = vst [vmem:[%s201 + $0xa78] sm:$0xff] %v2545
        %4594 = vst [vmem:[%s201 + $0xa90] sm:$0xff] %v2546
        %4595 = vst [vmem:[%s201 + $0xaa8] sm:$0xff] %v2547
        %4596 = vst [vmem:[%s201 + $0xac0] sm:$0xff] %v2548
        %4597 = vst [vmem:[%s201 + $0xad8] sm:$0xff] %v2549
        %4598 = vst [vmem:[%s201 + $0xaf0] sm:$0xff] %v2550
        %4599 = vst [vmem:[%s201 + $0xb08] sm:$0xff] %v2551
        %4600 = vst [vmem:[%s201 + $0xb20] sm:$0xff] %v2552
        %4601 = vst [vmem:[%s201 + $0xb38] sm:$0xff] %v2553
        %4602 = vst [vmem:[%s201 + $0xb50] sm:$0xff] %v2554
        %4603 = vst [vmem:[%s201 + $0xb68] sm:$0xff] %v2555
        %4604 = vst [vmem:[%s201 + $0xb80] sm:$0xff] %v2556
        %4605 = vst [vmem:[%s201 + $0xb98] sm:$0xff] %v2557
        %4606 = vst [vmem:[%s201 + $0xbb0] sm:$0xff] %v2558
        %4607 = vst [vmem:[%s201 + $0xbc8] sm:$0xff] %v2559
        %4608 = vst [vmem:[%s201 + $0xbe0] sm:$0xff] %v2560
        %4609 = vst [vmem:[%s201 + $0xbf8] sm:$0xff] %v2561
        %4610 = vst [vmem:[%s201 + $0xc10] sm:$0xff] %v2562
        %4611 = vst [vmem:[%s201 + $0xc28] sm:$0xff] %v2563
        %4612 = vst [vmem:[%s201 + $0xc40] sm:$0xff] %v2564
        %4613 = vst [vmem:[%s201 + $0xc58] sm:$0xff] %v2565
        %4614 = vst [vmem:[%s201 + $0xc70] sm:$0xff] %v2566
        %4615 = vst [vmem:[%s201 + $0xc88] sm:$0xff] %v2567
        %4616 = vst [vmem:[%s201 + $0xca0] sm:$0xff] %v2568
        %4617 = vst [vmem:[%s201 + $0xcb8] sm:$0xff] %v2569
        %4618 = vst [vmem:[%s201 + $0xcd0] sm:$0xff] %v2570
        %4619 = vst [vmem:[%s201 + $0xce8] sm:$0xff] %v2571
        %4620 = vst [vmem:[%s201 + $0xd00] sm:$0xff] %v2572
        %4621 = vst [vmem:[%s201 + $0xd18] sm:$0xff] %v2573
        %4622 = vst [vmem:[%s201 + $0xd30] sm:$0xff] %v2574
        %4623 = vst [vmem:[%s201 + $0xd48] sm:$0xff] %v2575
        %4624 = vst [vmem:[%s201 + $0xd60] sm:$0xff] %v2576
        %4625 = vst [vmem:[%s201 + $0xd78] sm:$0xff] %v2577
        %4626 = vst [vmem:[%s201 + $0xd90] sm:$0xff] %v2578
        %4627 = vst [vmem:[%s201 + $0xda8] sm:$0xff] %v2579
        %4628 = vst [vmem:[%s201 + $0xdc0] sm:$0xff] %v2580
        %4629 = vst [vmem:[%s201 + $0xdd8] sm:$0xff] %v2581
        %4630 = vst [vmem:[%s201 + $0xdf0] sm:$0xff] %v2582
        %4631 = vst [vmem:[%s201 + $0xe08] sm:$0xff] %v2583
        %4632 = vst [vmem:[%s201 + $0xe20] sm:$0xff] %v2584
        %4633 = vst [vmem:[%s201 + $0xe38] sm:$0xff] %v2585
        %4634 = vst [vmem:[%s201 + $0xe50] sm:$0xff] %v2586
        %4635 = vst [vmem:[%s201 + $0xe68] sm:$0xff] %v2587
        %4636 = vst [vmem:[%s201 + $0xe80] sm:$0xff] %v2588
        %4637 = vst [vmem:[%s201 + $0xe98] sm:$0xff] %v2589
        %4638 = vst [vmem:[%s201 + $0xeb0] sm:$0xff] %v2590
        %4639 = vst [vmem:[%s201 + $0xec8] sm:$0xff] %v2591
        %4640 = vst [vmem:[%s201 + $0xee0] sm:$0xff] %v2592
        %4641 = vst [vmem:[%s201 + $0xef8] sm:$0xff] %v2593
        %4642 = vst [vmem:[%s201 + $0xf10] sm:$0xff] %v2594
        %4643 = vst [vmem:[%s201 + $0xf28] sm:$0xff] %v2595
        %4644 = vst [vmem:[%s201 + $0xf40] sm:$0xff] %v2596
        %4645 = vst [vmem:[%s201 + $0xf58] sm:$0xff] %v2597
        %4646 = vst [vmem:[%s201 + $0xf70] sm:$0xff] %v2598
        %4647 = vst [vmem:[%s201 + $0xf88] sm:$0xff] %v2599
        %4648 = vst [vmem:[%s201 + $0xfa0] sm:$0xff] %v2600
        %4649 = vst [vmem:[%s201 + $0xfb8] sm:$0xff] %v2601
        %4650 = vst [vmem:[%s201 + $0xfd0] sm:$0xff] %v2602
        %4651 = vst [vmem:[%s201 + $0xfe8] sm:$0xff] %v2603
        %4652 = vst [vmem:[%s201 + $0x1000] sm:$0xff] %v2604
        %4653 = vst [vmem:[%s201 + $0x1018] sm:$0xff] %v2605
        %4654 = vst [vmem:[%s201 + $0x1030] sm:$0xff] %v2606
        %4655 = vst [vmem:[%s201 + $0x1048] sm:$0xff] %v2607
        %4656 = vst [vmem:[%s201 + $0x1060] sm:$0xff] %v2608
        %4657 = vst [vmem:[%s201 + $0x1078] sm:$0xff] %v2609
        %4658 = vst [vmem:[%s201 + $0x1090] sm:$0xff] %v2610
        %4659 = vst [vmem:[%s201 + $0x10a8] sm:$0xff] %v2611
        %4660 = vst [vmem:[%s201 + $0x10c0] sm:$0xff] %v2612
        %4661 = vst [vmem:[%s201 + $0x10d8] sm:$0xff] %v2613
        %4662 = vst [vmem:[%s201 + $0x10f0] sm:$0xff] %v2614
        %4663 = vst [vmem:[%s201 + $0x1108] sm:$0xff] %v2615
        %4664 = vst [vmem:[%s201 + $0x1120] sm:$0xff] %v2616
        %4665 = vst [vmem:[%s201 + $0x1138] sm:$0xff] %v2617
        %4666 = vst [vmem:[%s201 + $0x1150] sm:$0xff] %v2618
        %4667 = vst [vmem:[%s201 + $0x1168] sm:$0xff] %v2619
        %4668 = vst [vmem:[%s201 + $0x1180] sm:$0xff] %v2620
        %4669 = vst [vmem:[%s201 + $0x1198] sm:$0xff] %v2621
        %4670 = vst [vmem:[%s201 + $0x11b0] sm:$0xff] %v2622
        %4671 = vst [vmem:[%s201 + $0x11c8] sm:$0xff] %v2623
        %4672 = vst [vmem:[%s201 + $0x11e0] sm:$0xff] %v2624
        %4673 = vst [vmem:[%s201 + $0x11f8] sm:$0xff] %v2625
        %4674 = vst [vmem:[%s201 + $0x1210] sm:$0xff] %v2626
        %4675 = vst [vmem:[%s201 + $0x1228] sm:$0xff] %v2627
        %4676 = vst [vmem:[%s201 + $0x1240] sm:$0xff] %v2628
        %4677 = vst [vmem:[%s201 + $0x1258] sm:$0xff] %v2629
        %4678 = vst [vmem:[%s201 + $0x1270] sm:$0xff] %v2630
        %4679 = vst [vmem:[%s201 + $0x1288] sm:$0xff] %v2631
        %4680 = vst [vmem:[%s201 + $0x12a0] sm:$0xff] %v2632
        %4681 = vst [vmem:[%s201 + $0x12b8] sm:$0xff] %v2633
        %4682 = vst [vmem:[%s201 + $0x12d0] sm:$0xff] %v2634
        %4683 = vst [vmem:[%s201 + $0x12e8] sm:$0xff] %v2635
        %4684 = vst [vmem:[%s201 + $0x1300] sm:$0xff] %v2636
        %4685 = vst [vmem:[%s201 + $0x1318] sm:$0xff] %v2637
        %4686 = vst [vmem:[%s201 + $0x1330] sm:$0xff] %v2638
        %4687 = vst [vmem:[%s201 + $0x1348] sm:$0xff] %v2639
        %4688 = vst [vmem:[%s201 + $0x1360] sm:$0xff] %v2640
        %4689 = vst [vmem:[%s201 + $0x1378] sm:$0xff] %v2641
        %4690 = vst [vmem:[%s201 + $0x1390] sm:$0xff] %v2642
        %4691 = vst [vmem:[%s201 + $0x13a8] sm:$0xff] %v2643
        %4692 = vst [vmem:[%s201 + $0x13c0] sm:$0xff] %v2644
        %4693 = vst [vmem:[%s201 + $0x13d8] sm:$0xff] %v2645
        %4694 = vst [vmem:[%s201 + $0x13f0] sm:$0xff] %v2646
        %4695 = vst [vmem:[%s201 + $0x1408] sm:$0xff] %v2647
        %4696 = vst [vmem:[%s201 + $0x1420] sm:$0xff] %v2648
        %4697 = vst [vmem:[%s201 + $0x1438] sm:$0xff] %v2649
        %4698 = vst [vmem:[%s201 + $0x1450] sm:$0xff] %v2650
        %4699 = vst [vmem:[%s201 + $0x1468] sm:$0xff] %v2651
        %4700 = vst [vmem:[%s201 + $0x1480] sm:$0xff] %v2652
        %4701 = vst [vmem:[%s201 + $0x1498] sm:$0xff] %v2653
        %4702 = vst [vmem:[%s201 + $0x14b0] sm:$0xff] %v2654
        %4703 = vst [vmem:[%s201 + $0x14c8] sm:$0xff] %v2655
        %4704 = vst [vmem:[%s201 + $0x14e0] sm:$0xff] %v2656
        %4705 = vst [vmem:[%s201 + $0x14f8] sm:$0xff] %v2657
        %4706 = vst [vmem:[%s201 + $0x1510] sm:$0xff] %v2658
        %4707 = vst [vmem:[%s201 + $0x1528] sm:$0xff] %v2659
        %4708 = vst [vmem:[%s201 + $0x1540] sm:$0xff] %v2660
        %4709 = vst [vmem:[%s201 + $0x1558] sm:$0xff] %v2661
        %4710 = vst [vmem:[%s201 + $0x1570] sm:$0xff] %v2662
        %4711 = vst [vmem:[%s201 + $0x1588] sm:$0xff] %v2663
        %4712 = vst [vmem:[%s201 + $0x15a0] sm:$0xff] %v2664
        %4713 = vst [vmem:[%s201 + $0x15b8] sm:$0xff] %v2665
        %4714 = vst [vmem:[%s201 + $0x15d0] sm:$0xff] %v2666
        %4715 = vst [vmem:[%s201 + $0x15e8] sm:$0xff] %v2667
        %4716 = vst [vmem:[%s201 + $0x1600] sm:$0xff] %v2668
        %4717 = vst [vmem:[%s201 + $0x1618] sm:$0xff] %v2669
        %4718 = vst [vmem:[%s201 + $0x1630] sm:$0xff] %v2670
        %4719 = vst [vmem:[%s201 + $0x1648] sm:$0xff] %v2671
        %4720 = vst [vmem:[%s201 + $0x1660] sm:$0xff] %v2672
        %4721 = vst [vmem:[%s201 + $0x1678] sm:$0xff] %v2673
        %4722 = vst [vmem:[%s201 + $0x1690] sm:$0xff] %v2674
        %4723 = vst [vmem:[%s201 + $0x16a8] sm:$0xff] %v2675
        %4724 = vst [vmem:[%s201 + $0x16c0] sm:$0xff] %v2676
        %4725 = vst [vmem:[%s201 + $0x16d8] sm:$0xff] %v2677
        %4726 = vst [vmem:[%s201 + $0x16f0] sm:$0xff] %v2678
        %4727 = vst [vmem:[%s201 + $0x1708] sm:$0xff] %v2679
        %4728 = vst [vmem:[%s201 + $0x1720] sm:$0xff] %v2680
        %4729 = vst [vmem:[%s201 + $0x1738] sm:$0xff] %v2681
        %4730 = vst [vmem:[%s201 + $0x1750] sm:$0xff] %v2682
        %4731 = vst [vmem:[%s201 + $0x1768] sm:$0xff] %v2683
        %4732 = vst [vmem:[%s201 + $0x1780] sm:$0xff] %v2684
        %4733 = vst [vmem:[%s201 + $0x1798] sm:$0xff] %v2685
        %4734 = vst [vmem:[%s201 + $0x17b0] sm:$0xff] %v2686
        %4735 = vst [vmem:[%s201 + $0x17c8] sm:$0xff] %v2687
        %4736 = vst [vmem:[%s201 + $0x17e0] sm:$0xff] %v2688
        %4737 = vst [vmem:[%s201 + $0x17f8] sm:$0xff] %v2689
        %4738 = vst [vmem:[%s201 + $0x1810] sm:$0xff] %v2690
        %4739 = vst [vmem:[%s201 + $0x1828] sm:$0xff] %v2691
        %4740 = vst [vmem:[%s201 + $0x1840] sm:$0xff] %v2692
        %4741 = vst [vmem:[%s201 + $0x1858] sm:$0xff] %v2693
        %4742 = vst [vmem:[%s201 + $0x1870] sm:$0xff] %v2694
        %4743 = vst [vmem:[%s201 + $0x1888] sm:$0xff] %v2695
        %4744 = vst [vmem:[%s201 + $0x18a0] sm:$0xff] %v2696
        %4745 = vst [vmem:[%s201 + $0x18b8] sm:$0xff] %v2697
        %4746 = vst [vmem:[%s201 + $0x18d0] sm:$0xff] %v2698
        %4747 = vst [vmem:[%s201 + $0x18e8] sm:$0xff] %v2699
        %4748 = vst [vmem:[%s201 + $0x1900] sm:$0xff] %v2700
        %4749 = vst [vmem:[%s201 + $0x1918] sm:$0xff] %v2701
        %4750 = vst [vmem:[%s201 + $0x1930] sm:$0xff] %v2702
        %4751 = vst [vmem:[%s201 + $0x1948] sm:$0xff] %v2703
        %4752 = vst [vmem:[%s201 + $0x1960] sm:$0xff] %v2704
        %4753 = vst [vmem:[%s201 + $0x1978] sm:$0xff] %v2705
        %4754 = vst [vmem:[%s201 + $0x1990] sm:$0xff] %v2706
        %4755 = vst [vmem:[%s201 + $0x19a8] sm:$0xff] %v2707
        %4756 = vst [vmem:[%s201 + $0x19c0] sm:$0xff] %v2708
        %4757 = vst [vmem:[%s201 + $0x19d8] sm:$0xff] %v2709
        %4758 = vst [vmem:[%s201 + $0x19f0] sm:$0xff] %v2710
        %4759 = vst [vmem:[%s201 + $0x1a08] sm:$0xff] %v2711
        %4760 = vst [vmem:[%s201 + $0x1a20] sm:$0xff] %v2712
        %4761 = vst [vmem:[%s201 + $0x1a38] sm:$0xff] %v2713
        %4762 = vst [vmem:[%s201 + $0x1a50] sm:$0xff] %v2714
        %4763 = vst [vmem:[%s201 + $0x1a68] sm:$0xff] %v2715
        %4764 = vst [vmem:[%s201 + $0x1a80] sm:$0xff] %v2716
        %4765 = vst [vmem:[%s201 + $0x1a98] sm:$0xff] %v2717
        %4766 = vst [vmem:[%s201 + $0x1ab0] sm:$0xff] %v2718
        %4767 = vst [vmem:[%s201 + $0x1ac8] sm:$0xff] %v2719
        %4768 = vst [vmem:[%s201 + $0x1ae0] sm:$0xff] %v2720
        %4769 = vst [vmem:[%s201 + $0x1af8] sm:$0xff] %v2721
        %4770 = vst [vmem:[%s201 + $0x1b10] sm:$0xff] %v2722
        %4771 = vst [vmem:[%s201 + $0x1b28] sm:$0xff] %v2723
        %4772 = vst [vmem:[%s201 + $0x1b40] sm:$0xff] %v2724
        %4773 = vst [vmem:[%s201 + $0x1b58] sm:$0xff] %v2725
        %4774 = vst [vmem:[%s201 + $0x1b70] sm:$0xff] %v2726
        %4775 = vst [vmem:[%s201 + $0x1b88] sm:$0xff] %v2727
        %4776 = vst [vmem:[%s201 + $0x1ba0] sm:$0xff] %v2728
        %4777 = vst [vmem:[%s201 + $0x1bb8] sm:$0xff] %v2729
        %4778 = vst [vmem:[%s201 + $0x1bd0] sm:$0xff] %v2730
        %4779 = vst [vmem:[%s201 + $0x1be8] sm:$0xff] %v2731
        %4780 = vst [vmem:[%s201 + $0x1c00] sm:$0xff] %v2732
        %4781 = vst [vmem:[%s201 + $0x1c18] sm:$0xff] %v2733
        %4782 = vst [vmem:[%s201 + $0x1c30] sm:$0xff] %v2734
        %4783 = vst [vmem:[%s201 + $0x1c48] sm:$0xff] %v2735
        %4784 = vst [vmem:[%s201 + $0x1c60] sm:$0xff] %v2736
        %4785 = vst [vmem:[%s201 + $0x1c78] sm:$0xff] %v2737
        %4786 = vst [vmem:[%s201 + $0x1c90] sm:$0xff] %v2738
        %4787 = vst [vmem:[%s201 + $0x1ca8] sm:$0xff] %v2739
        %4788 = vst [vmem:[%s201 + $0x1cc0] sm:$0xff] %v2740
        %4789 = vst [vmem:[%s201 + $0x1cd8] sm:$0xff] %v2741
        %4790 = vst [vmem:[%s201 + $0x1cf0] sm:$0xff] %v2742
        %4791 = vst [vmem:[%s201 + $0x1d08] sm:$0xff] %v2743
        %4792 = vst [vmem:[%s201 + $0x1d20] sm:$0xff] %v2744
        %4793 = vst [vmem:[%s201 + $0x1d38] sm:$0xff] %v2745
        %4794 = vst [vmem:[%s201 + $0x1d50] sm:$0xff] %v2746
        %4795 = vst [vmem:[%s201 + $0x1d68] sm:$0xff] %v2747
        %4796 = vst [vmem:[%s201 + $0x1d80] sm:$0xff] %v2748
        %4797 = vst [vmem:[%s201 + $0x1d98] sm:$0xff] %v2749
        %4798 = vst [vmem:[%s201 + $0x1db0] sm:$0xff] %v2750
        %4799 = vst [vmem:[%s201 + $0x1dc8] sm:$0xff] %v2751
        %4800 = vst [vmem:[%s201 + $0x1de0] sm:$0xff] %v2752
        %4801 = vst [vmem:[%s201 + $0x1df8] sm:$0xff] %v2753
        %4802 = vst [vmem:[%s201 + $0x1e10] sm:$0xff] %v2754
        %4803 = vst [vmem:[%s201 + $0x1e28] sm:$0xff] %v2755
        %4804 = vst [vmem:[%s201 + $0x1e40] sm:$0xff] %v2756
        %4805 = vst [vmem:[%s201 + $0x1e58] sm:$0xff] %v2757
        %4806 = vst [vmem:[%s201 + $0x1e70] sm:$0xff] %v2758
        %4807 = vst [vmem:[%s201 + $0x1e88] sm:$0xff] %v2759
        %4808 = vst [vmem:[%s201 + $0x1ea0] sm:$0xff] %v2760
        %4809 = vst [vmem:[%s201 + $0x1eb8] sm:$0xff] %v2761
        %4810 = vst [vmem:[%s201 + $0x1ed0] sm:$0xff] %v2762
        %4811 = vst [vmem:[%s201 + $0x1ee8] sm:$0xff] %v2763
        %4812 = vst [vmem:[%s201 + $0x1f00] sm:$0xff] %v2764
        %4813 = vst [vmem:[%s201 + $0x1f18] sm:$0xff] %v2765
        %4814 = vst [vmem:[%s201 + $0x1f30] sm:$0xff] %v2766
        %4815 = vst [vmem:[%s201 + $0x1f48] sm:$0xff] %v2767
        %4816 = vst [vmem:[%s201 + $0x1f60] sm:$0xff] %v2768
        %4817 = vst [vmem:[%s201 + $0x1f78] sm:$0xff] %v2769
        %4818 = vst [vmem:[%s201 + $0x1f90] sm:$0xff] %v2770
        %4819 = vst [vmem:[%s201 + $0x1fa8] sm:$0xff] %v2771
        %4820 = vst [vmem:[%s201 + $0x1fc0] sm:$0xff] %v2772
        %4821 = vst [vmem:[%s201 + $0x1fd8] sm:$0xff] %v2773
        %4822 = vst [vmem:[%s201 + $0x1ff0] sm:$0xff] %v2774
        %4823 = vst [vmem:[%s201 + $0x2008] sm:$0xff] %v2775
        %4824 = vst [vmem:[%s201 + $0x2020] sm:$0xff] %v2776
        %4825 = vst [vmem:[%s201 + $0x2038] sm:$0xff] %v2777
        %4826 = vst [vmem:[%s201 + $0x2050] sm:$0xff] %v2778
        %4827 = vst [vmem:[%s201 + $0x2068] sm:$0xff] %v2779
        %4828 = vst [vmem:[%s201 + $0x2080] sm:$0xff] %v2780
        %4829 = vst [vmem:[%s201 + $0x2098] sm:$0xff] %v2781
        %4830 = vst [vmem:[%s201 + $0x20b0] sm:$0xff] %v2782
        %4831 = vst [vmem:[%s201 + $0x20c8] sm:$0xff] %v2783
        %4832 = vst [vmem:[%s201 + $0x20e0] sm:$0xff] %v2784
        %4833 = vst [vmem:[%s201 + $0x20f8] sm:$0xff] %v2785
        %4834 = vst [vmem:[%s201 + $0x2110] sm:$0xff] %v2786
        %4835 = vst [vmem:[%s201 + $0x2128] sm:$0xff] %v2787
        %4836 = vst [vmem:[%s201 + $0x2140] sm:$0xff] %v2788
        %4837 = vst [vmem:[%s201 + $0x2158] sm:$0xff] %v2789
        %4838 = vst [vmem:[%s201 + $0x2170] sm:$0xff] %v2790
        %4839 = vst [vmem:[%s201 + $0x2188] sm:$0xff] %v2791
        %4840 = vst [vmem:[%s201 + $0x21a0] sm:$0xff] %v2792
        %4841 = vst [vmem:[%s201 + $0x21b8] sm:$0xff] %v2793
        %4842 = vst [vmem:[%s201 + $0x21d0] sm:$0xff] %v2794
        %4843 = vst [vmem:[%s201 + $0x21e8] sm:$0xff] %v2795
        %4844 = vst [vmem:[%s201 + $0x2200] sm:$0xff] %v2796
        %4845 = vst [vmem:[%s201 + $0x2218] sm:$0xff] %v2797
        %4846 = vst [vmem:[%s201 + $0x2230] sm:$0xff] %v2798
        %4847 = vst [vmem:[%s201 + $0x2248] sm:$0xff] %v2799
        %4848 = vst [vmem:[%s201 + $0x2260] sm:$0xff] %v2800
        %4849 = vst [vmem:[%s201 + $0x2278] sm:$0xff] %v2801
        %4850 = vst [vmem:[%s201 + $0x2290] sm:$0xff] %v2802
        %4851 = vst [vmem:[%s201 + $0x22a8] sm:$0xff] %v2803
        %4852 = vst [vmem:[%s201 + $0x22c0] sm:$0xff] %v2804
        %4853 = vst [vmem:[%s201 + $0x22d8] sm:$0xff] %v2805
        %4854 = vst [vmem:[%s201 + $0x22f0] sm:$0xff] %v2806
        %4855 = vst [vmem:[%s201 + $0x2308] sm:$0xff] %v2807
        %4856 = vst [vmem:[%s201 + $0x2320] sm:$0xff] %v2808
        %4857 = vst [vmem:[%s201 + $0x2338] sm:$0xff] %v2809
        %4858 = vst [vmem:[%s201 + $0x2350] sm:$0xff] %v2810
        %4859 = vst [vmem:[%s201 + $0x2368] sm:$0xff] %v2811
        %4860 = vst [vmem:[%s201 + $0x2380] sm:$0xff] %v2812
        %4861 = vst [vmem:[%s201 + $0x2398] sm:$0xff] %v2813
        %4862 = vst [vmem:[%s201 + $0x23b0] sm:$0xff] %v2814
        %4863 = vst [vmem:[%s201 + $0x23c8] sm:$0xff] %v2815
        %4864 = vst [vmem:[%s201 + $0x23e0] sm:$0xff] %v2816
        %4865 = vst [vmem:[%s201 + $0x23f8] sm:$0xff] %v2817
        %4866 = vst [vmem:[%s201 + $0x2410] sm:$0xff] %v2818
        %4867 = vst [vmem:[%s201 + $0x2428] sm:$0xff] %v2819
        %4868 = vst [vmem:[%s201 + $0x2440] sm:$0xff] %v2820
        %4869 = vst [vmem:[%s201 + $0x2458] sm:$0xff] %v2821
        %4870 = vst [vmem:[%s201 + $0x2470] sm:$0xff] %v2822
        %4871 = vst [vmem:[%s201 + $0x2488] sm:$0xff] %v2823
        %4872 = vst [vmem:[%s201 + $0x24a0] sm:$0xff] %v2824
        %4873 = vst [vmem:[%s201 + $0x24b8] sm:$0xff] %v2825
        %4874 = vst [vmem:[%s201 + $0x24d0] sm:$0xff] %v2826
        %4875 = vst [vmem:[%s201 + $0x24e8] sm:$0xff] %v2827
        %4876 = vst [vmem:[%s201 + $0x2500] sm:$0xff] %v2828
        %4877 = vst [vmem:[%s201 + $0x2518] sm:$0xff] %v2829
        %4878 = vst [vmem:[%s201 + $0x2530] sm:$0xff] %v2830
        %4879 = vst [vmem:[%s201 + $0x2548] sm:$0xff] %v2831
        %4880 = vst [vmem:[%s201 + $0x2560] sm:$0xff] %v2832
        %4881 = vst [vmem:[%s201 + $0x2578] sm:$0xff] %v2833
        %4882 = vst [vmem:[%s201 + $0x2590] sm:$0xff] %v2834
        %4883 = vst [vmem:[%s201 + $0x25a8] sm:$0xff] %v2835
        %4884 = vst [vmem:[%s201 + $0x25c0] sm:$0xff] %v2836
        %4885 = vst [vmem:[%s201 + $0x25d8] sm:$0xff] %v2837
        %4886 = vst [vmem:[%s201 + $0x25f0] sm:$0xff] %v2838
        %4887 = vst [vmem:[%s201 + $0x2608] sm:$0xff] %v2839
        %4888 = vst [vmem:[%s201 + $0x2620] sm:$0xff] %v2840
        %4889 = vst [vmem:[%s201 + $0x2638] sm:$0xff] %v2841
        %4890 = vst [vmem:[%s201 + $0x2650] sm:$0xff] %v2842
        %4891 = vst [vmem:[%s201 + $0x2668] sm:$0xff] %v2843
        %4892 = vst [vmem:[%s201 + $0x2680] sm:$0xff] %v2844
        %4893 = vst [vmem:[%s201 + $0x2698] sm:$0xff] %v2845
        %4894 = vst [vmem:[%s201 + $0x26b0] sm:$0xff] %v2846
        %4895 = vst [vmem:[%s201 + $0x26c8] sm:$0xff] %v2847
        %4896 = vst [vmem:[%s201 + $0x26e0] sm:$0xff] %v2848
        %4897 = vst [vmem:[%s201 + $0x26f8] sm:$0xff] %v2849
        %4898 = vst [vmem:[%s201 + $0x2710] sm:$0xff] %v2850
        %4899 = vst [vmem:[%s201 + $0x2728] sm:$0xff] %v2851
        %4900 = vst [vmem:[%s201 + $0x2740] sm:$0xff] %v2852
        %4901 = vst [vmem:[%s201 + $0x2758] sm:$0xff] %v2853
        %4902 = vst [vmem:[%s201 + $0x2770] sm:$0xff] %v2854
        %4903 = vst [vmem:[%s201 + $0x2788] sm:$0xff] %v2855
        %4904 = vst [vmem:[%s201 + $0x27a0] sm:$0xff] %v2856
        %4905 = vst [vmem:[%s201 + $0x27b8] sm:$0xff] %v2857
        %4906 = vst [vmem:[%s201 + $0x27d0] sm:$0xff] %v2858
        %4907 = vst [vmem:[%s201 + $0x27e8] sm:$0xff] %v2859
        %4908 = vst [vmem:[%s201 + $0x2800] sm:$0xff] %v2860
        %4909 = vst [vmem:[%s201 + $0x2818] sm:$0xff] %v2861
        %4910 = vst [vmem:[%s201 + $0x2830] sm:$0xff] %v2862
        %4911 = vst [vmem:[%s201 + $0x2848] sm:$0xff] %v2863
        %4912 = vst [vmem:[%s201 + $0x2860] sm:$0xff] %v2864
        %4913 = vst [vmem:[%s201 + $0x2878] sm:$0xff] %v2865
        %4914 = vst [vmem:[%s201 + $0x2890] sm:$0xff] %v2866
        %4915 = vst [vmem:[%s201 + $0x28a8] sm:$0xff] %v2867
        %4916 = vst [vmem:[%s201 + $0x28c0] sm:$0xff] %v2868
        %4917 = vst [vmem:[%s201 + $0x28d8] sm:$0xff] %v2869
        %4918 = vst [vmem:[%s201 + $0x28f0] sm:$0xff] %v2870
        %4919 = vst [vmem:[%s201 + $0x2908] sm:$0xff] %v2871
        %4920 = vst [vmem:[%s201 + $0x2920] sm:$0xff] %v2872
        %4921 = vst [vmem:[%s201 + $0x2938] sm:$0xff] %v2873
        %4922 = vst [vmem:[%s201 + $0x2950] sm:$0xff] %v2874
        %4923 = vst [vmem:[%s201 + $0x2968] sm:$0xff] %v2875
        %4924 = vst [vmem:[%s201 + $0x2980] sm:$0xff] %v2876
        %4925 = vst [vmem:[%s201 + $0x2998] sm:$0xff] %v2877
        %4926 = vst [vmem:[%s201 + $0x29b0] sm:$0xff] %v2878
        %4927 = vst [vmem:[%s201 + $0x29c8] sm:$0xff] %v2879
        %4928 = vst [vmem:[%s201 + $0x29e0] sm:$0xff] %v2880
        %4929 = vst [vmem:[%s201 + $0x29f8] sm:$0xff] %v2881
        %4930 = vst [vmem:[%s201 + $0x2a10] sm:$0xff] %v2882
        %4931 = vst [vmem:[%s201 + $0x2a28] sm:$0xff] %v2883
        %4932 = vst [vmem:[%s201 + $0x2a40] sm:$0xff] %v2884
        %4933 = vst [vmem:[%s201 + $0x2a58] sm:$0xff] %v2885
        %4934 = vst [vmem:[%s201 + $0x2a70] sm:$0xff] %v2886
        %4935 = vst [vmem:[%s201 + $0x2a88] sm:$0xff] %v2887
        %4936 = vst [vmem:[%s201 + $0x2aa0] sm:$0xff] %v2888
        %4937 = vst [vmem:[%s201 + $0x2ab8] sm:$0xff] %v2889
        %4938 = vst [vmem:[%s201 + $0x2ad0] sm:$0xff] %v2890
        %4939 = vst [vmem:[%s201 + $0x2ae8] sm:$0xff] %v2891
        %4940 = vst [vmem:[%s201 + $0x2b00] sm:$0xff] %v2892
        %4941 = vst [vmem:[%s201 + $0x2b18] sm:$0xff] %v2893
        %4942 = vst [vmem:[%s201 + $0x2b30] sm:$0xff] %v2894
        %4943 = vst [vmem:[%s201 + $0x2b48] sm:$0xff] %v2895
        %4944 = vst [vmem:[%s201 + $0x2b60] sm:$0xff] %v2896
        %4945 = vst [vmem:[%s201 + $0x2b78] sm:$0xff] %v2897
        %4946 = vst [vmem:[%s201 + $0x2b90] sm:$0xff] %v2898
        %4947 = vst [vmem:[%s201 + $0x2ba8] sm:$0xff] %v2899
        %4948 = vst [vmem:[%s201 + $0x2bc0] sm:$0xff] %v2900
        %4949 = vst [vmem:[%s201 + $0x2bd8] sm:$0xff] %v2901
        %4950 = vst [vmem:[%s201 + $0x2bf0] sm:$0xff] %v2902
        %4951 = vst [vmem:[%s201 + $0x2c08] sm:$0xff] %v2903
        %4952 = vst [vmem:[%s201 + $0x2c20] sm:$0xff] %v2904
        %4953 = vst [vmem:[%s201 + $0x2c38] sm:$0xff] %v2905
        %4954 = vst [vmem:[%s201 + $0x2c50] sm:$0xff] %v2906
        %4955 = vst [vmem:[%s201 + $0x2c68] sm:$0xff] %v2907
        %4956 = vst [vmem:[%s201 + $0x2c80] sm:$0xff] %v2908
        %4957 = vst [vmem:[%s201 + $0x2c98] sm:$0xff] %v2909
        %4958 = vst [vmem:[%s201 + $0x2cb0] sm:$0xff] %v2910
        %4959 = vst [vmem:[%s201 + $0x2cc8] sm:$0xff] %v2911
        %4960 = vst [vmem:[%s201 + $0x2ce0] sm:$0xff] %v2912
        %4961 = vst [vmem:[%s201 + $0x2cf8] sm:$0xff] %v2913
        %4962 = vst [vmem:[%s201 + $0x2d10] sm:$0xff] %v2914
        %4963 = vst [vmem:[%s201 + $0x2d28] sm:$0xff] %v2915
        %4964 = vst [vmem:[%s201 + $0x2d40] sm:$0xff] %v2916
        %4965 = vst [vmem:[%s201 + $0x2d58] sm:$0xff] %v2917
        %4966 = vst [vmem:[%s201 + $0x2d70] sm:$0xff] %v2918
        %4967 = vst [vmem:[%s201 + $0x2d88] sm:$0xff] %v2919
        %4968 = vst [vmem:[%s201 + $0x2da0] sm:$0xff] %v2920
        %4969 = vst [vmem:[%s201 + $0x2db8] sm:$0xff] %v2921
        %4970 = vst [vmem:[%s201 + $0x2dd0] sm:$0xff] %v2922
        %4971 = vst [vmem:[%s201 + $0x2de8] sm:$0xff] %v2923
        %4972 = vst [vmem:[%s201 + $0x2e00] sm:$0xff] %v2924
        %4973 = vst [vmem:[%s201 + $0x2e18] sm:$0xff] %v2925
        %4974 = vst [vmem:[%s201 + $0x2e30] sm:$0xff] %v2926
        %4975 = vst [vmem:[%s201 + $0x2e48] sm:$0xff] %v2927
        %4976 = vst [vmem:[%s201 + $0x2e60] sm:$0xff] %v2928
        %4977 = vst [vmem:[%s201 + $0x2e78] sm:$0xff] %v2929
        %4978 = vst [vmem:[%s201 + $0x2e90] sm:$0xff] %v2930
        %4979 = vst [vmem:[%s201 + $0x2ea8] sm:$0xff] %v2931
        %4980 = vst [vmem:[%s201 + $0x2ec0] sm:$0xff] %v2932
        %4981 = vst [vmem:[%s201 + $0x2ed8] sm:$0xff] %v2933
        %4982 = vst [vmem:[%s201 + $0x2ef0] sm:$0xff] %v2934
        %4983 = vst [vmem:[%s201 + $0x2f08] sm:$0xff] %v2935
        %4984 = vst [vmem:[%s201 + $0x2f20] sm:$0xff] %v2936
        %4985 = vst [vmem:[%s201 + $0x2f38] sm:$0xff] %v2937
        %4986 = vst [vmem:[%s201 + $0x2f50] sm:$0xff] %v2938
        %4987 = vst [vmem:[%s201 + $0x2f68] sm:$0xff] %v2939
        %4988 = vst [vmem:[%s201 + $0x2f80] sm:$0xff] %v2940
        %4989 = vst [vmem:[%s201 + $0x2f98] sm:$0xff] %v2941
        %4990 = vst [vmem:[%s201 + $0x2fb0] sm:$0xff] %v2942
        %4991 = vst [vmem:[%s201 + $0x2fc8] sm:$0xff] %v2943
        %4992 = vst [vmem:[%s201 + $0x2fe0] sm:$0xff] %v2944
        %4993 = vst [vmem:[%s201 + $0x2ff8] sm:$0xff] %v2945
        %s4994 = sand.u32 %s96, 1
        %s4995 = scalar_lea.sflag [#allocation4], %s4994
        %s4996 = sand.u32 %s96, 1
        %s4997 = smul.addr %s4996, 12288
        %s4998 = scalar_lea.vmem [#allocation7], %s4997
        // Predicated region
        $region37: #{tpu_custom_call.1} parent=27 // pred_check
          %p4999 = pneg %p106
        $region38: #{tpu_custom_call.1} parent=27 // pred_check_branch
          %5001 = sbr.rel (%p4999) target = $region40
        $region39: #{tpu_custom_call.1} parent=27 // pred_region
          %s5002 = smul.u32 32, %s24
          %s5003 = smul.u32 16, %s25
          %s5005 = ssub.s32 196608, 196608
          %5006 = vsyncadd %s4995, %s5005
          %s5007 = smul.addr %s5003, 3
          %s5008 = smul.addr %s5002, 48
          %s5009 = sadd.s32 %s5007, %s5008
          %s5010 = smul.addr %s5009, 128
          %s5011 = scalar_lea.hbm %s2, %s5010
          %s5012 = sshll.u32 %s4998, 4
          %s5013 = int_to_ptr.vmem [resolvable:$true] %s5012
          %5018 = dma.vmem_to_hbm [thread:$0]  %s5013, 196608, %s5011, %s4995, 384, 384, 24
        $region40: #{tpu_custom_call.1} parent=27 // pred_fallthru
          _
      $region28: #{tpu_custom_call.1} parent=5 // pred_fallthru
        _
      %p5019 = scmp.le.s32.totalorder 2, %s15
      // Predicated region
      $region41: #{tpu_custom_call.1} parent=5 // pred_check
        %p5020 = pneg %p5019
      $region42: #{tpu_custom_call.1} parent=5 // pred_check_branch
        %5022 = sbr.rel (%p5020) target = $region44
      $region43: #{tpu_custom_call.1} parent=5 // pred_region
        %s5023 = ssub.s32 %s15, 2
        // Predicated region
        $region45: #{tpu_custom_call.1} parent=43 // pred_check
          %p5024 = pneg %p112
        $region46: #{tpu_custom_call.1} parent=43 // pred_check_branch
          %5026 = sbr.rel (%p5024) target = $region48
        $region47: #{tpu_custom_call.1} parent=43 // pred_region
          %s5027 = sand.u32 %s97, 1
          %s5028 = scalar_lea.sflag [#allocation4], %s5027
          %s5029 = sand.u32 %s97, 1
          %s5030 = smul.addr %s5029, 12288
          %s5031 = scalar_lea.vmem [#allocation7], %s5030
          %5032 = dma.done %s5028, 196608
        $region48: #{tpu_custom_call.1} parent=43 // pred_fallthru
          _
      $region44: #{tpu_custom_call.1} parent=5 // pred_fallthru
        _
    $region6: #{tpu_custom_call.1} parent=1 // loop_footer
      %s19 = sadd.s32 1, %s15
    $region7: #{tpu_custom_call.1} parent=1 // loop_footer_branch
      %14 = sbr.rel target = $region3
    $region8: #{tpu_custom_call.1} parent=1 // loop_exit
      _
    %5033 = vsyncpa [#allocation3], 1
    %s5034 = scalar_lea.sflag [#allocation3], 1
    %5035 = vsyncpa %s5034, 1
    %5036 = vsyncpa [#allocation6], 1
    %5037 = vsyncpa [#allocation4], 1
    %s5038 = scalar_lea.sflag [#allocation4], 1
    %5039 = vsyncpa %s5038, 1

</llo_original>
